<compile_context>
chip_gen: v7x
topology: tpu7x:2x2x1
jax: 0.10.0
libtpu: 0.0.40
codegen_flags: <defaults>
</compile_context>

<pallas_src>
import functools
import math

import jax
import jax.numpy as jnp
from jax.experimental import pallas as pl
from jax.experimental.pallas import tpu as pltpu


# ---------------------------------------------------------------------------
# Fused RND kernel: one grid step == one branch (0 = target, 1 = predictor).
# ---------------------------------------------------------------------------
def rnd_kernel(state_ref, action_ref, wqkv_ref, bqkv_ref, wo_ref, bo_ref,
               gamma_ref, beta_ref, w_state_ref, w_act_ref, b_out_ref,
               out_ref, *, n_heads):
    B, S, D = state_ref.shape
    dk = D // n_heads
    inv_sqrt_dk = 1.0 / math.sqrt(dk)

    # (B, S, D) -> (B*S, D); merging leading dims is layout-preserving.
    x2 = state_ref[...].reshape(B * S, D)

    # Fused QKV projection: one lane-dense matmul instead of 3 narrow ones.
    qkv = jnp.dot(x2, wqkv_ref[0],
                  preferred_element_type=jnp.float32) + bqkv_ref[0]   # (B*S, 3D)

    # Stack (batch, head) pairs along a leading axis -> (B*H, S, dk), then do
    # a single batched contraction for scores and context.
    def gather_heads(off):
        return jnp.stack(
            [qkv[b * S:(b + 1) * S, off + h * dk: off + (h + 1) * dk]
             for b in range(B) for h in range(n_heads)], axis=0)

    q = gather_heads(0)
    k = gather_heads(D)
    v = gather_heads(2 * D)

    s = jnp.einsum('nqd,nkd->nqk', q, k,
                   preferred_element_type=jnp.float32) * inv_sqrt_dk  # (B*H,S,S)
    s = s - jnp.max(s, axis=-1, keepdims=True)
    e = jnp.exp(s)
    denom = jnp.sum(e, axis=-1, keepdims=True)
    probs = e * pl.reciprocal(denom, approx=True)
    ctx = jnp.einsum('nqk,nkd->nqd', probs, v,
                     preferred_element_type=jnp.float32)              # (B*H,S,dk)

    # Reassemble (B*S, D): heads back along lanes, batches along sublanes.
    ctx2 = jnp.concatenate(
        [jnp.concatenate([ctx[b * n_heads + h] for h in range(n_heads)],
                         axis=-1)
         for b in range(B)], axis=0)                                  # (B*S, D)

    out = jnp.dot(ctx2, wo_ref[0], preferred_element_type=jnp.float32)
    out = out + bo_ref[0] + x2                                        # residual
    mu = jnp.mean(out, axis=-1, keepdims=True)
    var = jnp.mean((out - mu) ** 2, axis=-1, keepdims=True)
    out = (out - mu) * jax.lax.rsqrt(var + 1e-5)
    out = out * gamma_ref[0] + beta_ref[0]                            # (B*S, D)

    out3 = out.reshape(B, S, D)

    # Final linear (shared target_out weights, as in the PyTorch code):
    #   y = flatten(out) @ W_state + action @ W_act + b
    # (action concat eliminated; W split outside the kernel.)
    y = jnp.dot(action_ref[...], w_act_ref[...],
                preferred_element_type=jnp.float32) + b_out_ref[...]
    for s_idx in range(S):
        y = y + jnp.dot(out3[:, s_idx, :], w_state_ref[s_idx],
                        preferred_element_type=jnp.float32)
    out_ref[0] = y                                                    # (B, O)


# ---------------------------------------------------------------------------
# RND forward: single fused pallas_call.
# ---------------------------------------------------------------------------
def rnd_forward(state, action, params, n_heads):
    B, S, D = state.shape
    A = action.shape[1]
    state_dim = S * D
    O = params["target_out"]["w"].shape[1]

    def fuse_qkv(p):
        wqkv = jnp.concatenate([p["wq"], p["wk"], p["wv"]], axis=1)   # (D, 3D)
        bqkv = jnp.concatenate([p["bq"], p["bk"], p["bv"]], axis=1)   # (1, 3D)
        return wqkv, bqkv

    tw, tb = fuse_qkv(params["target_mha"])
    pw, pb = fuse_qkv(params["predictor_mha"])
    tm, pm = params["target_mha"], params["predictor_mha"]

    # Branch-stacked weights: index 0 = target, 1 = predictor.
    wqkv = jnp.stack([tw, pw], axis=0)                # (2, D, 3D)
    bqkv = jnp.stack([tb, pb], axis=0)                # (2, 1, 3D)
    wo = jnp.stack([tm["wo"], pm["wo"]], axis=0)      # (2, D, D)
    bo = jnp.stack([tm["bo"], pm["bo"]], axis=0)      # (2, 1, D)
    gamma = jnp.stack([tm["gamma"], pm["gamma"]], 0)  # (2, 1, D)
    beta = jnp.stack([tm["beta"], pm["beta"]], 0)     # (2, 1, D)

    # Shared final linear (target_out, used for BOTH branches per the spec).
    w_full = params["target_out"]["w"]                # (state_dim + A, O)
    b_out = params["target_out"]["b"]                 # (1, O)
    w_state = w_full[:state_dim].reshape(S, D, O)     # (S, D, O)
    a_pad = 8 * ((A + 7) // 8)                        # pad action K-dim to 8
    w_act = jnp.zeros((a_pad, O), w_full.dtype).at[:A].set(w_full[state_dim:])
    act_p = jnp.zeros((B, a_pad), action.dtype).at[:, :A].set(action)

    kern = functools.partial(rnd_kernel, n_heads=n_heads)

    feats = pl.pallas_call(
        kern,
        out_shape=jax.ShapeDtypeStruct((2, B, O), jnp.float32),
        grid=(2,),
        in_specs=[
            pl.BlockSpec((B, S, D), lambda br: (0, 0, 0)),       # state
            pl.BlockSpec((B, a_pad), lambda br: (0, 0)),         # action (pad)
            pl.BlockSpec((1, D, 3 * D), lambda br: (br, 0, 0)),  # wqkv
            pl.BlockSpec((1, 1, 3 * D), lambda br: (br, 0, 0)),  # bqkv
            pl.BlockSpec((1, D, D), lambda br: (br, 0, 0)),      # wo
            pl.BlockSpec((1, 1, D), lambda br: (br, 0, 0)),      # bo
            pl.BlockSpec((1, 1, D), lambda br: (br, 0, 0)),      # gamma
            pl.BlockSpec((1, 1, D), lambda br: (br, 0, 0)),      # beta
            pl.BlockSpec((S, D, O), lambda br: (0, 0, 0)),       # w_state
            pl.BlockSpec((a_pad, O), lambda br: (0, 0)),         # w_act
            pl.BlockSpec((1, O), lambda br: (0, 0)),             # b_out
        ],
        out_specs=pl.BlockSpec((1, B, O), lambda br: (br, 0, 0)),
        compiler_params=pltpu.CompilerParams(
            dimension_semantics=("parallel",)),                  # 1 branch / TC on v7x
    )(state, act_p, wqkv, bqkv, wo, bo, gamma, beta, w_state, w_act, b_out)

    target_feature = feats[0]
    predict_feature = feats[1]
    return predict_feature, target_feature


# ---------------------------------------------------------------------------
# Deterministic parameter construction + pure-JAX reference for checking
# ---------------------------------------------------------------------------
def make_mha_params(key, d_model):
    ks = jax.random.split(key, 8)
    sc = 1.0 / math.sqrt(d_model)
    return {
        "wq": jax.random.normal(ks[0], (d_model, d_model), jnp.float32) * sc,
        "wk": jax.random.normal(ks[1], (d_model, d_model), jnp.float32) * sc,
        "wv": jax.random.normal(ks[2], (d_model, d_model), jnp.float32) * sc,
        "wo": jax.random.normal(ks[3], (d_model, d_model), jnp.float32) * sc,
        "bq": jax.random.normal(ks[4], (1, d_model), jnp.float32) * 0.01,
        "bk": jax.random.normal(ks[5], (1, d_model), jnp.float32) * 0.01,
        "bv": jax.random.normal(ks[6], (1, d_model), jnp.float32) * 0.01,
        "bo": jax.random.normal(ks[7], (1, d_model), jnp.float32) * 0.01,
        "gamma": jnp.ones((1, d_model), jnp.float32),
        "beta": jnp.zeros((1, d_model), jnp.float32),
    }


def make_linear_params(key, fan_in, fan_out):
    k1, k2 = jax.random.split(key)
    sc = 1.0 / math.sqrt(fan_in)
    return {
        "w": jax.random.normal(k1, (fan_in, fan_out), jnp.float32) * sc,
        "b": jax.random.normal(k2, (1, fan_out), jnp.float32) * sc,
    }


def mha_reference(x, p, n_heads):
    B, S, D = x.shape
    dk = D // n_heads
    q = x @ p["wq"] + p["bq"][0]
    k = x @ p["wk"] + p["bk"][0]
    v = x @ p["wv"] + p["bv"][0]

    def split(t):
        return t.reshape(B, S, n_heads, dk).transpose(0, 2, 1, 3)

    qh, kh, vh = split(q), split(k), split(v)
    s = jnp.einsum("bhqd,bhkd->bhqk", qh, kh) / math.sqrt(dk)
    a = jax.nn.softmax(s, axis=-1)
    ctx = jnp.einsum("bhqk,bhkd->bhqd", a, vh)
    ctx = ctx.transpose(0, 2, 1, 3).reshape(B, S, D)
    out = ctx @ p["wo"] + p["bo"][0] + x
    mu = out.mean(-1, keepdims=True)
    var = ((out - mu) ** 2).mean(-1, keepdims=True)
    out = (out - mu) * jax.lax.rsqrt(var + 1e-5)
    return out * p["gamma"][0] + p["beta"][0]


def rnd_reference(state, action, params, n_heads):
    B = state.shape[0]
    t = mha_reference(state, params["target_mha"], n_heads).reshape(B, -1)
    t = jnp.concatenate((t, action), 1)
    t = t @ params["target_out"]["w"] + params["target_out"]["b"]
    p = mha_reference(state, params["predictor_mha"], n_heads).reshape(B, -1)
    p = jnp.concatenate((p, action), 1)
    p = p @ params["target_out"]["w"] + params["target_out"]["b"]
    return p, t


if __name__ == "__main__":
    B, S, D = 2, 8, 32          # batch, seq, d_model
    N_HEADS = 4
    STATE_DIM = S * D           # 256 (flattened MHA output)
    ACTION_DIM = 4
    OUT_DIM = 512

    key = jax.random.PRNGKey(0)
    k_state, k_action, k_tm, k_pm, k_to, k_po = jax.random.split(key, 6)

    state = jax.random.normal(k_state, (B, S, D), jnp.float32)
    action = jax.random.normal(k_action, (B, ACTION_DIM), jnp.float32)

    params = {
        "target_mha": make_mha_params(k_tm, D),
        "predictor_mha": make_mha_params(k_pm, D),
        "target_out": make_linear_params(k_to, STATE_DIM + ACTION_DIM, OUT_DIM),
        # predictor_out exists in the module but is never used by forward().
        "predictor_out": make_linear_params(k_po, STATE_DIM + ACTION_DIM, OUT_DIM),
    }

    fwd = jax.jit(functools.partial(rnd_forward, n_heads=N_HEADS))
    predict_feature, target_feature = jax.block_until_ready(
        fwd(state, action, params))

    ref_p, ref_t = rnd_reference(state, action, params, N_HEADS)
    assert predict_feature.shape == (B, OUT_DIM)
    assert target_feature.shape == (B, OUT_DIM)
    # Tolerance allows for the approximate (EUP) reciprocal in the softmax.
    assert jnp.allclose(predict_feature, ref_p, atol=2e-3, rtol=2e-3)
    assert jnp.allclose(target_feature, ref_t, atol=2e-3, rtol=2e-3)

    print("KERNEL_OK")
</pallas_src>

<mosaic_0001>
module attributes {stable_mosaic.version = 11 : i64} {
  func.func @rnd_kernel(%arg0: i32, %arg1: memref<2x8x32xf32, #tpu.memory_space<vmem>>, %arg2: memref<2x8xf32, #tpu.memory_space<vmem>>, %arg3: memref<1x32x96xf32, #tpu.memory_space<vmem>>, %arg4: memref<1x1x96xf32, #tpu.memory_space<vmem>>, %arg5: memref<1x32x32xf32, #tpu.memory_space<vmem>>, %arg6: memref<1x1x32xf32, #tpu.memory_space<vmem>>, %arg7: memref<1x1x32xf32, #tpu.memory_space<vmem>>, %arg8: memref<1x1x32xf32, #tpu.memory_space<vmem>>, %arg9: memref<8x32x512xf32, #tpu.memory_space<vmem>>, %arg10: memref<8x512xf32, #tpu.memory_space<vmem>>, %arg11: memref<1x512xf32, #tpu.memory_space<vmem>>, %arg12: memref<1x2x512xf32, #tpu.memory_space<vmem>>) attributes {dimension_semantics = [#tpu.dimension_semantics<parallel>], iteration_bounds = array<i64: 2>, scalar_prefetch = 0 : i64, scratch_operands = 0 : i64, tpu.core_type = #tpu.core_type<tc>, window_params = [{pipeline_mode = #tpu.pipeline_mode<synchronous>, transform_indices = @transform_0, window_bounds = array<i64: 2, 8, 32>}, {pipeline_mode = #tpu.pipeline_mode<synchronous>, transform_indices = @transform_1, window_bounds = array<i64: 2, 8>}, {transform_indices = @transform_2, window_bounds = array<i64: 1, 32, 96>}, {transform_indices = @transform_3, window_bounds = array<i64: 1, 1, 96>}, {transform_indices = @transform_4, window_bounds = array<i64: 1, 32, 32>}, {transform_indices = @transform_5, window_bounds = array<i64: 1, 1, 32>}, {transform_indices = @transform_6, window_bounds = array<i64: 1, 1, 32>}, {transform_indices = @transform_7, window_bounds = array<i64: 1, 1, 32>}, {pipeline_mode = #tpu.pipeline_mode<synchronous>, transform_indices = @transform_8, window_bounds = array<i64: 8, 32, 512>}, {pipeline_mode = #tpu.pipeline_mode<synchronous>, transform_indices = @transform_9, window_bounds = array<i64: 8, 512>}, {pipeline_mode = #tpu.pipeline_mode<synchronous>, transform_indices = @transform_10, window_bounds = array<i64: 1, 512>}, {transform_indices = @transform_11, window_bounds = array<i64: 1, 2, 512>}]} {
    %c0 = arith.constant 0 : index
    %c0_0 = arith.constant 0 : index
    %c0_1 = arith.constant 0 : index
    %0 = vector.load %arg1[%c0, %c0_0, %c0_1] : memref<2x8x32xf32, #tpu.memory_space<vmem>>, vector<2x8x32xf32>
    %1 = vector.shape_cast %0 : vector<2x8x32xf32> to vector<16x32xf32>
    %c0_2 = arith.constant 0 : index
    %c0_3 = arith.constant 0 : index
    %c0_4 = arith.constant 0 : index
    %2 = vector.load %arg3[%c0_2, %c0_3, %c0_4] : memref<1x32x96xf32, #tpu.memory_space<vmem>>, vector<1x32x96xf32>
    %3 = vector.shape_cast %2 : vector<1x32x96xf32> to vector<32x96xf32>
    %cst = arith.constant dense<0.000000e+00> : vector<16x96xf32>
    %4 = tpu.matmul %1, %3, %cst {dimension_numbers = #tpu.dot_dimension_numbers<[1], [0], [0], [1], [0, 0, 1, 1], [], []>} : vector<16x32xf32>, vector<32x96xf32>, vector<16x96xf32> -> vector<16x96xf32>
    %c0_5 = arith.constant 0 : index
    %c0_6 = arith.constant 0 : index
    %c0_7 = arith.constant 0 : index
    %5 = vector.load %arg4[%c0_5, %c0_6, %c0_7] : memref<1x1x96xf32, #tpu.memory_space<vmem>>, vector<1x1x96xf32>
    %6 = vector.shape_cast %5 : vector<1x1x96xf32> to vector<1x96xf32>
    %7 = vector.broadcast %6 : vector<1x96xf32> to vector<16x96xf32>
    %8 = arith.addf %4, %7 : vector<16x96xf32>
    %9 = vector.extract_strided_slice %8 {offsets = [0, 0], sizes = [8, 8], strides = [1, 1]} : vector<16x96xf32> to vector<8x8xf32>
    %10 = vector.extract_strided_slice %8 {offsets = [0, 8], sizes = [8, 8], strides = [1, 1]} : vector<16x96xf32> to vector<8x8xf32>
    %11 = vector.extract_strided_slice %8 {offsets = [0, 16], sizes = [8, 8], strides = [1, 1]} : vector<16x96xf32> to vector<8x8xf32>
    %12 = vector.extract_strided_slice %8 {offsets = [0, 24], sizes = [8, 8], strides = [1, 1]} : vector<16x96xf32> to vector<8x8xf32>
    %13 = vector.extract_strided_slice %8 {offsets = [8, 0], sizes = [8, 8], strides = [1, 1]} : vector<16x96xf32> to vector<8x8xf32>
    %14 = vector.extract_strided_slice %8 {offsets = [8, 8], sizes = [8, 8], strides = [1, 1]} : vector<16x96xf32> to vector<8x8xf32>
    %15 = vector.extract_strided_slice %8 {offsets = [8, 16], sizes = [8, 8], strides = [1, 1]} : vector<16x96xf32> to vector<8x8xf32>
    %16 = vector.extract_strided_slice %8 {offsets = [8, 24], sizes = [8, 8], strides = [1, 1]} : vector<16x96xf32> to vector<8x8xf32>
    %17 = vector.shape_cast %9 : vector<8x8xf32> to vector<1x8x8xf32>
    %18 = vector.shape_cast %10 : vector<8x8xf32> to vector<1x8x8xf32>
    %19 = vector.shape_cast %11 : vector<8x8xf32> to vector<1x8x8xf32>
    %20 = vector.shape_cast %12 : vector<8x8xf32> to vector<1x8x8xf32>
    %21 = vector.shape_cast %13 : vector<8x8xf32> to vector<1x8x8xf32>
    %22 = vector.shape_cast %14 : vector<8x8xf32> to vector<1x8x8xf32>
    %23 = vector.shape_cast %15 : vector<8x8xf32> to vector<1x8x8xf32>
    %24 = vector.shape_cast %16 : vector<8x8xf32> to vector<1x8x8xf32>
    %25 = tpu.concatenate %17, %18, %19, %20, %21, %22, %23, %24 in 0 : vector<1x8x8xf32>, vector<1x8x8xf32>, vector<1x8x8xf32>, vector<1x8x8xf32>, vector<1x8x8xf32>, vector<1x8x8xf32>, vector<1x8x8xf32>, vector<1x8x8xf32> -> vector<8x8x8xf32>
    %26 = vector.extract_strided_slice %8 {offsets = [0, 32], sizes = [8, 8], strides = [1, 1]} : vector<16x96xf32> to vector<8x8xf32>
    %27 = vector.extract_strided_slice %8 {offsets = [0, 40], sizes = [8, 8], strides = [1, 1]} : vector<16x96xf32> to vector<8x8xf32>
    %28 = vector.extract_strided_slice %8 {offsets = [0, 48], sizes = [8, 8], strides = [1, 1]} : vector<16x96xf32> to vector<8x8xf32>
    %29 = vector.extract_strided_slice %8 {offsets = [0, 56], sizes = [8, 8], strides = [1, 1]} : vector<16x96xf32> to vector<8x8xf32>
    %30 = vector.extract_strided_slice %8 {offsets = [8, 32], sizes = [8, 8], strides = [1, 1]} : vector<16x96xf32> to vector<8x8xf32>
    %31 = vector.extract_strided_slice %8 {offsets = [8, 40], sizes = [8, 8], strides = [1, 1]} : vector<16x96xf32> to vector<8x8xf32>
    %32 = vector.extract_strided_slice %8 {offsets = [8, 48], sizes = [8, 8], strides = [1, 1]} : vector<16x96xf32> to vector<8x8xf32>
    %33 = vector.extract_strided_slice %8 {offsets = [8, 56], sizes = [8, 8], strides = [1, 1]} : vector<16x96xf32> to vector<8x8xf32>
    %34 = vector.shape_cast %26 : vector<8x8xf32> to vector<1x8x8xf32>
    %35 = vector.shape_cast %27 : vector<8x8xf32> to vector<1x8x8xf32>
    %36 = vector.shape_cast %28 : vector<8x8xf32> to vector<1x8x8xf32>
    %37 = vector.shape_cast %29 : vector<8x8xf32> to vector<1x8x8xf32>
    %38 = vector.shape_cast %30 : vector<8x8xf32> to vector<1x8x8xf32>
    %39 = vector.shape_cast %31 : vector<8x8xf32> to vector<1x8x8xf32>
    %40 = vector.shape_cast %32 : vector<8x8xf32> to vector<1x8x8xf32>
    %41 = vector.shape_cast %33 : vector<8x8xf32> to vector<1x8x8xf32>
    %42 = tpu.concatenate %34, %35, %36, %37, %38, %39, %40, %41 in 0 : vector<1x8x8xf32>, vector<1x8x8xf32>, vector<1x8x8xf32>, vector<1x8x8xf32>, vector<1x8x8xf32>, vector<1x8x8xf32>, vector<1x8x8xf32>, vector<1x8x8xf32> -> vector<8x8x8xf32>
    %43 = vector.extract_strided_slice %8 {offsets = [0, 64], sizes = [8, 8], strides = [1, 1]} : vector<16x96xf32> to vector<8x8xf32>
    %44 = vector.extract_strided_slice %8 {offsets = [0, 72], sizes = [8, 8], strides = [1, 1]} : vector<16x96xf32> to vector<8x8xf32>
    %45 = vector.extract_strided_slice %8 {offsets = [0, 80], sizes = [8, 8], strides = [1, 1]} : vector<16x96xf32> to vector<8x8xf32>
    %46 = vector.extract_strided_slice %8 {offsets = [0, 88], sizes = [8, 8], strides = [1, 1]} : vector<16x96xf32> to vector<8x8xf32>
    %47 = vector.extract_strided_slice %8 {offsets = [8, 64], sizes = [8, 8], strides = [1, 1]} : vector<16x96xf32> to vector<8x8xf32>
    %48 = vector.extract_strided_slice %8 {offsets = [8, 72], sizes = [8, 8], strides = [1, 1]} : vector<16x96xf32> to vector<8x8xf32>
    %49 = vector.extract_strided_slice %8 {offsets = [8, 80], sizes = [8, 8], strides = [1, 1]} : vector<16x96xf32> to vector<8x8xf32>
    %50 = vector.extract_strided_slice %8 {offsets = [8, 88], sizes = [8, 8], strides = [1, 1]} : vector<16x96xf32> to vector<8x8xf32>
    %51 = vector.shape_cast %43 : vector<8x8xf32> to vector<1x8x8xf32>
    %52 = vector.shape_cast %44 : vector<8x8xf32> to vector<1x8x8xf32>
    %53 = vector.shape_cast %45 : vector<8x8xf32> to vector<1x8x8xf32>
    %54 = vector.shape_cast %46 : vector<8x8xf32> to vector<1x8x8xf32>
    %55 = vector.shape_cast %47 : vector<8x8xf32> to vector<1x8x8xf32>
    %56 = vector.shape_cast %48 : vector<8x8xf32> to vector<1x8x8xf32>
    %57 = vector.shape_cast %49 : vector<8x8xf32> to vector<1x8x8xf32>
    %58 = vector.shape_cast %50 : vector<8x8xf32> to vector<1x8x8xf32>
    %59 = tpu.concatenate %51, %52, %53, %54, %55, %56, %57, %58 in 0 : vector<1x8x8xf32>, vector<1x8x8xf32>, vector<1x8x8xf32>, vector<1x8x8xf32>, vector<1x8x8xf32>, vector<1x8x8xf32>, vector<1x8x8xf32>, vector<1x8x8xf32> -> vector<8x8x8xf32>
    "tpu.trace_start"() <{level = 10 : i32, message = "nqd,nkd->nqk"}> : () -> ()
    %cst_8 = arith.constant dense<0.000000e+00> : vector<8x8x8xf32>
    %60 = tpu.matmul %25, %42, %cst_8 {dimension_numbers = #tpu.dot_dimension_numbers<[2], [2], [1], [1], [0, 0, 0, 1, 1, 1], [0], [0]>} : vector<8x8x8xf32>, vector<8x8x8xf32>, vector<8x8x8xf32> -> vector<8x8x8xf32>
    "tpu.trace_stop"() : () -> ()
    %cst_9 = arith.constant 0.353553385 : f32
    %61 = vector.broadcast %cst_9 : f32 to vector<8x8x8xf32>
    %62 = arith.mulf %60, %61 : vector<8x8x8xf32>
    %cst_10 = arith.constant dense<0xFF800000> : vector<8x8xf32>
    %63 = vector.multi_reduction <maximumf>, %62, %cst_10 [2] : vector<8x8x8xf32> to vector<8x8xf32>
    %64 = vector.shape_cast %63 : vector<8x8xf32> to vector<8x8x1xf32>
    %65 = vector.broadcast %64 : vector<8x8x1xf32> to vector<8x8x8xf32>
    %66 = arith.subf %62, %65 : vector<8x8x8xf32>
    %67 = math.exp %66 : vector<8x8x8xf32>
    %cst_11 = arith.constant dense<0.000000e+00> : vector<8x8xf32>
    %68 = vector.multi_reduction <add>, %67, %cst_11 [2] : vector<8x8x8xf32> to vector<8x8xf32>
    %69 = vector.shape_cast %68 : vector<8x8xf32> to vector<8x8x1xf32>
    %70 = tpu.reciprocal %69 {approx = true} : vector<8x8x1xf32> -> vector<8x8x1xf32>
    %71 = vector.broadcast %70 : vector<8x8x1xf32> to vector<8x8x8xf32>
    %72 = arith.mulf %67, %71 : vector<8x8x8xf32>
    "tpu.trace_start"() <{level = 10 : i32, message = "nqk,nkd->nqd"}> : () -> ()
    %cst_12 = arith.constant dense<0.000000e+00> : vector<8x8x8xf32>
    %73 = tpu.matmul %72, %59, %cst_12 {dimension_numbers = #tpu.dot_dimension_numbers<[2], [1], [1], [2], [0, 0, 0, 1, 1, 2], [0], [0]>} : vector<8x8x8xf32>, vector<8x8x8xf32>, vector<8x8x8xf32> -> vector<8x8x8xf32>
    "tpu.trace_stop"() : () -> ()
    %74 = vector.extract_strided_slice %73 {offsets = [0, 0, 0], sizes = [1, 8, 8], strides = [1, 1, 1]} : vector<8x8x8xf32> to vector<1x8x8xf32>
    %75 = vector.shape_cast %74 : vector<1x8x8xf32> to vector<8x8xf32>
    %76 = vector.extract_strided_slice %73 {offsets = [1, 0, 0], sizes = [1, 8, 8], strides = [1, 1, 1]} : vector<8x8x8xf32> to vector<1x8x8xf32>
    %77 = vector.shape_cast %76 : vector<1x8x8xf32> to vector<8x8xf32>
    %78 = vector.extract_strided_slice %73 {offsets = [2, 0, 0], sizes = [1, 8, 8], strides = [1, 1, 1]} : vector<8x8x8xf32> to vector<1x8x8xf32>
    %79 = vector.shape_cast %78 : vector<1x8x8xf32> to vector<8x8xf32>
    %80 = vector.extract_strided_slice %73 {offsets = [3, 0, 0], sizes = [1, 8, 8], strides = [1, 1, 1]} : vector<8x8x8xf32> to vector<1x8x8xf32>
    %81 = vector.shape_cast %80 : vector<1x8x8xf32> to vector<8x8xf32>
    %82 = tpu.concatenate %75, %77, %79, %81 in 1 : vector<8x8xf32>, vector<8x8xf32>, vector<8x8xf32>, vector<8x8xf32> -> vector<8x32xf32>
    %83 = vector.extract_strided_slice %73 {offsets = [4, 0, 0], sizes = [1, 8, 8], strides = [1, 1, 1]} : vector<8x8x8xf32> to vector<1x8x8xf32>
    %84 = vector.shape_cast %83 : vector<1x8x8xf32> to vector<8x8xf32>
    %85 = vector.extract_strided_slice %73 {offsets = [5, 0, 0], sizes = [1, 8, 8], strides = [1, 1, 1]} : vector<8x8x8xf32> to vector<1x8x8xf32>
    %86 = vector.shape_cast %85 : vector<1x8x8xf32> to vector<8x8xf32>
    %87 = vector.extract_strided_slice %73 {offsets = [6, 0, 0], sizes = [1, 8, 8], strides = [1, 1, 1]} : vector<8x8x8xf32> to vector<1x8x8xf32>
    %88 = vector.shape_cast %87 : vector<1x8x8xf32> to vector<8x8xf32>
    %89 = vector.extract_strided_slice %73 {offsets = [7, 0, 0], sizes = [1, 8, 8], strides = [1, 1, 1]} : vector<8x8x8xf32> to vector<1x8x8xf32>
    %90 = vector.shape_cast %89 : vector<1x8x8xf32> to vector<8x8xf32>
    %91 = tpu.concatenate %84, %86, %88, %90 in 1 : vector<8x8xf32>, vector<8x8xf32>, vector<8x8xf32>, vector<8x8xf32> -> vector<8x32xf32>
    %92 = tpu.concatenate %82, %91 in 0 : vector<8x32xf32>, vector<8x32xf32> -> vector<16x32xf32>
    %c0_13 = arith.constant 0 : index
    %c0_14 = arith.constant 0 : index
    %c0_15 = arith.constant 0 : index
    %93 = vector.load %arg5[%c0_13, %c0_14, %c0_15] : memref<1x32x32xf32, #tpu.memory_space<vmem>>, vector<1x32x32xf32>
    %94 = vector.shape_cast %93 : vector<1x32x32xf32> to vector<32x32xf32>
    %cst_16 = arith.constant dense<0.000000e+00> : vector<16x32xf32>
    %95 = tpu.matmul %92, %94, %cst_16 {dimension_numbers = #tpu.dot_dimension_numbers<[1], [0], [0], [1], [0, 0, 1, 1], [], []>} : vector<16x32xf32>, vector<32x32xf32>, vector<16x32xf32> -> vector<16x32xf32>
    %c0_17 = arith.constant 0 : index
    %c0_18 = arith.constant 0 : index
    %c0_19 = arith.constant 0 : index
    %96 = vector.load %arg6[%c0_17, %c0_18, %c0_19] : memref<1x1x32xf32, #tpu.memory_space<vmem>>, vector<1x1x32xf32>
    %97 = vector.shape_cast %96 : vector<1x1x32xf32> to vector<1x32xf32>
    %98 = vector.broadcast %97 : vector<1x32xf32> to vector<16x32xf32>
    %99 = arith.addf %95, %98 : vector<16x32xf32>
    %100 = arith.addf %99, %1 : vector<16x32xf32>
    %cst_20 = arith.constant dense<0.000000e+00> : vector<16xf32>
    %101 = vector.multi_reduction <add>, %100, %cst_20 [1] : vector<16x32xf32> to vector<16xf32>
    %102 = vector.shape_cast %101 : vector<16xf32> to vector<16x1xf32>
    %cst_21 = arith.constant 3.200000e+01 : f32
    %103 = vector.broadcast %cst_21 : f32 to vector<16x1xf32>
    %104 = arith.divf %102, %103 : vector<16x1xf32>
    %105 = vector.broadcast %104 : vector<16x1xf32> to vector<16x32xf32>
    %106 = arith.subf %100, %105 : vector<16x32xf32>
    %107 = arith.mulf %106, %106 : vector<16x32xf32>
    %cst_22 = arith.constant dense<0.000000e+00> : vector<16xf32>
    %108 = vector.multi_reduction <add>, %107, %cst_22 [1] : vector<16x32xf32> to vector<16xf32>
    %109 = vector.shape_cast %108 : vector<16xf32> to vector<16x1xf32>
    %cst_23 = arith.constant 3.200000e+01 : f32
    %110 = vector.broadcast %cst_23 : f32 to vector<16x1xf32>
    %111 = arith.divf %109, %110 : vector<16x1xf32>
    %112 = vector.broadcast %104 : vector<16x1xf32> to vector<16x32xf32>
    %113 = arith.subf %100, %112 : vector<16x32xf32>
    %cst_24 = arith.constant 9.99999974E-6 : f32
    %114 = vector.broadcast %cst_24 : f32 to vector<16x1xf32>
    %115 = arith.addf %111, %114 : vector<16x1xf32>
    %116 = math.rsqrt %115 : vector<16x1xf32>
    %117 = vector.broadcast %116 : vector<16x1xf32> to vector<16x32xf32>
    %118 = arith.mulf %113, %117 : vector<16x32xf32>
    %c0_25 = arith.constant 0 : index
    %c0_26 = arith.constant 0 : index
    %c0_27 = arith.constant 0 : index
    %119 = vector.load %arg7[%c0_25, %c0_26, %c0_27] : memref<1x1x32xf32, #tpu.memory_space<vmem>>, vector<1x1x32xf32>
    %120 = vector.shape_cast %119 : vector<1x1x32xf32> to vector<1x32xf32>
    %121 = vector.broadcast %120 : vector<1x32xf32> to vector<16x32xf32>
    %122 = arith.mulf %118, %121 : vector<16x32xf32>
    %c0_28 = arith.constant 0 : index
    %c0_29 = arith.constant 0 : index
    %c0_30 = arith.constant 0 : index
    %123 = vector.load %arg8[%c0_28, %c0_29, %c0_30] : memref<1x1x32xf32, #tpu.memory_space<vmem>>, vector<1x1x32xf32>
    %124 = vector.shape_cast %123 : vector<1x1x32xf32> to vector<1x32xf32>
    %125 = vector.broadcast %124 : vector<1x32xf32> to vector<16x32xf32>
    %126 = arith.addf %122, %125 : vector<16x32xf32>
    %127 = vector.shape_cast %126 : vector<16x32xf32> to vector<2x8x32xf32>
    %c0_31 = arith.constant 0 : index
    %c0_32 = arith.constant 0 : index
    %128 = vector.load %arg2[%c0_31, %c0_32] : memref<2x8xf32, #tpu.memory_space<vmem>>, vector<2x8xf32>
    %c0_33 = arith.constant 0 : index
    %c0_34 = arith.constant 0 : index
    %129 = vector.load %arg10[%c0_33, %c0_34] : memref<8x512xf32, #tpu.memory_space<vmem>>, vector<8x512xf32>
    %cst_35 = arith.constant dense<0.000000e+00> : vector<2x512xf32>
    %130 = tpu.matmul %128, %129, %cst_35 {dimension_numbers = #tpu.dot_dimension_numbers<[1], [0], [0], [1], [0, 0, 1, 1], [], []>} : vector<2x8xf32>, vector<8x512xf32>, vector<2x512xf32> -> vector<2x512xf32>
    %c0_36 = arith.constant 0 : index
    %c0_37 = arith.constant 0 : index
    %131 = vector.load %arg11[%c0_36, %c0_37] : memref<1x512xf32, #tpu.memory_space<vmem>>, vector<1x512xf32>
    %132 = vector.broadcast %131 : vector<1x512xf32> to vector<2x512xf32>
    %133 = arith.addf %130, %132 : vector<2x512xf32>
    %134 = vector.extract_strided_slice %127 {offsets = [0, 0, 0], sizes = [2, 1, 32], strides = [1, 1, 1]} : vector<2x8x32xf32> to vector<2x1x32xf32>
    %135 = vector.shape_cast %134 : vector<2x1x32xf32> to vector<2x32xf32>
    %c0_38 = arith.constant 0 : index
    %c0_39 = arith.constant 0 : index
    %c0_40 = arith.constant 0 : index
    %136 = vector.load %arg9[%c0_38, %c0_39, %c0_40] : memref<8x32x512xf32, #tpu.memory_space<vmem>>, vector<1x32x512xf32>
    %137 = vector.shape_cast %136 : vector<1x32x512xf32> to vector<32x512xf32>
    %cst_41 = arith.constant dense<0.000000e+00> : vector<2x512xf32>
    %138 = tpu.matmul %135, %137, %cst_41 {dimension_numbers = #tpu.dot_dimension_numbers<[1], [0], [0], [1], [0, 0, 1, 1], [], []>} : vector<2x32xf32>, vector<32x512xf32>, vector<2x512xf32> -> vector<2x512xf32>
    %139 = arith.addf %133, %138 : vector<2x512xf32>
    %140 = vector.extract_strided_slice %127 {offsets = [0, 1, 0], sizes = [2, 1, 32], strides = [1, 1, 1]} : vector<2x8x32xf32> to vector<2x1x32xf32>
    %141 = vector.shape_cast %140 : vector<2x1x32xf32> to vector<2x32xf32>
    %c1 = arith.constant 1 : index
    %c0_42 = arith.constant 0 : index
    %c0_43 = arith.constant 0 : index
    %142 = vector.load %arg9[%c1, %c0_42, %c0_43] : memref<8x32x512xf32, #tpu.memory_space<vmem>>, vector<1x32x512xf32>
    %143 = vector.shape_cast %142 : vector<1x32x512xf32> to vector<32x512xf32>
    %cst_44 = arith.constant dense<0.000000e+00> : vector<2x512xf32>
    %144 = tpu.matmul %141, %143, %cst_44 {dimension_numbers = #tpu.dot_dimension_numbers<[1], [0], [0], [1], [0, 0, 1, 1], [], []>} : vector<2x32xf32>, vector<32x512xf32>, vector<2x512xf32> -> vector<2x512xf32>
    %145 = arith.addf %139, %144 : vector<2x512xf32>
    %146 = vector.extract_strided_slice %127 {offsets = [0, 2, 0], sizes = [2, 1, 32], strides = [1, 1, 1]} : vector<2x8x32xf32> to vector<2x1x32xf32>
    %147 = vector.shape_cast %146 : vector<2x1x32xf32> to vector<2x32xf32>
    %c2 = arith.constant 2 : index
    %c0_45 = arith.constant 0 : index
    %c0_46 = arith.constant 0 : index
    %148 = vector.load %arg9[%c2, %c0_45, %c0_46] : memref<8x32x512xf32, #tpu.memory_space<vmem>>, vector<1x32x512xf32>
    %149 = vector.shape_cast %148 : vector<1x32x512xf32> to vector<32x512xf32>
    %cst_47 = arith.constant dense<0.000000e+00> : vector<2x512xf32>
    %150 = tpu.matmul %147, %149, %cst_47 {dimension_numbers = #tpu.dot_dimension_numbers<[1], [0], [0], [1], [0, 0, 1, 1], [], []>} : vector<2x32xf32>, vector<32x512xf32>, vector<2x512xf32> -> vector<2x512xf32>
    %151 = arith.addf %145, %150 : vector<2x512xf32>
    %152 = vector.extract_strided_slice %127 {offsets = [0, 3, 0], sizes = [2, 1, 32], strides = [1, 1, 1]} : vector<2x8x32xf32> to vector<2x1x32xf32>
    %153 = vector.shape_cast %152 : vector<2x1x32xf32> to vector<2x32xf32>
    %c3 = arith.constant 3 : index
    %c0_48 = arith.constant 0 : index
    %c0_49 = arith.constant 0 : index
    %154 = vector.load %arg9[%c3, %c0_48, %c0_49] : memref<8x32x512xf32, #tpu.memory_space<vmem>>, vector<1x32x512xf32>
    %155 = vector.shape_cast %154 : vector<1x32x512xf32> to vector<32x512xf32>
    %cst_50 = arith.constant dense<0.000000e+00> : vector<2x512xf32>
    %156 = tpu.matmul %153, %155, %cst_50 {dimension_numbers = #tpu.dot_dimension_numbers<[1], [0], [0], [1], [0, 0, 1, 1], [], []>} : vector<2x32xf32>, vector<32x512xf32>, vector<2x512xf32> -> vector<2x512xf32>
    %157 = arith.addf %151, %156 : vector<2x512xf32>
    %158 = vector.extract_strided_slice %127 {offsets = [0, 4, 0], sizes = [2, 1, 32], strides = [1, 1, 1]} : vector<2x8x32xf32> to vector<2x1x32xf32>
    %159 = vector.shape_cast %158 : vector<2x1x32xf32> to vector<2x32xf32>
    %c4 = arith.constant 4 : index
    %c0_51 = arith.constant 0 : index
    %c0_52 = arith.constant 0 : index
    %160 = vector.load %arg9[%c4, %c0_51, %c0_52] : memref<8x32x512xf32, #tpu.memory_space<vmem>>, vector<1x32x512xf32>
    %161 = vector.shape_cast %160 : vector<1x32x512xf32> to vector<32x512xf32>
    %cst_53 = arith.constant dense<0.000000e+00> : vector<2x512xf32>
    %162 = tpu.matmul %159, %161, %cst_53 {dimension_numbers = #tpu.dot_dimension_numbers<[1], [0], [0], [1], [0, 0, 1, 1], [], []>} : vector<2x32xf32>, vector<32x512xf32>, vector<2x512xf32> -> vector<2x512xf32>
    %163 = arith.addf %157, %162 : vector<2x512xf32>
    %164 = vector.extract_strided_slice %127 {offsets = [0, 5, 0], sizes = [2, 1, 32], strides = [1, 1, 1]} : vector<2x8x32xf32> to vector<2x1x32xf32>
    %165 = vector.shape_cast %164 : vector<2x1x32xf32> to vector<2x32xf32>
    %c5 = arith.constant 5 : index
    %c0_54 = arith.constant 0 : index
    %c0_55 = arith.constant 0 : index
    %166 = vector.load %arg9[%c5, %c0_54, %c0_55] : memref<8x32x512xf32, #tpu.memory_space<vmem>>, vector<1x32x512xf32>
    %167 = vector.shape_cast %166 : vector<1x32x512xf32> to vector<32x512xf32>
    %cst_56 = arith.constant dense<0.000000e+00> : vector<2x512xf32>
    %168 = tpu.matmul %165, %167, %cst_56 {dimension_numbers = #tpu.dot_dimension_numbers<[1], [0], [0], [1], [0, 0, 1, 1], [], []>} : vector<2x32xf32>, vector<32x512xf32>, vector<2x512xf32> -> vector<2x512xf32>
    %169 = arith.addf %163, %168 : vector<2x512xf32>
    %170 = vector.extract_strided_slice %127 {offsets = [0, 6, 0], sizes = [2, 1, 32], strides = [1, 1, 1]} : vector<2x8x32xf32> to vector<2x1x32xf32>
    %171 = vector.shape_cast %170 : vector<2x1x32xf32> to vector<2x32xf32>
    %c6 = arith.constant 6 : index
    %c0_57 = arith.constant 0 : index
    %c0_58 = arith.constant 0 : index
    %172 = vector.load %arg9[%c6, %c0_57, %c0_58] : memref<8x32x512xf32, #tpu.memory_space<vmem>>, vector<1x32x512xf32>
    %173 = vector.shape_cast %172 : vector<1x32x512xf32> to vector<32x512xf32>
    %cst_59 = arith.constant dense<0.000000e+00> : vector<2x512xf32>
    %174 = tpu.matmul %171, %173, %cst_59 {dimension_numbers = #tpu.dot_dimension_numbers<[1], [0], [0], [1], [0, 0, 1, 1], [], []>} : vector<2x32xf32>, vector<32x512xf32>, vector<2x512xf32> -> vector<2x512xf32>
    %175 = arith.addf %169, %174 : vector<2x512xf32>
    %176 = vector.extract_strided_slice %127 {offsets = [0, 7, 0], sizes = [2, 1, 32], strides = [1, 1, 1]} : vector<2x8x32xf32> to vector<2x1x32xf32>
    %177 = vector.shape_cast %176 : vector<2x1x32xf32> to vector<2x32xf32>
    %c7 = arith.constant 7 : index
    %c0_60 = arith.constant 0 : index
    %c0_61 = arith.constant 0 : index
    %178 = vector.load %arg9[%c7, %c0_60, %c0_61] : memref<8x32x512xf32, #tpu.memory_space<vmem>>, vector<1x32x512xf32>
    %179 = vector.shape_cast %178 : vector<1x32x512xf32> to vector<32x512xf32>
    %cst_62 = arith.constant dense<0.000000e+00> : vector<2x512xf32>
    %180 = tpu.matmul %177, %179, %cst_62 {dimension_numbers = #tpu.dot_dimension_numbers<[1], [0], [0], [1], [0, 0, 1, 1], [], []>} : vector<2x32xf32>, vector<32x512xf32>, vector<2x512xf32> -> vector<2x512xf32>
    %181 = arith.addf %175, %180 : vector<2x512xf32>
    %c0_63 = arith.constant 0 : index
    %c0_64 = arith.constant 0 : index
    %c0_65 = arith.constant 0 : index
    %182 = vector.load %arg12[%c0_63, %c0_64, %c0_65] : memref<1x2x512xf32, #tpu.memory_space<vmem>>, vector<1x2x512xf32>
    %183 = vector.shape_cast %182 : vector<1x2x512xf32> to vector<2x512xf32>
    %184 = vector.shape_cast %181 : vector<2x512xf32> to vector<1x2x512xf32>
    tpu.vector_store %arg12[%c0_63, %c0_64, %c0_65], %184 {strides = array<i32>} : memref<1x2x512xf32, #tpu.memory_space<vmem>>, vector<1x2x512xf32>,
    return
  }
  func.func @transform_0(%arg0: i32) -> (i32, i32, i32) {
    %c0_i32 = arith.constant 0 : i32
    %c0_i32_0 = arith.constant 0 : i32
    %c0_i32_1 = arith.constant 0 : i32
    %c0_i32_2 = arith.constant 0 : i32
    return %c0_i32, %c0_i32_0, %c0_i32_1 : i32, i32, i32
  }
  func.func @transform_1(%arg0: i32) -> (i32, i32) {
    %c0_i32 = arith.constant 0 : i32
    %c0_i32_0 = arith.constant 0 : i32
    %c0_i32_1 = arith.constant 0 : i32
    return %c0_i32, %c0_i32_0 : i32, i32
  }
  func.func @transform_2(%arg0: i32) -> (i32, i32, i32) {
    %c0_i32 = arith.constant 0 : i32
    %c0_i32_0 = arith.constant 0 : i32
    %c0_i32_1 = arith.constant 0 : i32
    return %arg0, %c0_i32, %c0_i32_0 : i32, i32, i32
  }
  func.func @transform_3(%arg0: i32) -> (i32, i32, i32) {
    %c0_i32 = arith.constant 0 : i32
    %c0_i32_0 = arith.constant 0 : i32
    %c0_i32_1 = arith.constant 0 : i32
    return %arg0, %c0_i32, %c0_i32_0 : i32, i32, i32
  }
  func.func @transform_4(%arg0: i32) -> (i32, i32, i32) {
    %c0_i32 = arith.constant 0 : i32
    %c0_i32_0 = arith.constant 0 : i32
    %c0_i32_1 = arith.constant 0 : i32
    return %arg0, %c0_i32, %c0_i32_0 : i32, i32, i32
  }
  func.func @transform_5(%arg0: i32) -> (i32, i32, i32) {
    %c0_i32 = arith.constant 0 : i32
    %c0_i32_0 = arith.constant 0 : i32
    %c0_i32_1 = arith.constant 0 : i32
    return %arg0, %c0_i32, %c0_i32_0 : i32, i32, i32
  }
  func.func @transform_6(%arg0: i32) -> (i32, i32, i32) {
    %c0_i32 = arith.constant 0 : i32
    %c0_i32_0 = arith.constant 0 : i32
    %c0_i32_1 = arith.constant 0 : i32
    return %arg0, %c0_i32, %c0_i32_0 : i32, i32, i32
  }
  func.func @transform_7(%arg0: i32) -> (i32, i32, i32) {
    %c0_i32 = arith.constant 0 : i32
    %c0_i32_0 = arith.constant 0 : i32
    %c0_i32_1 = arith.constant 0 : i32
    return %arg0, %c0_i32, %c0_i32_0 : i32, i32, i32
  }
  func.func @transform_8(%arg0: i32) -> (i32, i32, i32) {
    %c0_i32 = arith.constant 0 : i32
    %c0_i32_0 = arith.constant 0 : i32
    %c0_i32_1 = arith.constant 0 : i32
    %c0_i32_2 = arith.constant 0 : i32
    return %c0_i32, %c0_i32_0, %c0_i32_1 : i32, i32, i32
  }
  func.func @transform_9(%arg0: i32) -> (i32, i32) {
    %c0_i32 = arith.constant 0 : i32
    %c0_i32_0 = arith.constant 0 : i32
    %c0_i32_1 = arith.constant 0 : i32
    return %c0_i32, %c0_i32_0 : i32, i32
  }
  func.func @transform_10(%arg0: i32) -> (i32, i32) {
    %c0_i32 = arith.constant 0 : i32
    %c0_i32_0 = arith.constant 0 : i32
    %c0_i32_1 = arith.constant 0 : i32
    return %c0_i32, %c0_i32_0 : i32, i32
  }
  func.func @transform_11(%arg0: i32) -> (i32, i32, i32) {
    %c0_i32 = arith.constant 0 : i32
    %c0_i32_0 = arith.constant 0 : i32
    %c0_i32_1 = arith.constant 0 : i32
    return %arg0, %c0_i32, %c0_i32_0 : i32, i32, i32
  }
}

</mosaic_0001>

<llo_original>
// kernel: rnd_forward.1
$region0: #{rnd_forward.1}
  #allocation0 [shape = 'u32[]', space=smem, size = 0x4, offset = 0x4, fixed_abs, tag = 'smem constant byte address 0x4 - core index']
  #allocation1 [shape = 'u32[144,128]{1,0:T(1,128)}', space=vmem, size = 0x12000, scoped, tag = 'internal scratch']
  %s0 = inlined_call_operand.vmem [shape: f32[2,8,32], index: 0, kind: input, shape index: {}]
  %s1 = inlined_call_operand.vmem [shape: f32[2,8], index: 1, kind: input, shape index: {}]
  %s2 = inlined_call_operand.vmem [shape: f32[2,32,96], index: 2, kind: input, shape index: {}]
  %s3 = inlined_call_operand.vmem [shape: f32[2,1,96], index: 3, kind: input, shape index: {}]
  %s4 = inlined_call_operand.vmem [shape: f32[2,32,32], index: 4, kind: input, shape index: {}]
  %s5 = inlined_call_operand.vmem [shape: f32[2,1,32], index: 5, kind: input, shape index: {}]
  %s6 = inlined_call_operand.vmem [shape: f32[2,1,32], index: 6, kind: input, shape index: {}]
  %s7 = inlined_call_operand.vmem [shape: f32[2,1,32], index: 7, kind: input, shape index: {}]
  %s8 = inlined_call_operand.vmem [shape: f32[8,32,512], index: 8, kind: input, shape index: {}]
  %s9 = inlined_call_operand.vmem [shape: f32[8,512], index: 9, kind: input, shape index: {}]
  %s10 = inlined_call_operand.vmem [shape: f32[1,512], index: 10, kind: input, shape index: {}]
  %s11 = inlined_call_operand.vmem [shape: f32[2,2,512], index: 11, kind: output, shape index: {}]
  %s12 = sld [smem:[#allocation0]]
  $region77: #{rnd_forward.1} parent=0
    _
  %s14 = ssub.s32 1, %s12
  %s15 = scalar_select 0, %s14, %s12
  loop: start=0, step=1, limit=4
  $region2: #{rnd_forward.1} parent=0 // loop_pre_header
    _
  $region3: #{rnd_forward.1} parent=0 // loop_header
    %s17 = sphi 0, %s21
    %p18 = scmp.ge.s32.totalorder %s17, 4
    %s25 = sphi 0, %s25
    %s27 = sphi 0, %s25
    %s28 = sphi 0, %s27
    %s42 = sphi 0, %s28
    %s46 = sphi 0, %s46
    %s48 = sphi 0, %s46
    %s49 = sphi 0, %s48
    %s63 = sphi 0, %s49
    %s69 = sphi 0, %s71
    %s72 = sphi 0, %s69
    %s73 = sphi 0, %s72
    %s89 = sphi 0, %s73
    %s95 = sphi 0, %s97
    %s98 = sphi 0, %s95
    %s99 = sphi 0, %s98
    %s115 = sphi 0, %s99
    %s121 = sphi 0, %s123
    %s124 = sphi 0, %s121
    %s125 = sphi 0, %s124
    %s141 = sphi 0, %s125
    %s147 = sphi 0, %s149
    %s150 = sphi 0, %s147
    %s151 = sphi 0, %s150
    %s167 = sphi 0, %s151
    %s173 = sphi 0, %s175
    %s176 = sphi 0, %s173
    %s177 = sphi 0, %s176
    %s193 = sphi 0, %s177
    %s199 = sphi 0, %s201
    %s202 = sphi 0, %s199
    %s203 = sphi 0, %s202
    %s219 = sphi 0, %s203
    %s223 = sphi 0, %s223
    %s225 = sphi 0, %s223
    %s226 = sphi 0, %s225
    %s240 = sphi 0, %s226
    %s244 = sphi 0, %s244
    %s246 = sphi 0, %s244
    %s247 = sphi 0, %s246
    %s261 = sphi 0, %s247
    %s265 = sphi 0, %s265
    %s267 = sphi 0, %s265
    %s268 = sphi 0, %s267
    %s282 = sphi 0, %s268
    %s288 = sphi 0, %s290
    %s291 = sphi 0, %s288
    %s292 = sphi 0, %s291
    %s308 = sphi 0, %s292
  $region4: #{rnd_forward.1} parent=0 // loop_header_branch
    %20 = sbr.rel (%p18) target = $region8
  $region5: #{rnd_forward.1} parent=0 // loop_body
    %s22 = ssub.s32 %s17, 1
    %s23 = ssub.s32 %s17, 2
    %s24 = sadd.s32 %s17, 1
    %s26 = sadd.s32 %s25, 1
    %p29 = scmp.eq.s32.totalorder %s17, 1
    %p30 = scmp.ne.s32.totalorder %s25, %s27
    %p31 = scmp.eq.s32.totalorder %s17, 0
    %p32 = por %p30, %p31
    %p33 = scmp.ne.s32.totalorder %s25, %s27
    %p34 = scmp.eq.s32.totalorder %s22, 1
    %p35 = por %p33, %p34
    %p36 = scmp.ne.s32.totalorder %s27, %s28
    %p37 = scmp.eq.s32.totalorder %s22, 0
    %p38 = por %p36, %p37
    %p39 = scmp.ne.s32.totalorder %s27, %s28
    %p40 = scmp.eq.s32.totalorder %s23, 1
    %p41 = por %p39, %p40
    %p43 = scmp.ne.s32.totalorder %s28, %s42
    %p44 = scmp.eq.s32.totalorder %s23, 0
    %p45 = por %p43, %p44
    %s47 = sadd.s32 %s46, 1
    %p50 = scmp.eq.s32.totalorder %s17, 1
    %p51 = scmp.ne.s32.totalorder %s46, %s48
    %p52 = scmp.eq.s32.totalorder %s17, 0
    %p53 = por %p51, %p52
    %p54 = scmp.ne.s32.totalorder %s46, %s48
    %p55 = scmp.eq.s32.totalorder %s22, 1
    %p56 = por %p54, %p55
    %p57 = scmp.ne.s32.totalorder %s48, %s49
    %p58 = scmp.eq.s32.totalorder %s22, 0
    %p59 = por %p57, %p58
    %p60 = scmp.ne.s32.totalorder %s48, %s49
    %p61 = scmp.eq.s32.totalorder %s23, 1
    %p62 = por %p60, %p61
    %p64 = scmp.ne.s32.totalorder %s49, %s63
    %p65 = scmp.eq.s32.totalorder %s23, 0
    %p66 = por %p64, %p65
    %s67 = ssub.s32 %s17, %s24
    %p68 = scmp.eq.s32.totalorder %s67, 0
    %s70 = sadd.s32 %s69, 1
    %s71 = scalar_select %p68, %s69, %s70
    %p74 = pneg %p68
    %p75 = scmp.eq.s32.totalorder %s17, 1
    %p76 = por %p74, %p75
    %p77 = scmp.ne.s32.totalorder %s69, %s72
    %p78 = scmp.eq.s32.totalorder %s17, 0
    %p79 = por %p77, %p78
    %p80 = scmp.ne.s32.totalorder %s69, %s72
    %p81 = scmp.eq.s32.totalorder %s22, 1
    %p82 = por %p80, %p81
    %p83 = scmp.ne.s32.totalorder %s72, %s73
    %p84 = scmp.eq.s32.totalorder %s22, 0
    %p85 = por %p83, %p84
    %p86 = scmp.ne.s32.totalorder %s72, %s73
    %p87 = scmp.eq.s32.totalorder %s23, 1
    %p88 = por %p86, %p87
    %p90 = scmp.ne.s32.totalorder %s73, %s89
    %p91 = scmp.eq.s32.totalorder %s23, 0
    %p92 = por %p90, %p91
    %s93 = ssub.s32 %s17, %s24
    %p94 = scmp.eq.s32.totalorder %s93, 0
    %s96 = sadd.s32 %s95, 1
    %s97 = scalar_select %p94, %s95, %s96
    %p100 = pneg %p94
    %p101 = scmp.eq.s32.totalorder %s17, 1
    %p102 = por %p100, %p101
    %p103 = scmp.ne.s32.totalorder %s95, %s98
    %p104 = scmp.eq.s32.totalorder %s17, 0
    %p105 = por %p103, %p104
    %p106 = scmp.ne.s32.totalorder %s95, %s98
    %p107 = scmp.eq.s32.totalorder %s22, 1
    %p108 = por %p106, %p107
    %p109 = scmp.ne.s32.totalorder %s98, %s99
    %p110 = scmp.eq.s32.totalorder %s22, 0
    %p111 = por %p109, %p110
    %p112 = scmp.ne.s32.totalorder %s98, %s99
    %p113 = scmp.eq.s32.totalorder %s23, 1
    %p114 = por %p112, %p113
    %p116 = scmp.ne.s32.totalorder %s99, %s115
    %p117 = scmp.eq.s32.totalorder %s23, 0
    %p118 = por %p116, %p117
    %s119 = ssub.s32 %s17, %s24
    %p120 = scmp.eq.s32.totalorder %s119, 0
    %s122 = sadd.s32 %s121, 1
    %s123 = scalar_select %p120, %s121, %s122
    %p126 = pneg %p120
    %p127 = scmp.eq.s32.totalorder %s17, 1
    %p128 = por %p126, %p127
    %p129 = scmp.ne.s32.totalorder %s121, %s124
    %p130 = scmp.eq.s32.totalorder %s17, 0
    %p131 = por %p129, %p130
    %p132 = scmp.ne.s32.totalorder %s121, %s124
    %p133 = scmp.eq.s32.totalorder %s22, 1
    %p134 = por %p132, %p133
    %p135 = scmp.ne.s32.totalorder %s124, %s125
    %p136 = scmp.eq.s32.totalorder %s22, 0
    %p137 = por %p135, %p136
    %p138 = scmp.ne.s32.totalorder %s124, %s125
    %p139 = scmp.eq.s32.totalorder %s23, 1
    %p140 = por %p138, %p139
    %p142 = scmp.ne.s32.totalorder %s125, %s141
    %p143 = scmp.eq.s32.totalorder %s23, 0
    %p144 = por %p142, %p143
    %s145 = ssub.s32 %s17, %s24
    %p146 = scmp.eq.s32.totalorder %s145, 0
    %s148 = sadd.s32 %s147, 1
    %s149 = scalar_select %p146, %s147, %s148
    %p152 = pneg %p146
    %p153 = scmp.eq.s32.totalorder %s17, 1
    %p154 = por %p152, %p153
    %p155 = scmp.ne.s32.totalorder %s147, %s150
    %p156 = scmp.eq.s32.totalorder %s17, 0
    %p157 = por %p155, %p156
    %p158 = scmp.ne.s32.totalorder %s147, %s150
    %p159 = scmp.eq.s32.totalorder %s22, 1
    %p160 = por %p158, %p159
    %p161 = scmp.ne.s32.totalorder %s150, %s151
    %p162 = scmp.eq.s32.totalorder %s22, 0
    %p163 = por %p161, %p162
    %p164 = scmp.ne.s32.totalorder %s150, %s151
    %p165 = scmp.eq.s32.totalorder %s23, 1
    %p166 = por %p164, %p165
    %p168 = scmp.ne.s32.totalorder %s151, %s167
    %p169 = scmp.eq.s32.totalorder %s23, 0
    %p170 = por %p168, %p169
    %s171 = ssub.s32 %s17, %s24
    %p172 = scmp.eq.s32.totalorder %s171, 0
    %s174 = sadd.s32 %s173, 1
    %s175 = scalar_select %p172, %s173, %s174
    %p178 = pneg %p172
    %p179 = scmp.eq.s32.totalorder %s17, 1
    %p180 = por %p178, %p179
    %p181 = scmp.ne.s32.totalorder %s173, %s176
    %p182 = scmp.eq.s32.totalorder %s17, 0
    %p183 = por %p181, %p182
    %p184 = scmp.ne.s32.totalorder %s173, %s176
    %p185 = scmp.eq.s32.totalorder %s22, 1
    %p186 = por %p184, %p185
    %p187 = scmp.ne.s32.totalorder %s176, %s177
    %p188 = scmp.eq.s32.totalorder %s22, 0
    %p189 = por %p187, %p188
    %p190 = scmp.ne.s32.totalorder %s176, %s177
    %p191 = scmp.eq.s32.totalorder %s23, 1
    %p192 = por %p190, %p191
    %p194 = scmp.ne.s32.totalorder %s177, %s193
    %p195 = scmp.eq.s32.totalorder %s23, 0
    %p196 = por %p194, %p195
    %s197 = ssub.s32 %s17, %s24
    %p198 = scmp.eq.s32.totalorder %s197, 0
    %s200 = sadd.s32 %s199, 1
    %s201 = scalar_select %p198, %s199, %s200
    %p204 = pneg %p198
    %p205 = scmp.eq.s32.totalorder %s17, 1
    %p206 = por %p204, %p205
    %p207 = scmp.ne.s32.totalorder %s199, %s202
    %p208 = scmp.eq.s32.totalorder %s17, 0
    %p209 = por %p207, %p208
    %p210 = scmp.ne.s32.totalorder %s199, %s202
    %p211 = scmp.eq.s32.totalorder %s22, 1
    %p212 = por %p210, %p211
    %p213 = scmp.ne.s32.totalorder %s202, %s203
    %p214 = scmp.eq.s32.totalorder %s22, 0
    %p215 = por %p213, %p214
    %p216 = scmp.ne.s32.totalorder %s202, %s203
    %p217 = scmp.eq.s32.totalorder %s23, 1
    %p218 = por %p216, %p217
    %p220 = scmp.ne.s32.totalorder %s203, %s219
    %p221 = scmp.eq.s32.totalorder %s23, 0
    %p222 = por %p220, %p221
    %s224 = sadd.s32 %s223, 1
    %p227 = scmp.eq.s32.totalorder %s17, 1
    %p228 = scmp.ne.s32.totalorder %s223, %s225
    %p229 = scmp.eq.s32.totalorder %s17, 0
    %p230 = por %p228, %p229
    %p231 = scmp.ne.s32.totalorder %s223, %s225
    %p232 = scmp.eq.s32.totalorder %s22, 1
    %p233 = por %p231, %p232
    %p234 = scmp.ne.s32.totalorder %s225, %s226
    %p235 = scmp.eq.s32.totalorder %s22, 0
    %p236 = por %p234, %p235
    %p237 = scmp.ne.s32.totalorder %s225, %s226
    %p238 = scmp.eq.s32.totalorder %s23, 1
    %p239 = por %p237, %p238
    %p241 = scmp.ne.s32.totalorder %s226, %s240
    %p242 = scmp.eq.s32.totalorder %s23, 0
    %p243 = por %p241, %p242
    %s245 = sadd.s32 %s244, 1
    %p248 = scmp.eq.s32.totalorder %s17, 1
    %p249 = scmp.ne.s32.totalorder %s244, %s246
    %p250 = scmp.eq.s32.totalorder %s17, 0
    %p251 = por %p249, %p250
    %p252 = scmp.ne.s32.totalorder %s244, %s246
    %p253 = scmp.eq.s32.totalorder %s22, 1
    %p254 = por %p252, %p253
    %p255 = scmp.ne.s32.totalorder %s246, %s247
    %p256 = scmp.eq.s32.totalorder %s22, 0
    %p257 = por %p255, %p256
    %p258 = scmp.ne.s32.totalorder %s246, %s247
    %p259 = scmp.eq.s32.totalorder %s23, 1
    %p260 = por %p258, %p259
    %p262 = scmp.ne.s32.totalorder %s247, %s261
    %p263 = scmp.eq.s32.totalorder %s23, 0
    %p264 = por %p262, %p263
    %s266 = sadd.s32 %s265, 1
    %p269 = scmp.eq.s32.totalorder %s17, 1
    %p270 = scmp.ne.s32.totalorder %s265, %s267
    %p271 = scmp.eq.s32.totalorder %s17, 0
    %p272 = por %p270, %p271
    %p273 = scmp.ne.s32.totalorder %s265, %s267
    %p274 = scmp.eq.s32.totalorder %s22, 1
    %p275 = por %p273, %p274
    %p276 = scmp.ne.s32.totalorder %s267, %s268
    %p277 = scmp.eq.s32.totalorder %s22, 0
    %p278 = por %p276, %p277
    %p279 = scmp.ne.s32.totalorder %s267, %s268
    %p280 = scmp.eq.s32.totalorder %s23, 1
    %p281 = por %p279, %p280
    %p283 = scmp.ne.s32.totalorder %s268, %s282
    %p284 = scmp.eq.s32.totalorder %s23, 0
    %p285 = por %p283, %p284
    %s286 = ssub.s32 %s17, %s24
    %p287 = scmp.eq.s32.totalorder %s286, 0
    %s289 = sadd.s32 %s288, 1
    %s290 = scalar_select %p287, %s288, %s289
    %p293 = pneg %p287
    %p294 = scmp.eq.s32.totalorder %s17, 1
    %p295 = por %p293, %p294
    %p296 = scmp.ne.s32.totalorder %s288, %s291
    %p297 = scmp.eq.s32.totalorder %s17, 0
    %p298 = por %p296, %p297
    %p299 = scmp.ne.s32.totalorder %s288, %s291
    %p300 = scmp.eq.s32.totalorder %s22, 1
    %p301 = por %p299, %p300
    %p302 = scmp.ne.s32.totalorder %s291, %s292
    %p303 = scmp.eq.s32.totalorder %s22, 0
    %p304 = por %p302, %p303
    %p305 = scmp.ne.s32.totalorder %s291, %s292
    %p306 = scmp.eq.s32.totalorder %s23, 1
    %p307 = por %p305, %p306
    %p309 = scmp.ne.s32.totalorder %s292, %s308
    %p310 = scmp.eq.s32.totalorder %s23, 0
    %p311 = por %p309, %p310
    %p312 = scmp.le.s32.totalorder 1, %s17
    %p313 = scmp.lt.s32.totalorder %s17, 3
    %p314 = pnand %p312, %p313
    %p315 = pneg %p314
    // Predicated region
    $region9: #{rnd_forward.1} parent=5 // pred_check
      _
    $region10: #{rnd_forward.1} parent=5 // pred_check_branch
      %317 = sbr.rel (%p314) target = $region12
    $region11: #{rnd_forward.1} parent=5 // pred_region
      %s318 = ssub.s32 %s17, 1
      // Predicated region
      $region13: #{rnd_forward.1} parent=11 // pred_check
        %p319 = pneg %p38
      $region14: #{rnd_forward.1} parent=11 // pred_check_branch
        %321 = sbr.rel (%p319) target = $region16
      $region15: #{rnd_forward.1} parent=11 // pred_region
        _
      $region16: #{rnd_forward.1} parent=11 // pred_fallthru
        _
      // Predicated region
      $region17: #{rnd_forward.1} parent=11 // pred_check
        %p322 = pneg %p59
      $region18: #{rnd_forward.1} parent=11 // pred_check_branch
        %324 = sbr.rel (%p322) target = $region20
      $region19: #{rnd_forward.1} parent=11 // pred_region
        _
      $region20: #{rnd_forward.1} parent=11 // pred_fallthru
        _
      // Predicated region
      $region21: #{rnd_forward.1} parent=11 // pred_check
        %p325 = pneg %p236
      $region22: #{rnd_forward.1} parent=11 // pred_check_branch
        %327 = sbr.rel (%p325) target = $region24
      $region23: #{rnd_forward.1} parent=11 // pred_region
        _
      $region24: #{rnd_forward.1} parent=11 // pred_fallthru
        _
      // Predicated region
      $region25: #{rnd_forward.1} parent=11 // pred_check
        %p328 = pneg %p257
      $region26: #{rnd_forward.1} parent=11 // pred_check_branch
        %330 = sbr.rel (%p328) target = $region28
      $region27: #{rnd_forward.1} parent=11 // pred_region
        _
      $region28: #{rnd_forward.1} parent=11 // pred_fallthru
        _
      // Predicated region
      $region29: #{rnd_forward.1} parent=11 // pred_check
        %p331 = pneg %p278
      $region30: #{rnd_forward.1} parent=11 // pred_check_branch
        %333 = sbr.rel (%p331) target = $region32
      $region31: #{rnd_forward.1} parent=11 // pred_region
        _
      $region32: #{rnd_forward.1} parent=11 // pred_fallthru
        _
    $region12: #{rnd_forward.1} parent=5 // pred_fallthru
      _
    %p334 = scmp.lt.s32.totalorder %s17, 2
    // Predicated region
    $region33: #{rnd_forward.1} parent=5 // pred_check
      %p335 = pneg %p334
    $region34: #{rnd_forward.1} parent=5 // pred_check_branch
      %337 = sbr.rel (%p335) target = $region36
    $region35: #{rnd_forward.1} parent=5 // pred_region
      // Predicated region
      $region37: #{rnd_forward.1} parent=35 // pred_check
        %p338 = pneg %p79
      $region38: #{rnd_forward.1} parent=35 // pred_check_branch
        %340 = sbr.rel (%p338) target = $region40
      $region39: #{rnd_forward.1} parent=35 // pred_region
        %p341 = scmp.lt.s32.totalorder %s17, 1
        %s342 = scalar_select %p341, %s17, 1
        %s343 = smul.addr %s342, 4
        %s344 = smul.addr %s343, 8
        %s345 = scalar_lea.vmem %s2, %s344
      $region40: #{rnd_forward.1} parent=35 // pred_fallthru
        _
      // Predicated region
      $region41: #{rnd_forward.1} parent=35 // pred_check
        %p346 = pneg %p105
      $region42: #{rnd_forward.1} parent=35 // pred_check_branch
        %348 = sbr.rel (%p346) target = $region44
      $region43: #{rnd_forward.1} parent=35 // pred_region
        %p349 = scmp.lt.s32.totalorder %s17, 1
        %s350 = scalar_select %p349, %s17, 1
        %s351 = scalar_lea.vmem %s3, %s350
      $region44: #{rnd_forward.1} parent=35 // pred_fallthru
        _
      // Predicated region
      $region45: #{rnd_forward.1} parent=35 // pred_check
        %p352 = pneg %p131
      $region46: #{rnd_forward.1} parent=35 // pred_check_branch
        %354 = sbr.rel (%p352) target = $region48
      $region47: #{rnd_forward.1} parent=35 // pred_region
        %p355 = scmp.lt.s32.totalorder %s17, 1
        %s356 = scalar_select %p355, %s17, 1
        %s357 = smul.addr %s356, 4
        %s358 = smul.addr %s357, 8
        %s359 = scalar_lea.vmem %s4, %s358
      $region48: #{rnd_forward.1} parent=35 // pred_fallthru
        _
      // Predicated region
      $region49: #{rnd_forward.1} parent=35 // pred_check
        %p360 = pneg %p157
      $region50: #{rnd_forward.1} parent=35 // pred_check_branch
        %362 = sbr.rel (%p360) target = $region52
      $region51: #{rnd_forward.1} parent=35 // pred_region
        %p363 = scmp.lt.s32.totalorder %s17, 1
        %s364 = scalar_select %p363, %s17, 1
        %s365 = scalar_lea.vmem %s5, %s364
      $region52: #{rnd_forward.1} parent=35 // pred_fallthru
        _
      // Predicated region
      $region53: #{rnd_forward.1} parent=35 // pred_check
        %p366 = pneg %p183
      $region54: #{rnd_forward.1} parent=35 // pred_check_branch
        %368 = sbr.rel (%p366) target = $region56
      $region55: #{rnd_forward.1} parent=35 // pred_region
        %p369 = scmp.lt.s32.totalorder %s17, 1
        %s370 = scalar_select %p369, %s17, 1
        %s371 = scalar_lea.vmem %s6, %s370
      $region56: #{rnd_forward.1} parent=35 // pred_fallthru
        _
      // Predicated region
      $region57: #{rnd_forward.1} parent=35 // pred_check
        %p372 = pneg %p209
      $region58: #{rnd_forward.1} parent=35 // pred_check_branch
        %374 = sbr.rel (%p372) target = $region60
      $region59: #{rnd_forward.1} parent=35 // pred_region
        %p375 = scmp.lt.s32.totalorder %s17, 1
        %s376 = scalar_select %p375, %s17, 1
        %s377 = scalar_lea.vmem %s7, %s376
      $region60: #{rnd_forward.1} parent=35 // pred_fallthru
        _
    $region36: #{rnd_forward.1} parent=5 // pred_fallthru
      _
    %p378 = scmp.le.s32.totalorder 1, %s17
    %p379 = scmp.lt.s32.totalorder %s17, 3
    %p380 = pnand %p378, %p379
    %p381 = pneg %p380
    // Predicated region
    $region61: #{rnd_forward.1} parent=5 // pred_check
      _
    $region62: #{rnd_forward.1} parent=5 // pred_check_branch
      %383 = sbr.rel (%p380) target = $region64
    $region63: #{rnd_forward.1} parent=5 // pred_region
      %s384 = ssub.s32 %s17, 1
      %p385 = pneg %p38
      %p386 = pneg %p35
      %p387 = pneg %p59
      %p388 = pneg %p56
      %p389 = scmp.lt.s32.totalorder %s22, 1
      %s390 = scalar_select %p389, %s22, 1
      %s391 = smul.addr %s390, 4
      %s392 = smul.addr %s391, 8
      %s393 = scalar_lea.vmem %s2, %s392
      %p394 = pneg %p85
      %p395 = pneg %p82
      %p396 = scmp.lt.s32.totalorder %s22, 1
      %s397 = scalar_select %p396, %s22, 1
      %s398 = scalar_lea.vmem %s3, %s397
      %p399 = pneg %p111
      %p400 = pneg %p108
      %p401 = scmp.lt.s32.totalorder %s22, 1
      %s402 = scalar_select %p401, %s22, 1
      %s403 = smul.addr %s402, 4
      %s404 = smul.addr %s403, 8
      %s405 = scalar_lea.vmem %s4, %s404
      %p406 = pneg %p137
      %p407 = pneg %p134
      %p408 = scmp.lt.s32.totalorder %s22, 1
      %s409 = scalar_select %p408, %s22, 1
      %s410 = scalar_lea.vmem %s5, %s409
      %p411 = pneg %p163
      %p412 = pneg %p160
      %p413 = scmp.lt.s32.totalorder %s22, 1
      %s414 = scalar_select %p413, %s22, 1
      %s415 = scalar_lea.vmem %s6, %s414
      %p416 = pneg %p189
      %p417 = pneg %p186
      %p418 = scmp.lt.s32.totalorder %s22, 1
      %s419 = scalar_select %p418, %s22, 1
      %s420 = scalar_lea.vmem %s7, %s419
      %p421 = pneg %p215
      %p422 = pneg %p212
      %p423 = pneg %p236
      %p424 = pneg %p233
      %p425 = pneg %p257
      %p426 = pneg %p254
      %p427 = pneg %p278
      %p428 = pneg %p275
      %p429 = pneg %p304
      %p430 = pneg %p301
      %p431 = scmp.lt.s32.totalorder %s22, 1
      %s432 = scalar_select %p431, %s22, 1
      %s433 = smul.addr %s432, 4
      %s434 = smul.addr %s433, 2
      %s435 = scalar_lea.vmem %s11, %s434
      %p436 = scmp.lt.s32.totalorder %s22, 1
      %s437 = scalar_select %p436, %s22, 1
      %s438 = smul.addr %s437, 4
      %s439 = smul.addr %s438, 8
      %s440 = scalar_lea.vmem %s2, %s439
      %p441 = scmp.lt.s32.totalorder %s22, 1
      %s442 = scalar_select %p441, %s22, 1
      %s443 = scalar_lea.vmem %s3, %s442
      %p444 = scmp.lt.s32.totalorder %s22, 1
      %s445 = scalar_select %p444, %s22, 1
      %s446 = smul.addr %s445, 4
      %s447 = smul.addr %s446, 8
      %s448 = scalar_lea.vmem %s4, %s447
      %p449 = scmp.lt.s32.totalorder %s22, 1
      %s450 = scalar_select %p449, %s22, 1
      %s451 = scalar_lea.vmem %s5, %s450
      %p452 = scmp.lt.s32.totalorder %s22, 1
      %s453 = scalar_select %p452, %s22, 1
      %s454 = scalar_lea.vmem %s6, %s453
      %p455 = scmp.lt.s32.totalorder %s22, 1
      %s456 = scalar_select %p455, %s22, 1
      %s457 = scalar_lea.vmem %s7, %s456
      %p458 = scmp.lt.s32.totalorder %s22, 1
      %s459 = scalar_select %p458, %s22, 1
      %s460 = smul.addr %s459, 4
      %s461 = smul.addr %s460, 2
      %s462 = scalar_lea.vmem %s11, %s461
      %v463 = vld [vmem:[%s0] sm:$0xff]
      %v464 = vld [vmem:[%s0 + $0x8] sm:$0xff]
      %v465 = vld [vmem:[%s440] sm:$0xff]
      %v466 = vld [vmem:[%s440 + $0x8] sm:$0xff]
      %v467 = vld [vmem:[%s440 + $0x10] sm:$0xff]
      %v468 = vld [vmem:[%s440 + $0x18] sm:$0xff]
      %v469 = vld [vmem:[%s443] sm:$0x1]
      %v471 = vlaneseq
      %v472 = vshrl.u32 %v471, 7
      %v473 = vsub.s32 0, %v472
      %v474 = vrot.slane %v469, %v473
      %vm476 = vcmask 261120
      %v478 = vsel %vm476, %v463, 0
      %v481 = vsel %vm476, %v464, 0
      %483 = vmatprep.subr.mxu0 0.0
      %484 = vmatpush1.msra.mxu0 %v465
      %485 = vmatprep.subr.mxu0 0.0
      %486 = vmatpush1.msra.mxu0 %v466
      %487 = vmatprep.subr.mxu0 0.0
      %488 = vmatpush1.msra.mxu0 %v467
      %489 = vmatprep.subr.mxu0 0.0
      %490 = vmatpush1.msra.mxu0 %v468
      %491 = vmatprep.subr.mxu0 0.0
      %492 = vmatpush1.msra.mxu0 0.0
      %493 = vmatprep.subr.mxu0 0.0
      %494 = vmatpush1.msra.mxu0 0.0
      %495 = vmatprep.subr.mxu0 0.0
      %496 = vmatpush1.msra.mxu0 0.0
      %497 = vmatprep.subr.mxu0 0.0
      %498 = vmatpush1.msra.mxu0 0.0
      %499 = vmatprep.subr.mxu0 0.0
      %500 = vmatpush1.msra.mxu0 0.0
      %501 = vmatprep.subr.mxu0 0.0
      %502 = vmatpush1.msra.mxu0 0.0
      %503 = vmatprep.subr.mxu0 0.0
      %504 = vmatpush1.msra.mxu0 0.0
      %505 = vmatprep.subr.mxu0 0.0
      %506 = vmatpush1.msra.mxu0 0.0
      %507 = vmatprep.subr.mxu0 0.0
      %508 = vmatpush1.msra.mxu0 0.0
      %509 = vmatprep.subr.mxu0 0.0
      %510 = vmatpush1.msra.mxu0 0.0
      %511 = vmatprep.subr.mxu0 0.0
      %512 = vmatpush1.msra.mxu0 0.0
      %513 = vmatprep.subr.mxu0 0.0
      %514 = vmatpush1.msra.mxu0 0.0
      %515 = vmatprep.subr.mxu0 0.0
      %516 = vmatpush1.msra.mxu0 0.0
      %517 = vmatprep.subr.mxu0 0.0
      %518 = vmatpush1.msra.mxu0 0.0
      %519 = vmatprep.subr.mxu0 0.0
      %520 = vmatpush1.msra.mxu0 0.0
      %521 = vmatprep.subr.mxu0 0.0
      %522 = vmatpush1.msra.mxu0 0.0
      %523 = vmatprep.subr.mxu0 0.0
      %524 = vmatpush1.msra.mxu0 0.0
      %525 = vmatprep.subr.mxu0 0.0
      %526 = vmatpush1.msra.mxu0 0.0
      %527 = vmatprep.subr.mxu0 0.0
      %528 = vmatpush1.msra.mxu0 0.0
      %529 = vmatprep.subr.mxu0 0.0
      %530 = vmatpush1.msra.mxu0 0.0
      %531 = vmatprep.subr.mxu0 0.0
      %532 = vmatpush1.msra.mxu0 0.0
      %533 = vmatprep.subr.mxu0 0.0
      %534 = vmatpush1.msra.mxu0 0.0
      %535 = vmatprep.subr.mxu0 0.0
      %536 = vmatpush1.msra.mxu0 0.0
      %537 = vmatprep.subr.mxu0 0.0
      %538 = vmatpush1.msra.mxu0 0.0
      %539 = vmatprep.subr.mxu0 0.0
      %540 = vmatpush1.msra.mxu0 0.0
      %541 = vmatprep.subr.mxu0 0.0
      %542 = vmatpush1.msra.mxu0 0.0
      %543 = vmatprep.subr.mxu0 0.0
      %544 = vmatpush1.msra.mxu0 0.0
      %545 = vmatprep.subr.mxu0 0.0
      %546 = vmatpush1.msra.mxu0 0.0
      %547 = vmatprep.mubr.f32.mxu0 0.0
      %548 = vmatmul.mubr.f32.gmra.mrb[0].mxu0 %v478
      %v549 = vpop.f32.mrb[0].mxu0
      %v550 = vadd.f32 %v474, %v549
      %v551 = vpop.f32.mrb[0].mxu0
      %552 = vmatprep.mubr.f32.mxu0 0.0
      %553 = vmatmul.mubr.f32.gmra.mrb[0].mxu0 %v481
      %v554 = vpop.f32.mrb[0].mxu0
      %v555 = vadd.f32 %v474, %v554
      %v556 = vpop.f32.mrb[0].mxu0
      %557 = vdwg.mxu0
      %559 = vrot.lane.b32.xlu0 %v550, 120
      %v560 = vpop.permute.xlu0 %559
      %561 = vrot.lane.b32.xlu0 %v550, 112
      %v562 = vpop.permute.xlu0 %561
      %563 = vrot.lane.b32.xlu0 %v550, 104
      %v564 = vpop.permute.xlu0 %563
      %566 = vrot.lane.b32.xlu0 %v555, 120
      %v567 = vpop.permute.xlu0 %566
      %568 = vrot.lane.b32.xlu0 %v555, 112
      %v569 = vpop.permute.xlu0 %568
      %570 = vrot.lane.b32.xlu0 %v555, 104
      %v571 = vpop.permute.xlu0 %570
      %572 = vrot.lane.b32.xlu0 %v550, 96
      %v573 = vpop.permute.xlu0 %572
      %vm574 = vcmask 64512
      %v575 = vsel %vm574, %v550, 0
      %v577 = vsel %vm574, %v573, 0
      %579 = vmatprep.subr.mxu0 0.0
      %580 = vmatpush1.xpose.msra.mxu0 %v577
      %581 = vmatprep.subr.mxu0 0.0
      %582 = vmatpush1.xpose.msra.mxu0 0.0
      %583 = vmatprep.subr.mxu0 0.0
      %584 = vmatpush1.xpose.msra.mxu0 0.0
      %585 = vmatprep.subr.mxu0 0.0
      %586 = vmatpush1.xpose.msra.mxu0 0.0
      %587 = vmatprep.subr.mxu0 0.0
      %588 = vmatpush1.xpose.msra.mxu0 0.0
      %589 = vmatprep.subr.mxu0 0.0
      %590 = vmatpush1.xpose.msra.mxu0 0.0
      %591 = vmatprep.subr.mxu0 0.0
      %592 = vmatpush1.xpose.msra.mxu0 0.0
      %593 = vmatprep.subr.mxu0 0.0
      %594 = vmatpush1.xpose.msra.mxu0 0.0
      %595 = vmatprep.subr.mxu0 0.0
      %596 = vmatpush1.xpose.msra.mxu0 0.0
      %597 = vmatprep.subr.mxu0 0.0
      %598 = vmatpush1.xpose.msra.mxu0 0.0
      %599 = vmatprep.subr.mxu0 0.0
      %600 = vmatpush1.xpose.msra.mxu0 0.0
      %601 = vmatprep.subr.mxu0 0.0
      %602 = vmatpush1.xpose.msra.mxu0 0.0
      %603 = vmatprep.subr.mxu0 0.0
      %604 = vmatpush1.xpose.msra.mxu0 0.0
      %605 = vmatprep.subr.mxu0 0.0
      %606 = vmatpush1.xpose.msra.mxu0 0.0
      %607 = vmatprep.subr.mxu0 0.0
      %608 = vmatpush1.xpose.msra.mxu0 0.0
      %609 = vmatprep.subr.mxu0 0.0
      %610 = vmatpush1.xpose.msra.mxu0 0.0
      %611 = vmatprep.subr.mxu0 0.0
      %612 = vmatpush1.xpose.msra.mxu0 0.0
      %613 = vmatprep.subr.mxu0 0.0
      %614 = vmatpush1.xpose.msra.mxu0 0.0
      %615 = vmatprep.subr.mxu0 0.0
      %616 = vmatpush1.xpose.msra.mxu0 0.0
      %617 = vmatprep.subr.mxu0 0.0
      %618 = vmatpush1.xpose.msra.mxu0 0.0
      %619 = vmatprep.subr.mxu0 0.0
      %620 = vmatpush1.xpose.msra.mxu0 0.0
      %621 = vmatprep.subr.mxu0 0.0
      %622 = vmatpush1.xpose.msra.mxu0 0.0
      %623 = vmatprep.subr.mxu0 0.0
      %624 = vmatpush1.xpose.msra.mxu0 0.0
      %625 = vmatprep.subr.mxu0 0.0
      %626 = vmatpush1.xpose.msra.mxu0 0.0
      %627 = vmatprep.subr.mxu0 0.0
      %628 = vmatpush1.xpose.msra.mxu0 0.0
      %629 = vmatprep.subr.mxu0 0.0
      %630 = vmatpush1.xpose.msra.mxu0 0.0
      %631 = vmatprep.subr.mxu0 0.0
      %632 = vmatpush1.xpose.msra.mxu0 0.0
      %633 = vmatprep.subr.mxu0 0.0
      %634 = vmatpush1.xpose.msra.mxu0 0.0
      %635 = vmatprep.subr.mxu0 0.0
      %636 = vmatpush1.xpose.msra.mxu0 0.0
      %637 = vmatprep.subr.mxu0 0.0
      %638 = vmatpush1.xpose.msra.mxu0 0.0
      %639 = vmatprep.subr.mxu0 0.0
      %640 = vmatpush1.xpose.msra.mxu0 0.0
      %641 = vmatprep.subr.mxu0 0.0
      %642 = vmatpush1.xpose.msra.mxu0 0.0
      %643 = vmatprep.mubr.f32.mxu0 0.0
      %644 = vmatmul.mubr.f32.gmra.mrb[0].mxu0 %v575
      %v645 = vpop.f32.mrb[0].mxu0
      %v646 = vadd.f32 0.0, %v645
      %v647 = vpop.f32.mrb[0].mxu0
      %648 = vdwg.mxu0
      %649 = vrot.lane.b32.xlu0 %v560, 96
      %v650 = vpop.permute.xlu0 %649
      %v651 = vsel %vm574, %v560, 0
      %v653 = vsel %vm574, %v650, 0
      %655 = vmatprep.subr.mxu0 0.0
      %656 = vmatpush1.xpose.msra.mxu0 %v653
      %657 = vmatprep.subr.mxu0 0.0
      %658 = vmatpush1.xpose.msra.mxu0 0.0
      %659 = vmatprep.subr.mxu0 0.0
      %660 = vmatpush1.xpose.msra.mxu0 0.0
      %661 = vmatprep.subr.mxu0 0.0
      %662 = vmatpush1.xpose.msra.mxu0 0.0
      %663 = vmatprep.subr.mxu0 0.0
      %664 = vmatpush1.xpose.msra.mxu0 0.0
      %665 = vmatprep.subr.mxu0 0.0
      %666 = vmatpush1.xpose.msra.mxu0 0.0
      %667 = vmatprep.subr.mxu0 0.0
      %668 = vmatpush1.xpose.msra.mxu0 0.0
      %669 = vmatprep.subr.mxu0 0.0
      %670 = vmatpush1.xpose.msra.mxu0 0.0
      %671 = vmatprep.subr.mxu0 0.0
      %672 = vmatpush1.xpose.msra.mxu0 0.0
      %673 = vmatprep.subr.mxu0 0.0
      %674 = vmatpush1.xpose.msra.mxu0 0.0
      %675 = vmatprep.subr.mxu0 0.0
      %676 = vmatpush1.xpose.msra.mxu0 0.0
      %677 = vmatprep.subr.mxu0 0.0
      %678 = vmatpush1.xpose.msra.mxu0 0.0
      %679 = vmatprep.subr.mxu0 0.0
      %680 = vmatpush1.xpose.msra.mxu0 0.0
      %681 = vmatprep.subr.mxu0 0.0
      %682 = vmatpush1.xpose.msra.mxu0 0.0
      %683 = vmatprep.subr.mxu0 0.0
      %684 = vmatpush1.xpose.msra.mxu0 0.0
      %685 = vmatprep.subr.mxu0 0.0
      %686 = vmatpush1.xpose.msra.mxu0 0.0
      %687 = vmatprep.subr.mxu0 0.0
      %688 = vmatpush1.xpose.msra.mxu0 0.0
      %689 = vmatprep.subr.mxu0 0.0
      %690 = vmatpush1.xpose.msra.mxu0 0.0
      %691 = vmatprep.subr.mxu0 0.0
      %692 = vmatpush1.xpose.msra.mxu0 0.0
      %693 = vmatprep.subr.mxu0 0.0
      %694 = vmatpush1.xpose.msra.mxu0 0.0
      %695 = vmatprep.subr.mxu0 0.0
      %696 = vmatpush1.xpose.msra.mxu0 0.0
      %697 = vmatprep.subr.mxu0 0.0
      %698 = vmatpush1.xpose.msra.mxu0 0.0
      %699 = vmatprep.subr.mxu0 0.0
      %700 = vmatpush1.xpose.msra.mxu0 0.0
      %701 = vmatprep.subr.mxu0 0.0
      %702 = vmatpush1.xpose.msra.mxu0 0.0
      %703 = vmatprep.subr.mxu0 0.0
      %704 = vmatpush1.xpose.msra.mxu0 0.0
      %705 = vmatprep.subr.mxu0 0.0
      %706 = vmatpush1.xpose.msra.mxu0 0.0
      %707 = vmatprep.subr.mxu0 0.0
      %708 = vmatpush1.xpose.msra.mxu0 0.0
      %709 = vmatprep.subr.mxu0 0.0
      %710 = vmatpush1.xpose.msra.mxu0 0.0
      %711 = vmatprep.subr.mxu0 0.0
      %712 = vmatpush1.xpose.msra.mxu0 0.0
      %713 = vmatprep.subr.mxu0 0.0
      %714 = vmatpush1.xpose.msra.mxu0 0.0
      %715 = vmatprep.subr.mxu0 0.0
      %716 = vmatpush1.xpose.msra.mxu0 0.0
      %717 = vmatprep.subr.mxu0 0.0
      %718 = vmatpush1.xpose.msra.mxu0 0.0
      %719 = vmatprep.mubr.f32.mxu0 0.0
      %720 = vmatmul.mubr.f32.gmra.mrb[0].mxu0 %v651
      %v721 = vpop.f32.mrb[0].mxu0
      %v722 = vadd.f32 0.0, %v721
      %v723 = vpop.f32.mrb[0].mxu0
      %724 = vdwg.mxu0
      %725 = vrot.lane.b32.xlu0 %v562, 96
      %v726 = vpop.permute.xlu0 %725
      %v727 = vsel %vm574, %v562, 0
      %v729 = vsel %vm574, %v726, 0
      %731 = vmatprep.subr.mxu0 0.0
      %732 = vmatpush1.xpose.msra.mxu0 %v729
      %733 = vmatprep.subr.mxu0 0.0
      %734 = vmatpush1.xpose.msra.mxu0 0.0
      %735 = vmatprep.subr.mxu0 0.0
      %736 = vmatpush1.xpose.msra.mxu0 0.0
      %737 = vmatprep.subr.mxu0 0.0
      %738 = vmatpush1.xpose.msra.mxu0 0.0
      %739 = vmatprep.subr.mxu0 0.0
      %740 = vmatpush1.xpose.msra.mxu0 0.0
      %741 = vmatprep.subr.mxu0 0.0
      %742 = vmatpush1.xpose.msra.mxu0 0.0
      %743 = vmatprep.subr.mxu0 0.0
      %744 = vmatpush1.xpose.msra.mxu0 0.0
      %745 = vmatprep.subr.mxu0 0.0
      %746 = vmatpush1.xpose.msra.mxu0 0.0
      %747 = vmatprep.subr.mxu0 0.0
      %748 = vmatpush1.xpose.msra.mxu0 0.0
      %749 = vmatprep.subr.mxu0 0.0
      %750 = vmatpush1.xpose.msra.mxu0 0.0
      %751 = vmatprep.subr.mxu0 0.0
      %752 = vmatpush1.xpose.msra.mxu0 0.0
      %753 = vmatprep.subr.mxu0 0.0
      %754 = vmatpush1.xpose.msra.mxu0 0.0
      %755 = vmatprep.subr.mxu0 0.0
      %756 = vmatpush1.xpose.msra.mxu0 0.0
      %757 = vmatprep.subr.mxu0 0.0
      %758 = vmatpush1.xpose.msra.mxu0 0.0
      %759 = vmatprep.subr.mxu0 0.0
      %760 = vmatpush1.xpose.msra.mxu0 0.0
      %761 = vmatprep.subr.mxu0 0.0
      %762 = vmatpush1.xpose.msra.mxu0 0.0
      %763 = vmatprep.subr.mxu0 0.0
      %764 = vmatpush1.xpose.msra.mxu0 0.0
      %765 = vmatprep.subr.mxu0 0.0
      %766 = vmatpush1.xpose.msra.mxu0 0.0
      %767 = vmatprep.subr.mxu0 0.0
      %768 = vmatpush1.xpose.msra.mxu0 0.0
      %769 = vmatprep.subr.mxu0 0.0
      %770 = vmatpush1.xpose.msra.mxu0 0.0
      %771 = vmatprep.subr.mxu0 0.0
      %772 = vmatpush1.xpose.msra.mxu0 0.0
      %773 = vmatprep.subr.mxu0 0.0
      %774 = vmatpush1.xpose.msra.mxu0 0.0
      %775 = vmatprep.subr.mxu0 0.0
      %776 = vmatpush1.xpose.msra.mxu0 0.0
      %777 = vmatprep.subr.mxu0 0.0
      %778 = vmatpush1.xpose.msra.mxu0 0.0
      %779 = vmatprep.subr.mxu0 0.0
      %780 = vmatpush1.xpose.msra.mxu0 0.0
      %781 = vmatprep.subr.mxu0 0.0
      %782 = vmatpush1.xpose.msra.mxu0 0.0
      %783 = vmatprep.subr.mxu0 0.0
      %784 = vmatpush1.xpose.msra.mxu0 0.0
      %785 = vmatprep.subr.mxu0 0.0
      %786 = vmatpush1.xpose.msra.mxu0 0.0
      %787 = vmatprep.subr.mxu0 0.0
      %788 = vmatpush1.xpose.msra.mxu0 0.0
      %789 = vmatprep.subr.mxu0 0.0
      %790 = vmatpush1.xpose.msra.mxu0 0.0
      %791 = vmatprep.subr.mxu0 0.0
      %792 = vmatpush1.xpose.msra.mxu0 0.0
      %793 = vmatprep.subr.mxu0 0.0
      %794 = vmatpush1.xpose.msra.mxu0 0.0
      %795 = vmatprep.mubr.f32.mxu0 0.0
      %796 = vmatmul.mubr.f32.gmra.mrb[0].mxu0 %v727
      %v797 = vpop.f32.mrb[0].mxu0
      %v798 = vadd.f32 0.0, %v797
      %v799 = vpop.f32.mrb[0].mxu0
      %800 = vdwg.mxu0
      %801 = vrot.lane.b32.xlu0 %v564, 96
      %v802 = vpop.permute.xlu0 %801
      %v803 = vsel %vm574, %v564, 0
      %v805 = vsel %vm574, %v802, 0
      %807 = vmatprep.subr.mxu0 0.0
      %808 = vmatpush1.xpose.msra.mxu0 %v805
      %809 = vmatprep.subr.mxu0 0.0
      %810 = vmatpush1.xpose.msra.mxu0 0.0
      %811 = vmatprep.subr.mxu0 0.0
      %812 = vmatpush1.xpose.msra.mxu0 0.0
      %813 = vmatprep.subr.mxu0 0.0
      %814 = vmatpush1.xpose.msra.mxu0 0.0
      %815 = vmatprep.subr.mxu0 0.0
      %816 = vmatpush1.xpose.msra.mxu0 0.0
      %817 = vmatprep.subr.mxu0 0.0
      %818 = vmatpush1.xpose.msra.mxu0 0.0
      %819 = vmatprep.subr.mxu0 0.0
      %820 = vmatpush1.xpose.msra.mxu0 0.0
      %821 = vmatprep.subr.mxu0 0.0
      %822 = vmatpush1.xpose.msra.mxu0 0.0
      %823 = vmatprep.subr.mxu0 0.0
      %824 = vmatpush1.xpose.msra.mxu0 0.0
      %825 = vmatprep.subr.mxu0 0.0
      %826 = vmatpush1.xpose.msra.mxu0 0.0
      %827 = vmatprep.subr.mxu0 0.0
      %828 = vmatpush1.xpose.msra.mxu0 0.0
      %829 = vmatprep.subr.mxu0 0.0
      %830 = vmatpush1.xpose.msra.mxu0 0.0
      %831 = vmatprep.subr.mxu0 0.0
      %832 = vmatpush1.xpose.msra.mxu0 0.0
      %833 = vmatprep.subr.mxu0 0.0
      %834 = vmatpush1.xpose.msra.mxu0 0.0
      %835 = vmatprep.subr.mxu0 0.0
      %836 = vmatpush1.xpose.msra.mxu0 0.0
      %837 = vmatprep.subr.mxu0 0.0
      %838 = vmatpush1.xpose.msra.mxu0 0.0
      %839 = vmatprep.subr.mxu0 0.0
      %840 = vmatpush1.xpose.msra.mxu0 0.0
      %841 = vmatprep.subr.mxu0 0.0
      %842 = vmatpush1.xpose.msra.mxu0 0.0
      %843 = vmatprep.subr.mxu0 0.0
      %844 = vmatpush1.xpose.msra.mxu0 0.0
      %845 = vmatprep.subr.mxu0 0.0
      %846 = vmatpush1.xpose.msra.mxu0 0.0
      %847 = vmatprep.subr.mxu0 0.0
      %848 = vmatpush1.xpose.msra.mxu0 0.0
      %849 = vmatprep.subr.mxu0 0.0
      %850 = vmatpush1.xpose.msra.mxu0 0.0
      %851 = vmatprep.subr.mxu0 0.0
      %852 = vmatpush1.xpose.msra.mxu0 0.0
      %853 = vmatprep.subr.mxu0 0.0
      %854 = vmatpush1.xpose.msra.mxu0 0.0
      %855 = vmatprep.subr.mxu0 0.0
      %856 = vmatpush1.xpose.msra.mxu0 0.0
      %857 = vmatprep.subr.mxu0 0.0
      %858 = vmatpush1.xpose.msra.mxu0 0.0
      %859 = vmatprep.subr.mxu0 0.0
      %860 = vmatpush1.xpose.msra.mxu0 0.0
      %861 = vmatprep.subr.mxu0 0.0
      %862 = vmatpush1.xpose.msra.mxu0 0.0
      %863 = vmatprep.subr.mxu0 0.0
      %864 = vmatpush1.xpose.msra.mxu0 0.0
      %865 = vmatprep.subr.mxu0 0.0
      %866 = vmatpush1.xpose.msra.mxu0 0.0
      %867 = vmatprep.subr.mxu0 0.0
      %868 = vmatpush1.xpose.msra.mxu0 0.0
      %869 = vmatprep.subr.mxu0 0.0
      %870 = vmatpush1.xpose.msra.mxu0 0.0
      %871 = vmatprep.mubr.f32.mxu0 0.0
      %872 = vmatmul.mubr.f32.gmra.mrb[0].mxu0 %v803
      %v873 = vpop.f32.mrb[0].mxu0
      %v874 = vadd.f32 0.0, %v873
      %v875 = vpop.f32.mrb[0].mxu0
      %876 = vdwg.mxu0
      %877 = vrot.lane.b32.xlu0 %v555, 96
      %v878 = vpop.permute.xlu0 %877
      %v879 = vsel %vm574, %v555, 0
      %v881 = vsel %vm574, %v878, 0
      %883 = vmatprep.subr.mxu0 0.0
      %884 = vmatpush1.xpose.msra.mxu0 %v881
      %885 = vmatprep.subr.mxu0 0.0
      %886 = vmatpush1.xpose.msra.mxu0 0.0
      %887 = vmatprep.subr.mxu0 0.0
      %888 = vmatpush1.xpose.msra.mxu0 0.0
      %889 = vmatprep.subr.mxu0 0.0
      %890 = vmatpush1.xpose.msra.mxu0 0.0
      %891 = vmatprep.subr.mxu0 0.0
      %892 = vmatpush1.xpose.msra.mxu0 0.0
      %893 = vmatprep.subr.mxu0 0.0
      %894 = vmatpush1.xpose.msra.mxu0 0.0
      %895 = vmatprep.subr.mxu0 0.0
      %896 = vmatpush1.xpose.msra.mxu0 0.0
      %897 = vmatprep.subr.mxu0 0.0
      %898 = vmatpush1.xpose.msra.mxu0 0.0
      %899 = vmatprep.subr.mxu0 0.0
      %900 = vmatpush1.xpose.msra.mxu0 0.0
      %901 = vmatprep.subr.mxu0 0.0
      %902 = vmatpush1.xpose.msra.mxu0 0.0
      %903 = vmatprep.subr.mxu0 0.0
      %904 = vmatpush1.xpose.msra.mxu0 0.0
      %905 = vmatprep.subr.mxu0 0.0
      %906 = vmatpush1.xpose.msra.mxu0 0.0
      %907 = vmatprep.subr.mxu0 0.0
      %908 = vmatpush1.xpose.msra.mxu0 0.0
      %909 = vmatprep.subr.mxu0 0.0
      %910 = vmatpush1.xpose.msra.mxu0 0.0
      %911 = vmatprep.subr.mxu0 0.0
      %912 = vmatpush1.xpose.msra.mxu0 0.0
      %913 = vmatprep.subr.mxu0 0.0
      %914 = vmatpush1.xpose.msra.mxu0 0.0
      %915 = vmatprep.subr.mxu0 0.0
      %916 = vmatpush1.xpose.msra.mxu0 0.0
      %917 = vmatprep.subr.mxu0 0.0
      %918 = vmatpush1.xpose.msra.mxu0 0.0
      %919 = vmatprep.subr.mxu0 0.0
      %920 = vmatpush1.xpose.msra.mxu0 0.0
      %921 = vmatprep.subr.mxu0 0.0
      %922 = vmatpush1.xpose.msra.mxu0 0.0
      %923 = vmatprep.subr.mxu0 0.0
      %924 = vmatpush1.xpose.msra.mxu0 0.0
      %925 = vmatprep.subr.mxu0 0.0
      %926 = vmatpush1.xpose.msra.mxu0 0.0
      %927 = vmatprep.subr.mxu0 0.0
      %928 = vmatpush1.xpose.msra.mxu0 0.0
      %929 = vmatprep.subr.mxu0 0.0
      %930 = vmatpush1.xpose.msra.mxu0 0.0
      %931 = vmatprep.subr.mxu0 0.0
      %932 = vmatpush1.xpose.msra.mxu0 0.0
      %933 = vmatprep.subr.mxu0 0.0
      %934 = vmatpush1.xpose.msra.mxu0 0.0
      %935 = vmatprep.subr.mxu0 0.0
      %936 = vmatpush1.xpose.msra.mxu0 0.0
      %937 = vmatprep.subr.mxu0 0.0
      %938 = vmatpush1.xpose.msra.mxu0 0.0
      %939 = vmatprep.subr.mxu0 0.0
      %940 = vmatpush1.xpose.msra.mxu0 0.0
      %941 = vmatprep.subr.mxu0 0.0
      %942 = vmatpush1.xpose.msra.mxu0 0.0
      %943 = vmatprep.subr.mxu0 0.0
      %944 = vmatpush1.xpose.msra.mxu0 0.0
      %945 = vmatprep.subr.mxu0 0.0
      %946 = vmatpush1.xpose.msra.mxu0 0.0
      %947 = vmatprep.mubr.f32.mxu0 0.0
      %948 = vmatmul.mubr.f32.gmra.mrb[0].mxu0 %v879
      %v949 = vpop.f32.mrb[0].mxu0
      %v950 = vadd.f32 0.0, %v949
      %v951 = vpop.f32.mrb[0].mxu0
      %952 = vdwg.mxu0
      %953 = vrot.lane.b32.xlu0 %v567, 96
      %v954 = vpop.permute.xlu0 %953
      %v955 = vsel %vm574, %v567, 0
      %v957 = vsel %vm574, %v954, 0
      %959 = vmatprep.subr.mxu0 0.0
      %960 = vmatpush1.xpose.msra.mxu0 %v957
      %961 = vmatprep.subr.mxu0 0.0
      %962 = vmatpush1.xpose.msra.mxu0 0.0
      %963 = vmatprep.subr.mxu0 0.0
      %964 = vmatpush1.xpose.msra.mxu0 0.0
      %965 = vmatprep.subr.mxu0 0.0
      %966 = vmatpush1.xpose.msra.mxu0 0.0
      %967 = vmatprep.subr.mxu0 0.0
      %968 = vmatpush1.xpose.msra.mxu0 0.0
      %969 = vmatprep.subr.mxu0 0.0
      %970 = vmatpush1.xpose.msra.mxu0 0.0
      %971 = vmatprep.subr.mxu0 0.0
      %972 = vmatpush1.xpose.msra.mxu0 0.0
      %973 = vmatprep.subr.mxu0 0.0
      %974 = vmatpush1.xpose.msra.mxu0 0.0
      %975 = vmatprep.subr.mxu0 0.0
      %976 = vmatpush1.xpose.msra.mxu0 0.0
      %977 = vmatprep.subr.mxu0 0.0
      %978 = vmatpush1.xpose.msra.mxu0 0.0
      %979 = vmatprep.subr.mxu0 0.0
      %980 = vmatpush1.xpose.msra.mxu0 0.0
      %981 = vmatprep.subr.mxu0 0.0
      %982 = vmatpush1.xpose.msra.mxu0 0.0
      %983 = vmatprep.subr.mxu0 0.0
      %984 = vmatpush1.xpose.msra.mxu0 0.0
      %985 = vmatprep.subr.mxu0 0.0
      %986 = vmatpush1.xpose.msra.mxu0 0.0
      %987 = vmatprep.subr.mxu0 0.0
      %988 = vmatpush1.xpose.msra.mxu0 0.0
      %989 = vmatprep.subr.mxu0 0.0
      %990 = vmatpush1.xpose.msra.mxu0 0.0
      %991 = vmatprep.subr.mxu0 0.0
      %992 = vmatpush1.xpose.msra.mxu0 0.0
      %993 = vmatprep.subr.mxu0 0.0
      %994 = vmatpush1.xpose.msra.mxu0 0.0
      %995 = vmatprep.subr.mxu0 0.0
      %996 = vmatpush1.xpose.msra.mxu0 0.0
      %997 = vmatprep.subr.mxu0 0.0
      %998 = vmatpush1.xpose.msra.mxu0 0.0
      %999 = vmatprep.subr.mxu0 0.0
      %1000 = vmatpush1.xpose.msra.mxu0 0.0
      %1001 = vmatprep.subr.mxu0 0.0
      %1002 = vmatpush1.xpose.msra.mxu0 0.0
      %1003 = vmatprep.subr.mxu0 0.0
      %1004 = vmatpush1.xpose.msra.mxu0 0.0
      %1005 = vmatprep.subr.mxu0 0.0
      %1006 = vmatpush1.xpose.msra.mxu0 0.0
      %1007 = vmatprep.subr.mxu0 0.0
      %1008 = vmatpush1.xpose.msra.mxu0 0.0
      %1009 = vmatprep.subr.mxu0 0.0
      %1010 = vmatpush1.xpose.msra.mxu0 0.0
      %1011 = vmatprep.subr.mxu0 0.0
      %1012 = vmatpush1.xpose.msra.mxu0 0.0
      %1013 = vmatprep.subr.mxu0 0.0
      %1014 = vmatpush1.xpose.msra.mxu0 0.0
      %1015 = vmatprep.subr.mxu0 0.0
      %1016 = vmatpush1.xpose.msra.mxu0 0.0
      %1017 = vmatprep.subr.mxu0 0.0
      %1018 = vmatpush1.xpose.msra.mxu0 0.0
      %1019 = vmatprep.subr.mxu0 0.0
      %1020 = vmatpush1.xpose.msra.mxu0 0.0
      %1021 = vmatprep.subr.mxu0 0.0
      %1022 = vmatpush1.xpose.msra.mxu0 0.0
      %1023 = vmatprep.mubr.f32.mxu0 0.0
      %1024 = vmatmul.mubr.f32.gmra.mrb[0].mxu0 %v955
      %v1025 = vpop.f32.mrb[0].mxu0
      %v1026 = vadd.f32 0.0, %v1025
      %v1027 = vpop.f32.mrb[0].mxu0
      %1028 = vdwg.mxu0
      %1029 = vrot.lane.b32.xlu0 %v569, 96
      %v1030 = vpop.permute.xlu0 %1029
      %v1031 = vsel %vm574, %v569, 0
      %v1033 = vsel %vm574, %v1030, 0
      %1035 = vmatprep.subr.mxu0 0.0
      %1036 = vmatpush1.xpose.msra.mxu0 %v1033
      %1037 = vmatprep.subr.mxu0 0.0
      %1038 = vmatpush1.xpose.msra.mxu0 0.0
      %1039 = vmatprep.subr.mxu0 0.0
      %1040 = vmatpush1.xpose.msra.mxu0 0.0
      %1041 = vmatprep.subr.mxu0 0.0
      %1042 = vmatpush1.xpose.msra.mxu0 0.0
      %1043 = vmatprep.subr.mxu0 0.0
      %1044 = vmatpush1.xpose.msra.mxu0 0.0
      %1045 = vmatprep.subr.mxu0 0.0
      %1046 = vmatpush1.xpose.msra.mxu0 0.0
      %1047 = vmatprep.subr.mxu0 0.0
      %1048 = vmatpush1.xpose.msra.mxu0 0.0
      %1049 = vmatprep.subr.mxu0 0.0
      %1050 = vmatpush1.xpose.msra.mxu0 0.0
      %1051 = vmatprep.subr.mxu0 0.0
      %1052 = vmatpush1.xpose.msra.mxu0 0.0
      %1053 = vmatprep.subr.mxu0 0.0
      %1054 = vmatpush1.xpose.msra.mxu0 0.0
      %1055 = vmatprep.subr.mxu0 0.0
      %1056 = vmatpush1.xpose.msra.mxu0 0.0
      %1057 = vmatprep.subr.mxu0 0.0
      %1058 = vmatpush1.xpose.msra.mxu0 0.0
      %1059 = vmatprep.subr.mxu0 0.0
      %1060 = vmatpush1.xpose.msra.mxu0 0.0
      %1061 = vmatprep.subr.mxu0 0.0
      %1062 = vmatpush1.xpose.msra.mxu0 0.0
      %1063 = vmatprep.subr.mxu0 0.0
      %1064 = vmatpush1.xpose.msra.mxu0 0.0
      %1065 = vmatprep.subr.mxu0 0.0
      %1066 = vmatpush1.xpose.msra.mxu0 0.0
      %1067 = vmatprep.subr.mxu0 0.0
      %1068 = vmatpush1.xpose.msra.mxu0 0.0
      %1069 = vmatprep.subr.mxu0 0.0
      %1070 = vmatpush1.xpose.msra.mxu0 0.0
      %1071 = vmatprep.subr.mxu0 0.0
      %1072 = vmatpush1.xpose.msra.mxu0 0.0
      %1073 = vmatprep.subr.mxu0 0.0
      %1074 = vmatpush1.xpose.msra.mxu0 0.0
      %1075 = vmatprep.subr.mxu0 0.0
      %1076 = vmatpush1.xpose.msra.mxu0 0.0
      %1077 = vmatprep.subr.mxu0 0.0
      %1078 = vmatpush1.xpose.msra.mxu0 0.0
      %1079 = vmatprep.subr.mxu0 0.0
      %1080 = vmatpush1.xpose.msra.mxu0 0.0
      %1081 = vmatprep.subr.mxu0 0.0
      %1082 = vmatpush1.xpose.msra.mxu0 0.0
      %1083 = vmatprep.subr.mxu0 0.0
      %1084 = vmatpush1.xpose.msra.mxu0 0.0
      %1085 = vmatprep.subr.mxu0 0.0
      %1086 = vmatpush1.xpose.msra.mxu0 0.0
      %1087 = vmatprep.subr.mxu0 0.0
      %1088 = vmatpush1.xpose.msra.mxu0 0.0
      %1089 = vmatprep.subr.mxu0 0.0
      %1090 = vmatpush1.xpose.msra.mxu0 0.0
      %1091 = vmatprep.subr.mxu0 0.0
      %1092 = vmatpush1.xpose.msra.mxu0 0.0
      %1093 = vmatprep.subr.mxu0 0.0
      %1094 = vmatpush1.xpose.msra.mxu0 0.0
      %1095 = vmatprep.subr.mxu0 0.0
      %1096 = vmatpush1.xpose.msra.mxu0 0.0
      %1097 = vmatprep.subr.mxu0 0.0
      %1098 = vmatpush1.xpose.msra.mxu0 0.0
      %1099 = vmatprep.mubr.f32.mxu0 0.0
      %1100 = vmatmul.mubr.f32.gmra.mrb[0].mxu0 %v1031
      %v1101 = vpop.f32.mrb[0].mxu0
      %v1102 = vadd.f32 0.0, %v1101
      %v1103 = vpop.f32.mrb[0].mxu0
      %1104 = vdwg.mxu0
      %1105 = vrot.lane.b32.xlu0 %v571, 96
      %v1106 = vpop.permute.xlu0 %1105
      %v1107 = vsel %vm574, %v571, 0
      %v1109 = vsel %vm574, %v1106, 0
      %1111 = vmatprep.subr.mxu0 0.0
      %1112 = vmatpush1.xpose.msra.mxu0 %v1109
      %1113 = vmatprep.subr.mxu0 0.0
      %1114 = vmatpush1.xpose.msra.mxu0 0.0
      %1115 = vmatprep.subr.mxu0 0.0
      %1116 = vmatpush1.xpose.msra.mxu0 0.0
      %1117 = vmatprep.subr.mxu0 0.0
      %1118 = vmatpush1.xpose.msra.mxu0 0.0
      %1119 = vmatprep.subr.mxu0 0.0
      %1120 = vmatpush1.xpose.msra.mxu0 0.0
      %1121 = vmatprep.subr.mxu0 0.0
      %1122 = vmatpush1.xpose.msra.mxu0 0.0
      %1123 = vmatprep.subr.mxu0 0.0
      %1124 = vmatpush1.xpose.msra.mxu0 0.0
      %1125 = vmatprep.subr.mxu0 0.0
      %1126 = vmatpush1.xpose.msra.mxu0 0.0
      %1127 = vmatprep.subr.mxu0 0.0
      %1128 = vmatpush1.xpose.msra.mxu0 0.0
      %1129 = vmatprep.subr.mxu0 0.0
      %1130 = vmatpush1.xpose.msra.mxu0 0.0
      %1131 = vmatprep.subr.mxu0 0.0
      %1132 = vmatpush1.xpose.msra.mxu0 0.0
      %1133 = vmatprep.subr.mxu0 0.0
      %1134 = vmatpush1.xpose.msra.mxu0 0.0
      %1135 = vmatprep.subr.mxu0 0.0
      %1136 = vmatpush1.xpose.msra.mxu0 0.0
      %1137 = vmatprep.subr.mxu0 0.0
      %1138 = vmatpush1.xpose.msra.mxu0 0.0
      %1139 = vmatprep.subr.mxu0 0.0
      %1140 = vmatpush1.xpose.msra.mxu0 0.0
      %1141 = vmatprep.subr.mxu0 0.0
      %1142 = vmatpush1.xpose.msra.mxu0 0.0
      %1143 = vmatprep.subr.mxu0 0.0
      %1144 = vmatpush1.xpose.msra.mxu0 0.0
      %1145 = vmatprep.subr.mxu0 0.0
      %1146 = vmatpush1.xpose.msra.mxu0 0.0
      %1147 = vmatprep.subr.mxu0 0.0
      %1148 = vmatpush1.xpose.msra.mxu0 0.0
      %1149 = vmatprep.subr.mxu0 0.0
      %1150 = vmatpush1.xpose.msra.mxu0 0.0
      %1151 = vmatprep.subr.mxu0 0.0
      %1152 = vmatpush1.xpose.msra.mxu0 0.0
      %1153 = vmatprep.subr.mxu0 0.0
      %1154 = vmatpush1.xpose.msra.mxu0 0.0
      %1155 = vmatprep.subr.mxu0 0.0
      %1156 = vmatpush1.xpose.msra.mxu0 0.0
      %1157 = vmatprep.subr.mxu0 0.0
      %1158 = vmatpush1.xpose.msra.mxu0 0.0
      %1159 = vmatprep.subr.mxu0 0.0
      %1160 = vmatpush1.xpose.msra.mxu0 0.0
      %1161 = vmatprep.subr.mxu0 0.0
      %1162 = vmatpush1.xpose.msra.mxu0 0.0
      %1163 = vmatprep.subr.mxu0 0.0
      %1164 = vmatpush1.xpose.msra.mxu0 0.0
      %1165 = vmatprep.subr.mxu0 0.0
      %1166 = vmatpush1.xpose.msra.mxu0 0.0
      %1167 = vmatprep.subr.mxu0 0.0
      %1168 = vmatpush1.xpose.msra.mxu0 0.0
      %1169 = vmatprep.subr.mxu0 0.0
      %1170 = vmatpush1.xpose.msra.mxu0 0.0
      %1171 = vmatprep.subr.mxu0 0.0
      %1172 = vmatpush1.xpose.msra.mxu0 0.0
      %1173 = vmatprep.subr.mxu0 0.0
      %1174 = vmatpush1.xpose.msra.mxu0 0.0
      %1175 = vmatprep.mubr.f32.mxu0 0.0
      %1176 = vmatmul.mubr.f32.gmra.mrb[0].mxu0 %v1107
      %v1177 = vpop.f32.mrb[0].mxu0
      %v1178 = vadd.f32 0.0, %v1177
      %v1179 = vpop.f32.mrb[0].mxu0
      %1180 = vdwg.mxu0
      %v1181 = vmul.f32 %v646, 0.35355338
      %v1182 = vmul.f32 %v722, 0.35355338
      %v1183 = vmul.f32 %v798, 0.35355338
      %v1184 = vmul.f32 %v874, 0.35355338
      %v1185 = vmul.f32 %v950, 0.35355338
      %v1186 = vmul.f32 %v1026, 0.35355338
      %v1187 = vmul.f32 %v1102, 0.35355338
      %v1188 = vmul.f32 %v1178, 0.35355338
      %v1189 = vsel %vm574, %v1181, -inf
      %1190 = vmax.xlane.f32.xlu0 %v1189
      %v1191 = vpop.xlane.xlu0 %1190
      %v1192 = vsel %vm574, %v1182, -inf
      %1193 = vmax.xlane.f32.xlu0 %v1192
      %v1194 = vpop.xlane.xlu0 %1193
      %v1195 = vsel %vm574, %v1183, -inf
      %1196 = vmax.xlane.f32.xlu0 %v1195
      %v1197 = vpop.xlane.xlu0 %1196
      %v1198 = vsel %vm574, %v1184, -inf
      %1199 = vmax.xlane.f32.xlu0 %v1198
      %v1200 = vpop.xlane.xlu0 %1199
      %v1201 = vsel %vm574, %v1185, -inf
      %1202 = vmax.xlane.f32.xlu0 %v1201
      %v1203 = vpop.xlane.xlu0 %1202
      %v1204 = vsel %vm574, %v1186, -inf
      %1205 = vmax.xlane.f32.xlu0 %v1204
      %v1206 = vpop.xlane.xlu0 %1205
      %v1207 = vsel %vm574, %v1187, -inf
      %1208 = vmax.xlane.f32.xlu0 %v1207
      %v1209 = vpop.xlane.xlu0 %1208
      %v1210 = vsel %vm574, %v1188, -inf
      %1211 = vmax.xlane.f32.xlu0 %v1210
      %v1212 = vpop.xlane.xlu0 %1211
      %v1213 = vsub.f32 %v1181, %v1191
      %v1214 = vsub.f32 %v1182, %v1194
      %v1215 = vsub.f32 %v1183, %v1197
      %v1216 = vsub.f32 %v1184, %v1200
      %v1217 = vsub.f32 %v1185, %v1203
      %v1218 = vsub.f32 %v1186, %v1206
      %v1219 = vsub.f32 %v1187, %v1209
      %v1220 = vsub.f32 %v1188, %v1212
      %v1221 = vmul.f32 %v1213, 1.442695
      %v1222 = vpow.pop %v1221
      %v1223 = vmul.f32 %v1214, 1.442695
      %v1224 = vpow.pop %v1223
      %v1225 = vmul.f32 %v1215, 1.442695
      %v1226 = vpow.pop %v1225
      %v1227 = vmul.f32 %v1216, 1.442695
      %v1228 = vpow.pop %v1227
      %v1229 = vmul.f32 %v1217, 1.442695
      %v1230 = vpow.pop %v1229
      %v1231 = vmul.f32 %v1218, 1.442695
      %v1232 = vpow.pop %v1231
      %v1233 = vmul.f32 %v1219, 1.442695
      %v1234 = vpow.pop %v1233
      %v1235 = vmul.f32 %v1220, 1.442695
      %v1236 = vpow.pop %v1235
      %v1237 = vsel %vm574, %v1222, 0.0
      %1238 = vadd.xlane.f32.xlu0 %v1237
      %v1239 = vpop.xlane.xlu0 %1238
      %v1240 = vsel %vm574, %v1224, 0.0
      %1241 = vadd.xlane.f32.xlu0 %v1240
      %v1242 = vpop.xlane.xlu0 %1241
      %v1243 = vsel %vm574, %v1226, 0.0
      %1244 = vadd.xlane.f32.xlu0 %v1243
      %v1245 = vpop.xlane.xlu0 %1244
      %v1246 = vsel %vm574, %v1228, 0.0
      %1247 = vadd.xlane.f32.xlu0 %v1246
      %v1248 = vpop.xlane.xlu0 %1247
      %v1249 = vsel %vm574, %v1230, 0.0
      %1250 = vadd.xlane.f32.xlu0 %v1249
      %v1251 = vpop.xlane.xlu0 %1250
      %v1252 = vsel %vm574, %v1232, 0.0
      %1253 = vadd.xlane.f32.xlu0 %v1252
      %v1254 = vpop.xlane.xlu0 %1253
      %v1255 = vsel %vm574, %v1234, 0.0
      %1256 = vadd.xlane.f32.xlu0 %v1255
      %v1257 = vpop.xlane.xlu0 %1256
      %v1258 = vsel %vm574, %v1236, 0.0
      %1259 = vadd.xlane.f32.xlu0 %v1258
      %v1260 = vpop.xlane.xlu0 %1259
      %v1261 = vrcp.pop %v1239
      %v1262 = vrcp.pop %v1242
      %v1263 = vrcp.pop %v1245
      %v1264 = vrcp.pop %v1248
      %v1265 = vrcp.pop %v1251
      %v1266 = vrcp.pop %v1254
      %v1267 = vrcp.pop %v1257
      %v1268 = vrcp.pop %v1260
      %v1269 = vmul.f32 %v1222, %v1261
      %v1270 = vmul.f32 %v1224, %v1262
      %v1271 = vmul.f32 %v1226, %v1263
      %v1272 = vmul.f32 %v1228, %v1264
      %v1273 = vmul.f32 %v1230, %v1265
      %v1274 = vmul.f32 %v1232, %v1266
      %v1275 = vmul.f32 %v1234, %v1267
      %v1276 = vmul.f32 %v1236, %v1268
      %1277 = vrot.lane.b32.xlu0 %v550, 64
      %v1278 = vpop.permute.xlu0 %1277
      %v1281 = vsel %vm574, %v1269, 0
      %1283 = vmatprep.subr.mxu0 0.0
      %1284 = vmatpush1.msra.mxu0 %v1278
      %1285 = vmatprep.subr.mxu0 0.0
      %1286 = vmatpush1.msra.mxu0 0.0
      %1287 = vmatprep.subr.mxu0 0.0
      %1288 = vmatpush1.msra.mxu0 0.0
      %1289 = vmatprep.subr.mxu0 0.0
      %1290 = vmatpush1.msra.mxu0 0.0
      %1291 = vmatprep.subr.mxu0 0.0
      %1292 = vmatpush1.msra.mxu0 0.0
      %1293 = vmatprep.subr.mxu0 0.0
      %1294 = vmatpush1.msra.mxu0 0.0
      %1295 = vmatprep.subr.mxu0 0.0
      %1296 = vmatpush1.msra.mxu0 0.0
      %1297 = vmatprep.subr.mxu0 0.0
      %1298 = vmatpush1.msra.mxu0 0.0
      %1299 = vmatprep.subr.mxu0 0.0
      %1300 = vmatpush1.msra.mxu0 0.0
      %1301 = vmatprep.subr.mxu0 0.0
      %1302 = vmatpush1.msra.mxu0 0.0
      %1303 = vmatprep.subr.mxu0 0.0
      %1304 = vmatpush1.msra.mxu0 0.0
      %1305 = vmatprep.subr.mxu0 0.0
      %1306 = vmatpush1.msra.mxu0 0.0
      %1307 = vmatprep.subr.mxu0 0.0
      %1308 = vmatpush1.msra.mxu0 0.0
      %1309 = vmatprep.subr.mxu0 0.0
      %1310 = vmatpush1.msra.mxu0 0.0
      %1311 = vmatprep.subr.mxu0 0.0
      %1312 = vmatpush1.msra.mxu0 0.0
      %1313 = vmatprep.subr.mxu0 0.0
      %1314 = vmatpush1.msra.mxu0 0.0
      %1315 = vmatprep.subr.mxu0 0.0
      %1316 = vmatpush1.msra.mxu0 0.0
      %1317 = vmatprep.subr.mxu0 0.0
      %1318 = vmatpush1.msra.mxu0 0.0
      %1319 = vmatprep.subr.mxu0 0.0
      %1320 = vmatpush1.msra.mxu0 0.0
      %1321 = vmatprep.subr.mxu0 0.0
      %1322 = vmatpush1.msra.mxu0 0.0
      %1323 = vmatprep.subr.mxu0 0.0
      %1324 = vmatpush1.msra.mxu0 0.0
      %1325 = vmatprep.subr.mxu0 0.0
      %1326 = vmatpush1.msra.mxu0 0.0
      %1327 = vmatprep.subr.mxu0 0.0
      %1328 = vmatpush1.msra.mxu0 0.0
      %1329 = vmatprep.subr.mxu0 0.0
      %1330 = vmatpush1.msra.mxu0 0.0
      %1331 = vmatprep.subr.mxu0 0.0
      %1332 = vmatpush1.msra.mxu0 0.0
      %1333 = vmatprep.subr.mxu0 0.0
      %1334 = vmatpush1.msra.mxu0 0.0
      %1335 = vmatprep.subr.mxu0 0.0
      %1336 = vmatpush1.msra.mxu0 0.0
      %1337 = vmatprep.subr.mxu0 0.0
      %1338 = vmatpush1.msra.mxu0 0.0
      %1339 = vmatprep.subr.mxu0 0.0
      %1340 = vmatpush1.msra.mxu0 0.0
      %1341 = vmatprep.subr.mxu0 0.0
      %1342 = vmatpush1.msra.mxu0 0.0
      %1343 = vmatprep.subr.mxu0 0.0
      %1344 = vmatpush1.msra.mxu0 0.0
      %1345 = vmatprep.subr.mxu0 0.0
      %1346 = vmatpush1.msra.mxu0 0.0
      %1347 = vmatprep.mubr.f32.mxu0 0.0
      %1348 = vmatmul.mubr.f32.gmra.mrb[0].mxu0 %v1281
      %v1349 = vpop.f32.mrb[0].mxu0
      %v1350 = vadd.f32 0.0, %v1349
      %v1351 = vpop.f32.mrb[0].mxu0
      %1352 = vdwg.mxu0
      %1353 = vrot.lane.b32.xlu0 %v560, 64
      %v1354 = vpop.permute.xlu0 %1353
      %v1357 = vsel %vm574, %v1270, 0
      %1359 = vmatprep.subr.mxu0 0.0
      %1360 = vmatpush1.msra.mxu0 %v1354
      %1361 = vmatprep.subr.mxu0 0.0
      %1362 = vmatpush1.msra.mxu0 0.0
      %1363 = vmatprep.subr.mxu0 0.0
      %1364 = vmatpush1.msra.mxu0 0.0
      %1365 = vmatprep.subr.mxu0 0.0
      %1366 = vmatpush1.msra.mxu0 0.0
      %1367 = vmatprep.subr.mxu0 0.0
      %1368 = vmatpush1.msra.mxu0 0.0
      %1369 = vmatprep.subr.mxu0 0.0
      %1370 = vmatpush1.msra.mxu0 0.0
      %1371 = vmatprep.subr.mxu0 0.0
      %1372 = vmatpush1.msra.mxu0 0.0
      %1373 = vmatprep.subr.mxu0 0.0
      %1374 = vmatpush1.msra.mxu0 0.0
      %1375 = vmatprep.subr.mxu0 0.0
      %1376 = vmatpush1.msra.mxu0 0.0
      %1377 = vmatprep.subr.mxu0 0.0
      %1378 = vmatpush1.msra.mxu0 0.0
      %1379 = vmatprep.subr.mxu0 0.0
      %1380 = vmatpush1.msra.mxu0 0.0
      %1381 = vmatprep.subr.mxu0 0.0
      %1382 = vmatpush1.msra.mxu0 0.0
      %1383 = vmatprep.subr.mxu0 0.0
      %1384 = vmatpush1.msra.mxu0 0.0
      %1385 = vmatprep.subr.mxu0 0.0
      %1386 = vmatpush1.msra.mxu0 0.0
      %1387 = vmatprep.subr.mxu0 0.0
      %1388 = vmatpush1.msra.mxu0 0.0
      %1389 = vmatprep.subr.mxu0 0.0
      %1390 = vmatpush1.msra.mxu0 0.0
      %1391 = vmatprep.subr.mxu0 0.0
      %1392 = vmatpush1.msra.mxu0 0.0
      %1393 = vmatprep.subr.mxu0 0.0
      %1394 = vmatpush1.msra.mxu0 0.0
      %1395 = vmatprep.subr.mxu0 0.0
      %1396 = vmatpush1.msra.mxu0 0.0
      %1397 = vmatprep.subr.mxu0 0.0
      %1398 = vmatpush1.msra.mxu0 0.0
      %1399 = vmatprep.subr.mxu0 0.0
      %1400 = vmatpush1.msra.mxu0 0.0
      %1401 = vmatprep.subr.mxu0 0.0
      %1402 = vmatpush1.msra.mxu0 0.0
      %1403 = vmatprep.subr.mxu0 0.0
      %1404 = vmatpush1.msra.mxu0 0.0
      %1405 = vmatprep.subr.mxu0 0.0
      %1406 = vmatpush1.msra.mxu0 0.0
      %1407 = vmatprep.subr.mxu0 0.0
      %1408 = vmatpush1.msra.mxu0 0.0
      %1409 = vmatprep.subr.mxu0 0.0
      %1410 = vmatpush1.msra.mxu0 0.0
      %1411 = vmatprep.subr.mxu0 0.0
      %1412 = vmatpush1.msra.mxu0 0.0
      %1413 = vmatprep.subr.mxu0 0.0
      %1414 = vmatpush1.msra.mxu0 0.0
      %1415 = vmatprep.subr.mxu0 0.0
      %1416 = vmatpush1.msra.mxu0 0.0
      %1417 = vmatprep.subr.mxu0 0.0
      %1418 = vmatpush1.msra.mxu0 0.0
      %1419 = vmatprep.subr.mxu0 0.0
      %1420 = vmatpush1.msra.mxu0 0.0
      %1421 = vmatprep.subr.mxu0 0.0
      %1422 = vmatpush1.msra.mxu0 0.0
      %1423 = vmatprep.mubr.f32.mxu0 0.0
      %1424 = vmatmul.mubr.f32.gmra.mrb[0].mxu0 %v1357
      %v1425 = vpop.f32.mrb[0].mxu0
      %v1426 = vadd.f32 0.0, %v1425
      %v1427 = vpop.f32.mrb[0].mxu0
      %1428 = vdwg.mxu0
      %1429 = vrot.lane.b32.xlu0 %v562, 64
      %v1430 = vpop.permute.xlu0 %1429
      %v1433 = vsel %vm574, %v1271, 0
      %1435 = vmatprep.subr.mxu0 0.0
      %1436 = vmatpush1.msra.mxu0 %v1430
      %1437 = vmatprep.subr.mxu0 0.0
      %1438 = vmatpush1.msra.mxu0 0.0
      %1439 = vmatprep.subr.mxu0 0.0
      %1440 = vmatpush1.msra.mxu0 0.0
      %1441 = vmatprep.subr.mxu0 0.0
      %1442 = vmatpush1.msra.mxu0 0.0
      %1443 = vmatprep.subr.mxu0 0.0
      %1444 = vmatpush1.msra.mxu0 0.0
      %1445 = vmatprep.subr.mxu0 0.0
      %1446 = vmatpush1.msra.mxu0 0.0
      %1447 = vmatprep.subr.mxu0 0.0
      %1448 = vmatpush1.msra.mxu0 0.0
      %1449 = vmatprep.subr.mxu0 0.0
      %1450 = vmatpush1.msra.mxu0 0.0
      %1451 = vmatprep.subr.mxu0 0.0
      %1452 = vmatpush1.msra.mxu0 0.0
      %1453 = vmatprep.subr.mxu0 0.0
      %1454 = vmatpush1.msra.mxu0 0.0
      %1455 = vmatprep.subr.mxu0 0.0
      %1456 = vmatpush1.msra.mxu0 0.0
      %1457 = vmatprep.subr.mxu0 0.0
      %1458 = vmatpush1.msra.mxu0 0.0
      %1459 = vmatprep.subr.mxu0 0.0
      %1460 = vmatpush1.msra.mxu0 0.0
      %1461 = vmatprep.subr.mxu0 0.0
      %1462 = vmatpush1.msra.mxu0 0.0
      %1463 = vmatprep.subr.mxu0 0.0
      %1464 = vmatpush1.msra.mxu0 0.0
      %1465 = vmatprep.subr.mxu0 0.0
      %1466 = vmatpush1.msra.mxu0 0.0
      %1467 = vmatprep.subr.mxu0 0.0
      %1468 = vmatpush1.msra.mxu0 0.0
      %1469 = vmatprep.subr.mxu0 0.0
      %1470 = vmatpush1.msra.mxu0 0.0
      %1471 = vmatprep.subr.mxu0 0.0
      %1472 = vmatpush1.msra.mxu0 0.0
      %1473 = vmatprep.subr.mxu0 0.0
      %1474 = vmatpush1.msra.mxu0 0.0
      %1475 = vmatprep.subr.mxu0 0.0
      %1476 = vmatpush1.msra.mxu0 0.0
      %1477 = vmatprep.subr.mxu0 0.0
      %1478 = vmatpush1.msra.mxu0 0.0
      %1479 = vmatprep.subr.mxu0 0.0
      %1480 = vmatpush1.msra.mxu0 0.0
      %1481 = vmatprep.subr.mxu0 0.0
      %1482 = vmatpush1.msra.mxu0 0.0
      %1483 = vmatprep.subr.mxu0 0.0
      %1484 = vmatpush1.msra.mxu0 0.0
      %1485 = vmatprep.subr.mxu0 0.0
      %1486 = vmatpush1.msra.mxu0 0.0
      %1487 = vmatprep.subr.mxu0 0.0
      %1488 = vmatpush1.msra.mxu0 0.0
      %1489 = vmatprep.subr.mxu0 0.0
      %1490 = vmatpush1.msra.mxu0 0.0
      %1491 = vmatprep.subr.mxu0 0.0
      %1492 = vmatpush1.msra.mxu0 0.0
      %1493 = vmatprep.subr.mxu0 0.0
      %1494 = vmatpush1.msra.mxu0 0.0
      %1495 = vmatprep.subr.mxu0 0.0
      %1496 = vmatpush1.msra.mxu0 0.0
      %1497 = vmatprep.subr.mxu0 0.0
      %1498 = vmatpush1.msra.mxu0 0.0
      %1499 = vmatprep.mubr.f32.mxu0 0.0
      %1500 = vmatmul.mubr.f32.gmra.mrb[0].mxu0 %v1433
      %v1501 = vpop.f32.mrb[0].mxu0
      %v1502 = vadd.f32 0.0, %v1501
      %v1503 = vpop.f32.mrb[0].mxu0
      %1504 = vdwg.mxu0
      %1505 = vrot.lane.b32.xlu0 %v564, 64
      %v1506 = vpop.permute.xlu0 %1505
      %v1509 = vsel %vm574, %v1272, 0
      %1511 = vmatprep.subr.mxu0 0.0
      %1512 = vmatpush1.msra.mxu0 %v1506
      %1513 = vmatprep.subr.mxu0 0.0
      %1514 = vmatpush1.msra.mxu0 0.0
      %1515 = vmatprep.subr.mxu0 0.0
      %1516 = vmatpush1.msra.mxu0 0.0
      %1517 = vmatprep.subr.mxu0 0.0
      %1518 = vmatpush1.msra.mxu0 0.0
      %1519 = vmatprep.subr.mxu0 0.0
      %1520 = vmatpush1.msra.mxu0 0.0
      %1521 = vmatprep.subr.mxu0 0.0
      %1522 = vmatpush1.msra.mxu0 0.0
      %1523 = vmatprep.subr.mxu0 0.0
      %1524 = vmatpush1.msra.mxu0 0.0
      %1525 = vmatprep.subr.mxu0 0.0
      %1526 = vmatpush1.msra.mxu0 0.0
      %1527 = vmatprep.subr.mxu0 0.0
      %1528 = vmatpush1.msra.mxu0 0.0
      %1529 = vmatprep.subr.mxu0 0.0
      %1530 = vmatpush1.msra.mxu0 0.0
      %1531 = vmatprep.subr.mxu0 0.0
      %1532 = vmatpush1.msra.mxu0 0.0
      %1533 = vmatprep.subr.mxu0 0.0
      %1534 = vmatpush1.msra.mxu0 0.0
      %1535 = vmatprep.subr.mxu0 0.0
      %1536 = vmatpush1.msra.mxu0 0.0
      %1537 = vmatprep.subr.mxu0 0.0
      %1538 = vmatpush1.msra.mxu0 0.0
      %1539 = vmatprep.subr.mxu0 0.0
      %1540 = vmatpush1.msra.mxu0 0.0
      %1541 = vmatprep.subr.mxu0 0.0
      %1542 = vmatpush1.msra.mxu0 0.0
      %1543 = vmatprep.subr.mxu0 0.0
      %1544 = vmatpush1.msra.mxu0 0.0
      %1545 = vmatprep.subr.mxu0 0.0
      %1546 = vmatpush1.msra.mxu0 0.0
      %1547 = vmatprep.subr.mxu0 0.0
      %1548 = vmatpush1.msra.mxu0 0.0
      %1549 = vmatprep.subr.mxu0 0.0
      %1550 = vmatpush1.msra.mxu0 0.0
      %1551 = vmatprep.subr.mxu0 0.0
      %1552 = vmatpush1.msra.mxu0 0.0
      %1553 = vmatprep.subr.mxu0 0.0
      %1554 = vmatpush1.msra.mxu0 0.0
      %1555 = vmatprep.subr.mxu0 0.0
      %1556 = vmatpush1.msra.mxu0 0.0
      %1557 = vmatprep.subr.mxu0 0.0
      %1558 = vmatpush1.msra.mxu0 0.0
      %1559 = vmatprep.subr.mxu0 0.0
      %1560 = vmatpush1.msra.mxu0 0.0
      %1561 = vmatprep.subr.mxu0 0.0
      %1562 = vmatpush1.msra.mxu0 0.0
      %1563 = vmatprep.subr.mxu0 0.0
      %1564 = vmatpush1.msra.mxu0 0.0
      %1565 = vmatprep.subr.mxu0 0.0
      %1566 = vmatpush1.msra.mxu0 0.0
      %1567 = vmatprep.subr.mxu0 0.0
      %1568 = vmatpush1.msra.mxu0 0.0
      %1569 = vmatprep.subr.mxu0 0.0
      %1570 = vmatpush1.msra.mxu0 0.0
      %1571 = vmatprep.subr.mxu0 0.0
      %1572 = vmatpush1.msra.mxu0 0.0
      %1573 = vmatprep.subr.mxu0 0.0
      %1574 = vmatpush1.msra.mxu0 0.0
      %1575 = vmatprep.mubr.f32.mxu0 0.0
      %1576 = vmatmul.mubr.f32.gmra.mrb[0].mxu0 %v1509
      %v1577 = vpop.f32.mrb[0].mxu0
      %v1578 = vadd.f32 0.0, %v1577
      %v1579 = vpop.f32.mrb[0].mxu0
      %1580 = vdwg.mxu0
      %1581 = vrot.lane.b32.xlu0 %v555, 64
      %v1582 = vpop.permute.xlu0 %1581
      %v1585 = vsel %vm574, %v1273, 0
      %1587 = vmatprep.subr.mxu0 0.0
      %1588 = vmatpush1.msra.mxu0 %v1582
      %1589 = vmatprep.subr.mxu0 0.0
      %1590 = vmatpush1.msra.mxu0 0.0
      %1591 = vmatprep.subr.mxu0 0.0
      %1592 = vmatpush1.msra.mxu0 0.0
      %1593 = vmatprep.subr.mxu0 0.0
      %1594 = vmatpush1.msra.mxu0 0.0
      %1595 = vmatprep.subr.mxu0 0.0
      %1596 = vmatpush1.msra.mxu0 0.0
      %1597 = vmatprep.subr.mxu0 0.0
      %1598 = vmatpush1.msra.mxu0 0.0
      %1599 = vmatprep.subr.mxu0 0.0
      %1600 = vmatpush1.msra.mxu0 0.0
      %1601 = vmatprep.subr.mxu0 0.0
      %1602 = vmatpush1.msra.mxu0 0.0
      %1603 = vmatprep.subr.mxu0 0.0
      %1604 = vmatpush1.msra.mxu0 0.0
      %1605 = vmatprep.subr.mxu0 0.0
      %1606 = vmatpush1.msra.mxu0 0.0
      %1607 = vmatprep.subr.mxu0 0.0
      %1608 = vmatpush1.msra.mxu0 0.0
      %1609 = vmatprep.subr.mxu0 0.0
      %1610 = vmatpush1.msra.mxu0 0.0
      %1611 = vmatprep.subr.mxu0 0.0
      %1612 = vmatpush1.msra.mxu0 0.0
      %1613 = vmatprep.subr.mxu0 0.0
      %1614 = vmatpush1.msra.mxu0 0.0
      %1615 = vmatprep.subr.mxu0 0.0
      %1616 = vmatpush1.msra.mxu0 0.0
      %1617 = vmatprep.subr.mxu0 0.0
      %1618 = vmatpush1.msra.mxu0 0.0
      %1619 = vmatprep.subr.mxu0 0.0
      %1620 = vmatpush1.msra.mxu0 0.0
      %1621 = vmatprep.subr.mxu0 0.0
      %1622 = vmatpush1.msra.mxu0 0.0
      %1623 = vmatprep.subr.mxu0 0.0
      %1624 = vmatpush1.msra.mxu0 0.0
      %1625 = vmatprep.subr.mxu0 0.0
      %1626 = vmatpush1.msra.mxu0 0.0
      %1627 = vmatprep.subr.mxu0 0.0
      %1628 = vmatpush1.msra.mxu0 0.0
      %1629 = vmatprep.subr.mxu0 0.0
      %1630 = vmatpush1.msra.mxu0 0.0
      %1631 = vmatprep.subr.mxu0 0.0
      %1632 = vmatpush1.msra.mxu0 0.0
      %1633 = vmatprep.subr.mxu0 0.0
      %1634 = vmatpush1.msra.mxu0 0.0
      %1635 = vmatprep.subr.mxu0 0.0
      %1636 = vmatpush1.msra.mxu0 0.0
      %1637 = vmatprep.subr.mxu0 0.0
      %1638 = vmatpush1.msra.mxu0 0.0
      %1639 = vmatprep.subr.mxu0 0.0
      %1640 = vmatpush1.msra.mxu0 0.0
      %1641 = vmatprep.subr.mxu0 0.0
      %1642 = vmatpush1.msra.mxu0 0.0
      %1643 = vmatprep.subr.mxu0 0.0
      %1644 = vmatpush1.msra.mxu0 0.0
      %1645 = vmatprep.subr.mxu0 0.0
      %1646 = vmatpush1.msra.mxu0 0.0
      %1647 = vmatprep.subr.mxu0 0.0
      %1648 = vmatpush1.msra.mxu0 0.0
      %1649 = vmatprep.subr.mxu0 0.0
      %1650 = vmatpush1.msra.mxu0 0.0
      %1651 = vmatprep.mubr.f32.mxu0 0.0
      %1652 = vmatmul.mubr.f32.gmra.mrb[0].mxu0 %v1585
      %v1653 = vpop.f32.mrb[0].mxu0
      %v1654 = vadd.f32 0.0, %v1653
      %v1655 = vpop.f32.mrb[0].mxu0
      %1656 = vdwg.mxu0
      %1657 = vrot.lane.b32.xlu0 %v567, 64
      %v1658 = vpop.permute.xlu0 %1657
      %v1661 = vsel %vm574, %v1274, 0
      %1663 = vmatprep.subr.mxu0 0.0
      %1664 = vmatpush1.msra.mxu0 %v1658
      %1665 = vmatprep.subr.mxu0 0.0
      %1666 = vmatpush1.msra.mxu0 0.0
      %1667 = vmatprep.subr.mxu0 0.0
      %1668 = vmatpush1.msra.mxu0 0.0
      %1669 = vmatprep.subr.mxu0 0.0
      %1670 = vmatpush1.msra.mxu0 0.0
      %1671 = vmatprep.subr.mxu0 0.0
      %1672 = vmatpush1.msra.mxu0 0.0
      %1673 = vmatprep.subr.mxu0 0.0
      %1674 = vmatpush1.msra.mxu0 0.0
      %1675 = vmatprep.subr.mxu0 0.0
      %1676 = vmatpush1.msra.mxu0 0.0
      %1677 = vmatprep.subr.mxu0 0.0
      %1678 = vmatpush1.msra.mxu0 0.0
      %1679 = vmatprep.subr.mxu0 0.0
      %1680 = vmatpush1.msra.mxu0 0.0
      %1681 = vmatprep.subr.mxu0 0.0
      %1682 = vmatpush1.msra.mxu0 0.0
      %1683 = vmatprep.subr.mxu0 0.0
      %1684 = vmatpush1.msra.mxu0 0.0
      %1685 = vmatprep.subr.mxu0 0.0
      %1686 = vmatpush1.msra.mxu0 0.0
      %1687 = vmatprep.subr.mxu0 0.0
      %1688 = vmatpush1.msra.mxu0 0.0
      %1689 = vmatprep.subr.mxu0 0.0
      %1690 = vmatpush1.msra.mxu0 0.0
      %1691 = vmatprep.subr.mxu0 0.0
      %1692 = vmatpush1.msra.mxu0 0.0
      %1693 = vmatprep.subr.mxu0 0.0
      %1694 = vmatpush1.msra.mxu0 0.0
      %1695 = vmatprep.subr.mxu0 0.0
      %1696 = vmatpush1.msra.mxu0 0.0
      %1697 = vmatprep.subr.mxu0 0.0
      %1698 = vmatpush1.msra.mxu0 0.0
      %1699 = vmatprep.subr.mxu0 0.0
      %1700 = vmatpush1.msra.mxu0 0.0
      %1701 = vmatprep.subr.mxu0 0.0
      %1702 = vmatpush1.msra.mxu0 0.0
      %1703 = vmatprep.subr.mxu0 0.0
      %1704 = vmatpush1.msra.mxu0 0.0
      %1705 = vmatprep.subr.mxu0 0.0
      %1706 = vmatpush1.msra.mxu0 0.0
      %1707 = vmatprep.subr.mxu0 0.0
      %1708 = vmatpush1.msra.mxu0 0.0
      %1709 = vmatprep.subr.mxu0 0.0
      %1710 = vmatpush1.msra.mxu0 0.0
      %1711 = vmatprep.subr.mxu0 0.0
      %1712 = vmatpush1.msra.mxu0 0.0
      %1713 = vmatprep.subr.mxu0 0.0
      %1714 = vmatpush1.msra.mxu0 0.0
      %1715 = vmatprep.subr.mxu0 0.0
      %1716 = vmatpush1.msra.mxu0 0.0
      %1717 = vmatprep.subr.mxu0 0.0
      %1718 = vmatpush1.msra.mxu0 0.0
      %1719 = vmatprep.subr.mxu0 0.0
      %1720 = vmatpush1.msra.mxu0 0.0
      %1721 = vmatprep.subr.mxu0 0.0
      %1722 = vmatpush1.msra.mxu0 0.0
      %1723 = vmatprep.subr.mxu0 0.0
      %1724 = vmatpush1.msra.mxu0 0.0
      %1725 = vmatprep.subr.mxu0 0.0
      %1726 = vmatpush1.msra.mxu0 0.0
      %1727 = vmatprep.mubr.f32.mxu0 0.0
      %1728 = vmatmul.mubr.f32.gmra.mrb[0].mxu0 %v1661
      %v1729 = vpop.f32.mrb[0].mxu0
      %v1730 = vadd.f32 0.0, %v1729
      %v1731 = vpop.f32.mrb[0].mxu0
      %1732 = vdwg.mxu0
      %1733 = vrot.lane.b32.xlu0 %v569, 64
      %v1734 = vpop.permute.xlu0 %1733
      %v1737 = vsel %vm574, %v1275, 0
      %1739 = vmatprep.subr.mxu0 0.0
      %1740 = vmatpush1.msra.mxu0 %v1734
      %1741 = vmatprep.subr.mxu0 0.0
      %1742 = vmatpush1.msra.mxu0 0.0
      %1743 = vmatprep.subr.mxu0 0.0
      %1744 = vmatpush1.msra.mxu0 0.0
      %1745 = vmatprep.subr.mxu0 0.0
      %1746 = vmatpush1.msra.mxu0 0.0
      %1747 = vmatprep.subr.mxu0 0.0
      %1748 = vmatpush1.msra.mxu0 0.0
      %1749 = vmatprep.subr.mxu0 0.0
      %1750 = vmatpush1.msra.mxu0 0.0
      %1751 = vmatprep.subr.mxu0 0.0
      %1752 = vmatpush1.msra.mxu0 0.0
      %1753 = vmatprep.subr.mxu0 0.0
      %1754 = vmatpush1.msra.mxu0 0.0
      %1755 = vmatprep.subr.mxu0 0.0
      %1756 = vmatpush1.msra.mxu0 0.0
      %1757 = vmatprep.subr.mxu0 0.0
      %1758 = vmatpush1.msra.mxu0 0.0
      %1759 = vmatprep.subr.mxu0 0.0
      %1760 = vmatpush1.msra.mxu0 0.0
      %1761 = vmatprep.subr.mxu0 0.0
      %1762 = vmatpush1.msra.mxu0 0.0
      %1763 = vmatprep.subr.mxu0 0.0
      %1764 = vmatpush1.msra.mxu0 0.0
      %1765 = vmatprep.subr.mxu0 0.0
      %1766 = vmatpush1.msra.mxu0 0.0
      %1767 = vmatprep.subr.mxu0 0.0
      %1768 = vmatpush1.msra.mxu0 0.0
      %1769 = vmatprep.subr.mxu0 0.0
      %1770 = vmatpush1.msra.mxu0 0.0
      %1771 = vmatprep.subr.mxu0 0.0
      %1772 = vmatpush1.msra.mxu0 0.0
      %1773 = vmatprep.subr.mxu0 0.0
      %1774 = vmatpush1.msra.mxu0 0.0
      %1775 = vmatprep.subr.mxu0 0.0
      %1776 = vmatpush1.msra.mxu0 0.0
      %1777 = vmatprep.subr.mxu0 0.0
      %1778 = vmatpush1.msra.mxu0 0.0
      %1779 = vmatprep.subr.mxu0 0.0
      %1780 = vmatpush1.msra.mxu0 0.0
      %1781 = vmatprep.subr.mxu0 0.0
      %1782 = vmatpush1.msra.mxu0 0.0
      %1783 = vmatprep.subr.mxu0 0.0
      %1784 = vmatpush1.msra.mxu0 0.0
      %1785 = vmatprep.subr.mxu0 0.0
      %1786 = vmatpush1.msra.mxu0 0.0
      %1787 = vmatprep.subr.mxu0 0.0
      %1788 = vmatpush1.msra.mxu0 0.0
      %1789 = vmatprep.subr.mxu0 0.0
      %1790 = vmatpush1.msra.mxu0 0.0
      %1791 = vmatprep.subr.mxu0 0.0
      %1792 = vmatpush1.msra.mxu0 0.0
      %1793 = vmatprep.subr.mxu0 0.0
      %1794 = vmatpush1.msra.mxu0 0.0
      %1795 = vmatprep.subr.mxu0 0.0
      %1796 = vmatpush1.msra.mxu0 0.0
      %1797 = vmatprep.subr.mxu0 0.0
      %1798 = vmatpush1.msra.mxu0 0.0
      %1799 = vmatprep.subr.mxu0 0.0
      %1800 = vmatpush1.msra.mxu0 0.0
      %1801 = vmatprep.subr.mxu0 0.0
      %1802 = vmatpush1.msra.mxu0 0.0
      %1803 = vmatprep.mubr.f32.mxu0 0.0
      %1804 = vmatmul.mubr.f32.gmra.mrb[0].mxu0 %v1737
      %v1805 = vpop.f32.mrb[0].mxu0
      %v1806 = vadd.f32 0.0, %v1805
      %v1807 = vpop.f32.mrb[0].mxu0
      %1808 = vdwg.mxu0
      %1809 = vrot.lane.b32.xlu0 %v571, 64
      %v1810 = vpop.permute.xlu0 %1809
      %v1813 = vsel %vm574, %v1276, 0
      %1815 = vmatprep.subr.mxu0 0.0
      %1816 = vmatpush1.msra.mxu0 %v1810
      %1817 = vmatprep.subr.mxu0 0.0
      %1818 = vmatpush1.msra.mxu0 0.0
      %1819 = vmatprep.subr.mxu0 0.0
      %1820 = vmatpush1.msra.mxu0 0.0
      %1821 = vmatprep.subr.mxu0 0.0
      %1822 = vmatpush1.msra.mxu0 0.0
      %1823 = vmatprep.subr.mxu0 0.0
      %1824 = vmatpush1.msra.mxu0 0.0
      %1825 = vmatprep.subr.mxu0 0.0
      %1826 = vmatpush1.msra.mxu0 0.0
      %1827 = vmatprep.subr.mxu0 0.0
      %1828 = vmatpush1.msra.mxu0 0.0
      %1829 = vmatprep.subr.mxu0 0.0
      %1830 = vmatpush1.msra.mxu0 0.0
      %1831 = vmatprep.subr.mxu0 0.0
      %1832 = vmatpush1.msra.mxu0 0.0
      %1833 = vmatprep.subr.mxu0 0.0
      %1834 = vmatpush1.msra.mxu0 0.0
      %1835 = vmatprep.subr.mxu0 0.0
      %1836 = vmatpush1.msra.mxu0 0.0
      %1837 = vmatprep.subr.mxu0 0.0
      %1838 = vmatpush1.msra.mxu0 0.0
      %1839 = vmatprep.subr.mxu0 0.0
      %1840 = vmatpush1.msra.mxu0 0.0
      %1841 = vmatprep.subr.mxu0 0.0
      %1842 = vmatpush1.msra.mxu0 0.0
      %1843 = vmatprep.subr.mxu0 0.0
      %1844 = vmatpush1.msra.mxu0 0.0
      %1845 = vmatprep.subr.mxu0 0.0
      %1846 = vmatpush1.msra.mxu0 0.0
      %1847 = vmatprep.subr.mxu0 0.0
      %1848 = vmatpush1.msra.mxu0 0.0
      %1849 = vmatprep.subr.mxu0 0.0
      %1850 = vmatpush1.msra.mxu0 0.0
      %1851 = vmatprep.subr.mxu0 0.0
      %1852 = vmatpush1.msra.mxu0 0.0
      %1853 = vmatprep.subr.mxu0 0.0
      %1854 = vmatpush1.msra.mxu0 0.0
      %1855 = vmatprep.subr.mxu0 0.0
      %1856 = vmatpush1.msra.mxu0 0.0
      %1857 = vmatprep.subr.mxu0 0.0
      %1858 = vmatpush1.msra.mxu0 0.0
      %1859 = vmatprep.subr.mxu0 0.0
      %1860 = vmatpush1.msra.mxu0 0.0
      %1861 = vmatprep.subr.mxu0 0.0
      %1862 = vmatpush1.msra.mxu0 0.0
      %1863 = vmatprep.subr.mxu0 0.0
      %1864 = vmatpush1.msra.mxu0 0.0
      %1865 = vmatprep.subr.mxu0 0.0
      %1866 = vmatpush1.msra.mxu0 0.0
      %1867 = vmatprep.subr.mxu0 0.0
      %1868 = vmatpush1.msra.mxu0 0.0
      %1869 = vmatprep.subr.mxu0 0.0
      %1870 = vmatpush1.msra.mxu0 0.0
      %1871 = vmatprep.subr.mxu0 0.0
      %1872 = vmatpush1.msra.mxu0 0.0
      %1873 = vmatprep.subr.mxu0 0.0
      %1874 = vmatpush1.msra.mxu0 0.0
      %1875 = vmatprep.subr.mxu0 0.0
      %1876 = vmatpush1.msra.mxu0 0.0
      %1877 = vmatprep.subr.mxu0 0.0
      %1878 = vmatpush1.msra.mxu0 0.0
      %1879 = vmatprep.mubr.f32.mxu0 0.0
      %1880 = vmatmul.mubr.f32.gmra.mrb[0].mxu0 %v1813
      %v1881 = vpop.f32.mrb[0].mxu0
      %v1882 = vadd.f32 0.0, %v1881
      %v1883 = vpop.f32.mrb[0].mxu0
      %1884 = vdwg.mxu0
      %1886 = vrot.lane.b32.xlu0 %v1426, 8
      %v1887 = vpop.permute.xlu0 %1886
      %1890 = vrot.lane.b32.xlu0 %v1502, 16
      %v1891 = vpop.permute.xlu0 %1890
      %1894 = vrot.lane.b32.xlu0 %v1578, 24
      %v1895 = vpop.permute.xlu0 %1894
      %v1897 = vsel %vm574, %v1350, %v1887
      %vm1898 = vcmask 130048
      %v1899 = vsel %vm1898, %v1897, %v1891
      %vm1900 = vcmask 195584
      %v1901 = vsel %vm1900, %v1899, %v1895
      %1903 = vrot.lane.b32.xlu0 %v1730, 8
      %v1904 = vpop.permute.xlu0 %1903
      %1907 = vrot.lane.b32.xlu0 %v1806, 16
      %v1908 = vpop.permute.xlu0 %1907
      %1911 = vrot.lane.b32.xlu0 %v1882, 24
      %v1912 = vpop.permute.xlu0 %1911
      %v1914 = vsel %vm574, %v1654, %v1904
      %v1915 = vsel %vm1898, %v1914, %v1908
      %v1916 = vsel %vm1900, %v1915, %v1912
      %v1917 = vld [vmem:[%s448] sm:$0xff]
      %v1918 = vld [vmem:[%s448 + $0x8] sm:$0xff]
      %v1919 = vld [vmem:[%s448 + $0x10] sm:$0xff]
      %v1920 = vld [vmem:[%s448 + $0x18] sm:$0xff]
      %v1921 = vld [vmem:[%s451] sm:$0x1]
      %v1923 = vlaneseq
      %v1924 = vshrl.u32 %v1923, 7
      %v1925 = vsub.s32 0, %v1924
      %v1926 = vrot.slane %v1921, %v1925
      %v1929 = vsel %vm476, %v1901, 0
      %v1932 = vsel %vm476, %v1916, 0
      %1934 = vmatprep.subr.mxu0 0.0
      %1935 = vmatpush1.msra.mxu0 %v1917
      %1936 = vmatprep.subr.mxu0 0.0
      %1937 = vmatpush1.msra.mxu0 %v1918
      %1938 = vmatprep.subr.mxu0 0.0
      %1939 = vmatpush1.msra.mxu0 %v1919
      %1940 = vmatprep.subr.mxu0 0.0
      %1941 = vmatpush1.msra.mxu0 %v1920
      %1942 = vmatprep.subr.mxu0 0.0
      %1943 = vmatpush1.msra.mxu0 0.0
      %1944 = vmatprep.subr.mxu0 0.0
      %1945 = vmatpush1.msra.mxu0 0.0
      %1946 = vmatprep.subr.mxu0 0.0
      %1947 = vmatpush1.msra.mxu0 0.0
      %1948 = vmatprep.subr.mxu0 0.0
      %1949 = vmatpush1.msra.mxu0 0.0
      %1950 = vmatprep.subr.mxu0 0.0
      %1951 = vmatpush1.msra.mxu0 0.0
      %1952 = vmatprep.subr.mxu0 0.0
      %1953 = vmatpush1.msra.mxu0 0.0
      %1954 = vmatprep.subr.mxu0 0.0
      %1955 = vmatpush1.msra.mxu0 0.0
      %1956 = vmatprep.subr.mxu0 0.0
      %1957 = vmatpush1.msra.mxu0 0.0
      %1958 = vmatprep.subr.mxu0 0.0
      %1959 = vmatpush1.msra.mxu0 0.0
      %1960 = vmatprep.subr.mxu0 0.0
      %1961 = vmatpush1.msra.mxu0 0.0
      %1962 = vmatprep.subr.mxu0 0.0
      %1963 = vmatpush1.msra.mxu0 0.0
      %1964 = vmatprep.subr.mxu0 0.0
      %1965 = vmatpush1.msra.mxu0 0.0
      %1966 = vmatprep.subr.mxu0 0.0
      %1967 = vmatpush1.msra.mxu0 0.0
      %1968 = vmatprep.subr.mxu0 0.0
      %1969 = vmatpush1.msra.mxu0 0.0
      %1970 = vmatprep.subr.mxu0 0.0
      %1971 = vmatpush1.msra.mxu0 0.0
      %1972 = vmatprep.subr.mxu0 0.0
      %1973 = vmatpush1.msra.mxu0 0.0
      %1974 = vmatprep.subr.mxu0 0.0
      %1975 = vmatpush1.msra.mxu0 0.0
      %1976 = vmatprep.subr.mxu0 0.0
      %1977 = vmatpush1.msra.mxu0 0.0
      %1978 = vmatprep.subr.mxu0 0.0
      %1979 = vmatpush1.msra.mxu0 0.0
      %1980 = vmatprep.subr.mxu0 0.0
      %1981 = vmatpush1.msra.mxu0 0.0
      %1982 = vmatprep.subr.mxu0 0.0
      %1983 = vmatpush1.msra.mxu0 0.0
      %1984 = vmatprep.subr.mxu0 0.0
      %1985 = vmatpush1.msra.mxu0 0.0
      %1986 = vmatprep.subr.mxu0 0.0
      %1987 = vmatpush1.msra.mxu0 0.0
      %1988 = vmatprep.subr.mxu0 0.0
      %1989 = vmatpush1.msra.mxu0 0.0
      %1990 = vmatprep.subr.mxu0 0.0
      %1991 = vmatpush1.msra.mxu0 0.0
      %1992 = vmatprep.subr.mxu0 0.0
      %1993 = vmatpush1.msra.mxu0 0.0
      %1994 = vmatprep.subr.mxu0 0.0
      %1995 = vmatpush1.msra.mxu0 0.0
      %1996 = vmatprep.subr.mxu0 0.0
      %1997 = vmatpush1.msra.mxu0 0.0
      %1998 = vmatprep.mubr.f32.mxu0 0.0
      %1999 = vmatmul.mubr.f32.gmra.mrb[0].mxu0 %v1929
      %v2000 = vpop.f32.mrb[0].mxu0
      %v2001 = vadd.f32 %v1926, %v2000
      %v2002 = vpop.f32.mrb[0].mxu0
      %2003 = vmatprep.mubr.f32.mxu0 0.0
      %2004 = vmatmul.mubr.f32.gmra.mrb[0].mxu0 %v1932
      %v2005 = vpop.f32.mrb[0].mxu0
      %v2006 = vadd.f32 %v1926, %v2005
      %v2007 = vpop.f32.mrb[0].mxu0
      %2008 = vdwg.mxu0
      %v2009 = vadd.f32 %v2001, %v463
      %v2010 = vadd.f32 %v2006, %v464
      %v2011 = vsel %vm476, %v2009, 0.0
      %2012 = vadd.xlane.f32.xlu0 %v2011
      %v2013 = vpop.xlane.xlu0 %2012
      %v2014 = vsel %vm476, %v2010, 0.0
      %2015 = vadd.xlane.f32.xlu0 %v2014
      %v2016 = vpop.xlane.xlu0 %2015
      %v2017 = vrcp.pop 32.0
      %v2018 = vmul.f32 %v2013, %v2017
      %v2019 = vmul.f32 %v2016, %v2017
      %v2020 = vsub.f32 %v2009, %v2018
      %v2021 = vsub.f32 %v2010, %v2019
      %v2022 = vmul.f32 %v2020, %v2020
      %v2023 = vmul.f32 %v2021, %v2021
      %v2024 = vsel %vm476, %v2022, 0.0
      %2025 = vadd.xlane.f32.xlu0 %v2024
      %v2026 = vpop.xlane.xlu0 %2025
      %v2027 = vsel %vm476, %v2023, 0.0
      %2028 = vadd.xlane.f32.xlu0 %v2027
      %v2029 = vpop.xlane.xlu0 %2028
      %v2030 = vmul.f32 %v2026, %v2017
      %v2031 = vmul.f32 %v2029, %v2017
      %v2032 = vadd.f32 %v2030, 1e-05
      %v2033 = vadd.f32 %v2031, 1e-05
      %v2034 = vrsqrt.pop %v2032
      %v2035 = vrsqrt.pop %v2033
      %v2036 = vmul.f32 %v2020, %v2034
      %v2037 = vmul.f32 %v2021, %v2035
      %v2038 = vld [vmem:[%s454] sm:$0x1]
      %v2040 = vlaneseq
      %v2041 = vshrl.u32 %v2040, 7
      %v2042 = vsub.s32 0, %v2041
      %v2043 = vrot.slane %v2038, %v2042
      %v2045 = vmul.f32 %v2036, %v2043
      %v2046 = vmul.f32 %v2037, %v2043
      %v2047 = vld [vmem:[%s457] sm:$0x1]
      %v2049 = vlaneseq
      %v2050 = vshrl.u32 %v2049, 7
      %v2051 = vsub.s32 0, %v2050
      %v2052 = vrot.slane %v2047, %v2051
      %v2054 = vadd.f32 %v2045, %v2052
      %v2055 = vadd.f32 %v2046, %v2052
      %v2056 = vld [vmem:[%s1] sm:$0x3]
      %v2057 = vld [vmem:[%s9] sm:$0xff]
      %v2058 = vld [vmem:[%s9 + $0x8] sm:$0xff]
      %v2059 = vld [vmem:[%s9 + $0x10] sm:$0xff]
      %v2060 = vld [vmem:[%s9 + $0x18] sm:$0xff]
      %v2061 = vld [vmem:[%s10] sm:$0xf]
      %v2063 = vlaneseq
      %v2064 = vshrl.u32 %v2063, 7
      %v2065 = vsub.s32 0, %v2064
      %v2066 = vrot.slane %v2061, %v2065
      %v2067 = vlaneseq
      %v2068 = vshrl.u32 %v2067, 7
      %v2069 = vsub.s32 1, %v2068
      %v2070 = vrot.slane %v2061, %v2069
      %v2071 = vlaneseq
      %v2072 = vshrl.u32 %v2071, 7
      %v2073 = vsub.s32 2, %v2072
      %v2074 = vrot.slane %v2061, %v2073
      %v2075 = vlaneseq
      %v2076 = vshrl.u32 %v2075, 7
      %v2077 = vsub.s32 3, %v2076
      %v2078 = vrot.slane %v2061, %v2077
      %v2084 = vsel %vm574, %v2056, 0
      %2086 = vmatprep.subr.mxu0 %v2058
      %2087 = vmatpush1.msra.mxu0 %v2057
      %2088 = vmatprep.subr.mxu0 0.0
      %2089 = vmatpush1.msra.mxu0 0.0
      %2090 = vmatprep.subr.mxu0 0.0
      %2091 = vmatpush1.msra.mxu0 0.0
      %2092 = vmatprep.subr.mxu0 0.0
      %2093 = vmatpush1.msra.mxu0 0.0
      %2094 = vmatprep.subr.mxu0 0.0
      %2095 = vmatpush1.msra.mxu0 0.0
      %2096 = vmatprep.subr.mxu0 0.0
      %2097 = vmatpush1.msra.mxu0 0.0
      %2098 = vmatprep.subr.mxu0 0.0
      %2099 = vmatpush1.msra.mxu0 0.0
      %2100 = vmatprep.subr.mxu0 0.0
      %2101 = vmatpush1.msra.mxu0 0.0
      %2102 = vmatprep.subr.mxu0 0.0
      %2103 = vmatpush1.msra.mxu0 0.0
      %2104 = vmatprep.subr.mxu0 0.0
      %2105 = vmatpush1.msra.mxu0 0.0
      %2106 = vmatprep.subr.mxu0 0.0
      %2107 = vmatpush1.msra.mxu0 0.0
      %2108 = vmatprep.subr.mxu0 0.0
      %2109 = vmatpush1.msra.mxu0 0.0
      %2110 = vmatprep.subr.mxu0 0.0
      %2111 = vmatpush1.msra.mxu0 0.0
      %2112 = vmatprep.subr.mxu0 0.0
      %2113 = vmatpush1.msra.mxu0 0.0
      %2114 = vmatprep.subr.mxu0 0.0
      %2115 = vmatpush1.msra.mxu0 0.0
      %2116 = vmatprep.subr.mxu0 0.0
      %2117 = vmatpush1.msra.mxu0 0.0
      %2118 = vmatprep.subr.mxu0 0.0
      %2119 = vmatpush1.msra.mxu0 0.0
      %2120 = vmatprep.subr.mxu0 0.0
      %2121 = vmatpush1.msra.mxu0 0.0
      %2122 = vmatprep.subr.mxu0 0.0
      %2123 = vmatpush1.msra.mxu0 0.0
      %2124 = vmatprep.subr.mxu0 0.0
      %2125 = vmatpush1.msra.mxu0 0.0
      %2126 = vmatprep.subr.mxu0 0.0
      %2127 = vmatpush1.msra.mxu0 0.0
      %2128 = vmatprep.subr.mxu0 0.0
      %2129 = vmatpush1.msra.mxu0 0.0
      %2130 = vmatprep.subr.mxu0 0.0
      %2131 = vmatpush1.msra.mxu0 0.0
      %2132 = vmatprep.subr.mxu0 0.0
      %2133 = vmatpush1.msra.mxu0 0.0
      %2134 = vmatprep.subr.mxu0 0.0
      %2135 = vmatpush1.msra.mxu0 0.0
      %2136 = vmatprep.subr.mxu0 0.0
      %2137 = vmatpush1.msra.mxu0 0.0
      %2138 = vmatprep.subr.mxu0 0.0
      %2139 = vmatpush1.msra.mxu0 0.0
      %2140 = vmatprep.subr.mxu0 0.0
      %2141 = vmatpush1.msra.mxu0 0.0
      %2142 = vmatprep.subr.mxu0 0.0
      %2143 = vmatpush1.msra.mxu0 0.0
      %2144 = vmatprep.subr.mxu0 0.0
      %2145 = vmatpush1.msra.mxu0 0.0
      %2146 = vmatprep.subr.mxu0 0.0
      %2147 = vmatpush1.msra.mxu0 0.0
      %2148 = vmatprep.subr.mxu0 0.0
      %2149 = vmatpush1.msra.mxu0 0.0
      %2150 = vmatprep.mubr.f32.mxu0 0.0
      %2151 = vmatmul.mubr.f32.gmra.mrb[0].mxu0 %v2084
      %v2152 = vpop.f32.mrb[0].mxu0
      %v2153 = vadd.f32 %v2066, %v2152
      %v2154 = vpop.f32.mrb[0].mxu0
      %v2155 = vadd.f32 %v2070, %v2154
      %2156 = vdwg.mxu0
      %2157 = vmatprep.subr.mxu0 %v2060
      %2158 = vmatpush1.msra.mxu0 %v2059
      %2159 = vmatprep.subr.mxu0 0.0
      %2160 = vmatpush1.msra.mxu0 0.0
      %2161 = vmatprep.subr.mxu0 0.0
      %2162 = vmatpush1.msra.mxu0 0.0
      %2163 = vmatprep.subr.mxu0 0.0
      %2164 = vmatpush1.msra.mxu0 0.0
      %2165 = vmatprep.subr.mxu0 0.0
      %2166 = vmatpush1.msra.mxu0 0.0
      %2167 = vmatprep.subr.mxu0 0.0
      %2168 = vmatpush1.msra.mxu0 0.0
      %2169 = vmatprep.subr.mxu0 0.0
      %2170 = vmatpush1.msra.mxu0 0.0
      %2171 = vmatprep.subr.mxu0 0.0
      %2172 = vmatpush1.msra.mxu0 0.0
      %2173 = vmatprep.subr.mxu0 0.0
      %2174 = vmatpush1.msra.mxu0 0.0
      %2175 = vmatprep.subr.mxu0 0.0
      %2176 = vmatpush1.msra.mxu0 0.0
      %2177 = vmatprep.subr.mxu0 0.0
      %2178 = vmatpush1.msra.mxu0 0.0
      %2179 = vmatprep.subr.mxu0 0.0
      %2180 = vmatpush1.msra.mxu0 0.0
      %2181 = vmatprep.subr.mxu0 0.0
      %2182 = vmatpush1.msra.mxu0 0.0
      %2183 = vmatprep.subr.mxu0 0.0
      %2184 = vmatpush1.msra.mxu0 0.0
      %2185 = vmatprep.subr.mxu0 0.0
      %2186 = vmatpush1.msra.mxu0 0.0
      %2187 = vmatprep.subr.mxu0 0.0
      %2188 = vmatpush1.msra.mxu0 0.0
      %2189 = vmatprep.subr.mxu0 0.0
      %2190 = vmatpush1.msra.mxu0 0.0
      %2191 = vmatprep.subr.mxu0 0.0
      %2192 = vmatpush1.msra.mxu0 0.0
      %2193 = vmatprep.subr.mxu0 0.0
      %2194 = vmatpush1.msra.mxu0 0.0
      %2195 = vmatprep.subr.mxu0 0.0
      %2196 = vmatpush1.msra.mxu0 0.0
      %2197 = vmatprep.subr.mxu0 0.0
      %2198 = vmatpush1.msra.mxu0 0.0
      %2199 = vmatprep.subr.mxu0 0.0
      %2200 = vmatpush1.msra.mxu0 0.0
      %2201 = vmatprep.subr.mxu0 0.0
      %2202 = vmatpush1.msra.mxu0 0.0
      %2203 = vmatprep.subr.mxu0 0.0
      %2204 = vmatpush1.msra.mxu0 0.0
      %2205 = vmatprep.subr.mxu0 0.0
      %2206 = vmatpush1.msra.mxu0 0.0
      %2207 = vmatprep.subr.mxu0 0.0
      %2208 = vmatpush1.msra.mxu0 0.0
      %2209 = vmatprep.subr.mxu0 0.0
      %2210 = vmatpush1.msra.mxu0 0.0
      %2211 = vmatprep.subr.mxu0 0.0
      %2212 = vmatpush1.msra.mxu0 0.0
      %2213 = vmatprep.subr.mxu0 0.0
      %2214 = vmatpush1.msra.mxu0 0.0
      %2215 = vmatprep.subr.mxu0 0.0
      %2216 = vmatpush1.msra.mxu0 0.0
      %2217 = vmatprep.subr.mxu0 0.0
      %2218 = vmatpush1.msra.mxu0 0.0
      %2219 = vmatprep.subr.mxu0 0.0
      %2220 = vmatpush1.msra.mxu0 0.0
      %2221 = vmatprep.mubr.f32.mxu0 0.0
      %2222 = vmatmul.mubr.f32.gmra.mrb[0].mxu0 %v2084
      %v2223 = vpop.f32.mrb[0].mxu0
      %v2224 = vadd.f32 %v2074, %v2223
      %v2225 = vpop.f32.mrb[0].mxu0
      %v2226 = vadd.f32 %v2078, %v2225
      %2227 = vdwg.mxu0
      %v2228 = vld [vmem:[%s8] sm:$0xff]
      %v2229 = vld [vmem:[%s8 + $0x8] sm:$0xff]
      %v2230 = vld [vmem:[%s8 + $0x10] sm:$0xff]
      %v2231 = vld [vmem:[%s8 + $0x18] sm:$0xff]
      %v2232 = vld [vmem:[%s8 + $0x20] sm:$0xff]
      %v2233 = vld [vmem:[%s8 + $0x28] sm:$0xff]
      %v2234 = vld [vmem:[%s8 + $0x30] sm:$0xff]
      %v2235 = vld [vmem:[%s8 + $0x38] sm:$0xff]
      %v2236 = vld [vmem:[%s8 + $0x40] sm:$0xff]
      %v2237 = vld [vmem:[%s8 + $0x48] sm:$0xff]
      %v2238 = vld [vmem:[%s8 + $0x50] sm:$0xff]
      %v2239 = vld [vmem:[%s8 + $0x58] sm:$0xff]
      %v2240 = vld [vmem:[%s8 + $0x60] sm:$0xff]
      %v2241 = vld [vmem:[%s8 + $0x68] sm:$0xff]
      %v2242 = vld [vmem:[%s8 + $0x70] sm:$0xff]
      %v2243 = vld [vmem:[%s8 + $0x78] sm:$0xff]
      %v2246 = vrot.slane %v2055, 7
      %vm2247 = vcmask 1041409
      %v2248 = vsel %vm2247, %v2246, %v2054
      %v2249 = vsel %vm476, %v2248, 0
      %2251 = vmatprep.subr.mxu0 %v2229
      %2252 = vmatpush1.msra.mxu0 %v2228
      %2253 = vmatprep.subr.mxu0 %v2233
      %2254 = vmatpush1.msra.mxu0 %v2232
      %2255 = vmatprep.subr.mxu0 %v2237
      %2256 = vmatpush1.msra.mxu0 %v2236
      %2257 = vmatprep.subr.mxu0 %v2241
      %2258 = vmatpush1.msra.mxu0 %v2240
      %2259 = vmatprep.subr.mxu0 0.0
      %2260 = vmatpush1.msra.mxu0 0.0
      %2261 = vmatprep.subr.mxu0 0.0
      %2262 = vmatpush1.msra.mxu0 0.0
      %2263 = vmatprep.subr.mxu0 0.0
      %2264 = vmatpush1.msra.mxu0 0.0
      %2265 = vmatprep.subr.mxu0 0.0
      %2266 = vmatpush1.msra.mxu0 0.0
      %2267 = vmatprep.subr.mxu0 0.0
      %2268 = vmatpush1.msra.mxu0 0.0
      %2269 = vmatprep.subr.mxu0 0.0
      %2270 = vmatpush1.msra.mxu0 0.0
      %2271 = vmatprep.subr.mxu0 0.0
      %2272 = vmatpush1.msra.mxu0 0.0
      %2273 = vmatprep.subr.mxu0 0.0
      %2274 = vmatpush1.msra.mxu0 0.0
      %2275 = vmatprep.subr.mxu0 0.0
      %2276 = vmatpush1.msra.mxu0 0.0
      %2277 = vmatprep.subr.mxu0 0.0
      %2278 = vmatpush1.msra.mxu0 0.0
      %2279 = vmatprep.subr.mxu0 0.0
      %2280 = vmatpush1.msra.mxu0 0.0
      %2281 = vmatprep.subr.mxu0 0.0
      %2282 = vmatpush1.msra.mxu0 0.0
      %2283 = vmatprep.subr.mxu0 0.0
      %2284 = vmatpush1.msra.mxu0 0.0
      %2285 = vmatprep.subr.mxu0 0.0
      %2286 = vmatpush1.msra.mxu0 0.0
      %2287 = vmatprep.subr.mxu0 0.0
      %2288 = vmatpush1.msra.mxu0 0.0
      %2289 = vmatprep.subr.mxu0 0.0
      %2290 = vmatpush1.msra.mxu0 0.0
      %2291 = vmatprep.subr.mxu0 0.0
      %2292 = vmatpush1.msra.mxu0 0.0
      %2293 = vmatprep.subr.mxu0 0.0
      %2294 = vmatpush1.msra.mxu0 0.0
      %2295 = vmatprep.subr.mxu0 0.0
      %2296 = vmatpush1.msra.mxu0 0.0
      %2297 = vmatprep.subr.mxu0 0.0
      %2298 = vmatpush1.msra.mxu0 0.0
      %2299 = vmatprep.subr.mxu0 0.0
      %2300 = vmatpush1.msra.mxu0 0.0
      %2301 = vmatprep.subr.mxu0 0.0
      %2302 = vmatpush1.msra.mxu0 0.0
      %2303 = vmatprep.subr.mxu0 0.0
      %2304 = vmatpush1.msra.mxu0 0.0
      %2305 = vmatprep.subr.mxu0 0.0
      %2306 = vmatpush1.msra.mxu0 0.0
      %2307 = vmatprep.subr.mxu0 0.0
      %2308 = vmatpush1.msra.mxu0 0.0
      %2309 = vmatprep.subr.mxu0 0.0
      %2310 = vmatpush1.msra.mxu0 0.0
      %2311 = vmatprep.subr.mxu0 0.0
      %2312 = vmatpush1.msra.mxu0 0.0
      %2313 = vmatprep.subr.mxu0 0.0
      %2314 = vmatpush1.msra.mxu0 0.0
      %2315 = vmatprep.mubr.f32.mxu0 0.0
      %2316 = vmatmul.mubr.f32.gmra.mrb[0].mxu0 %v2249
      %v2317 = vpop.f32.mrb[0].mxu0
      %v2318 = vadd.f32 0.0, %v2317
      %v2319 = vpop.f32.mrb[0].mxu0
      %v2320 = vadd.f32 0.0, %v2319
      %2321 = vdwg.mxu0
      %2322 = vmatprep.subr.mxu0 %v2231
      %2323 = vmatpush1.msra.mxu0 %v2230
      %2324 = vmatprep.subr.mxu0 %v2235
      %2325 = vmatpush1.msra.mxu0 %v2234
      %2326 = vmatprep.subr.mxu0 %v2239
      %2327 = vmatpush1.msra.mxu0 %v2238
      %2328 = vmatprep.subr.mxu0 %v2243
      %2329 = vmatpush1.msra.mxu0 %v2242
      %2330 = vmatprep.subr.mxu0 0.0
      %2331 = vmatpush1.msra.mxu0 0.0
      %2332 = vmatprep.subr.mxu0 0.0
      %2333 = vmatpush1.msra.mxu0 0.0
      %2334 = vmatprep.subr.mxu0 0.0
      %2335 = vmatpush1.msra.mxu0 0.0
      %2336 = vmatprep.subr.mxu0 0.0
      %2337 = vmatpush1.msra.mxu0 0.0
      %2338 = vmatprep.subr.mxu0 0.0
      %2339 = vmatpush1.msra.mxu0 0.0
      %2340 = vmatprep.subr.mxu0 0.0
      %2341 = vmatpush1.msra.mxu0 0.0
      %2342 = vmatprep.subr.mxu0 0.0
      %2343 = vmatpush1.msra.mxu0 0.0
      %2344 = vmatprep.subr.mxu0 0.0
      %2345 = vmatpush1.msra.mxu0 0.0
      %2346 = vmatprep.subr.mxu0 0.0
      %2347 = vmatpush1.msra.mxu0 0.0
      %2348 = vmatprep.subr.mxu0 0.0
      %2349 = vmatpush1.msra.mxu0 0.0
      %2350 = vmatprep.subr.mxu0 0.0
      %2351 = vmatpush1.msra.mxu0 0.0
      %2352 = vmatprep.subr.mxu0 0.0
      %2353 = vmatpush1.msra.mxu0 0.0
      %2354 = vmatprep.subr.mxu0 0.0
      %2355 = vmatpush1.msra.mxu0 0.0
      %2356 = vmatprep.subr.mxu0 0.0
      %2357 = vmatpush1.msra.mxu0 0.0
      %2358 = vmatprep.subr.mxu0 0.0
      %2359 = vmatpush1.msra.mxu0 0.0
      %2360 = vmatprep.subr.mxu0 0.0
      %2361 = vmatpush1.msra.mxu0 0.0
      %2362 = vmatprep.subr.mxu0 0.0
      %2363 = vmatpush1.msra.mxu0 0.0
      %2364 = vmatprep.subr.mxu0 0.0
      %2365 = vmatpush1.msra.mxu0 0.0
      %2366 = vmatprep.subr.mxu0 0.0
      %2367 = vmatpush1.msra.mxu0 0.0
      %2368 = vmatprep.subr.mxu0 0.0
      %2369 = vmatpush1.msra.mxu0 0.0
      %2370 = vmatprep.subr.mxu0 0.0
      %2371 = vmatpush1.msra.mxu0 0.0
      %2372 = vmatprep.subr.mxu0 0.0
      %2373 = vmatpush1.msra.mxu0 0.0
      %2374 = vmatprep.subr.mxu0 0.0
      %2375 = vmatpush1.msra.mxu0 0.0
      %2376 = vmatprep.subr.mxu0 0.0
      %2377 = vmatpush1.msra.mxu0 0.0
      %2378 = vmatprep.subr.mxu0 0.0
      %2379 = vmatpush1.msra.mxu0 0.0
      %2380 = vmatprep.subr.mxu0 0.0
      %2381 = vmatpush1.msra.mxu0 0.0
      %2382 = vmatprep.subr.mxu0 0.0
      %2383 = vmatpush1.msra.mxu0 0.0
      %2384 = vmatprep.subr.mxu0 0.0
      %2385 = vmatpush1.msra.mxu0 0.0
      %2386 = vmatprep.mubr.f32.mxu0 0.0
      %2387 = vmatmul.mubr.f32.gmra.mrb[0].mxu0 %v2249
      %v2388 = vpop.f32.mrb[0].mxu0
      %v2389 = vadd.f32 0.0, %v2388
      %v2390 = vpop.f32.mrb[0].mxu0
      %v2391 = vadd.f32 0.0, %v2390
      %2392 = vdwg.mxu0
      %v2393 = vadd.f32 %v2153, %v2318
      %v2394 = vadd.f32 %v2155, %v2320
      %v2395 = vadd.f32 %v2224, %v2389
      %v2396 = vadd.f32 %v2226, %v2391
      %s2397 = scalar_lea.vmem %s8, 128
      %v2398 = vld [vmem:[%s2397] sm:$0xff]
      %v2399 = vld [vmem:[%s2397 + $0x8] sm:$0xff]
      %v2400 = vld [vmem:[%s2397 + $0x10] sm:$0xff]
      %v2401 = vld [vmem:[%s2397 + $0x18] sm:$0xff]
      %v2402 = vld [vmem:[%s2397 + $0x20] sm:$0xff]
      %v2403 = vld [vmem:[%s2397 + $0x28] sm:$0xff]
      %v2404 = vld [vmem:[%s2397 + $0x30] sm:$0xff]
      %v2405 = vld [vmem:[%s2397 + $0x38] sm:$0xff]
      %v2406 = vld [vmem:[%s2397 + $0x40] sm:$0xff]
      %v2407 = vld [vmem:[%s2397 + $0x48] sm:$0xff]
      %v2408 = vld [vmem:[%s2397 + $0x50] sm:$0xff]
      %v2409 = vld [vmem:[%s2397 + $0x58] sm:$0xff]
      %v2410 = vld [vmem:[%s2397 + $0x60] sm:$0xff]
      %v2411 = vld [vmem:[%s2397 + $0x68] sm:$0xff]
      %v2412 = vld [vmem:[%s2397 + $0x70] sm:$0xff]
      %v2413 = vld [vmem:[%s2397 + $0x78] sm:$0xff]
      %v2414 = vrot.slane %v2054, 1
      %v2415 = vsel %vm2247, %v2055, %v2414
      %v2416 = vsel %vm476, %v2415, 0
      %2418 = vmatprep.subr.mxu0 %v2399
      %2419 = vmatpush1.msra.mxu0 %v2398
      %2420 = vmatprep.subr.mxu0 %v2403
      %2421 = vmatpush1.msra.mxu0 %v2402
      %2422 = vmatprep.subr.mxu0 %v2407
      %2423 = vmatpush1.msra.mxu0 %v2406
      %2424 = vmatprep.subr.mxu0 %v2411
      %2425 = vmatpush1.msra.mxu0 %v2410
      %2426 = vmatprep.subr.mxu0 0.0
      %2427 = vmatpush1.msra.mxu0 0.0
      %2428 = vmatprep.subr.mxu0 0.0
      %2429 = vmatpush1.msra.mxu0 0.0
      %2430 = vmatprep.subr.mxu0 0.0
      %2431 = vmatpush1.msra.mxu0 0.0
      %2432 = vmatprep.subr.mxu0 0.0
      %2433 = vmatpush1.msra.mxu0 0.0
      %2434 = vmatprep.subr.mxu0 0.0
      %2435 = vmatpush1.msra.mxu0 0.0
      %2436 = vmatprep.subr.mxu0 0.0
      %2437 = vmatpush1.msra.mxu0 0.0
      %2438 = vmatprep.subr.mxu0 0.0
      %2439 = vmatpush1.msra.mxu0 0.0
      %2440 = vmatprep.subr.mxu0 0.0
      %2441 = vmatpush1.msra.mxu0 0.0
      %2442 = vmatprep.subr.mxu0 0.0
      %2443 = vmatpush1.msra.mxu0 0.0
      %2444 = vmatprep.subr.mxu0 0.0
      %2445 = vmatpush1.msra.mxu0 0.0
      %2446 = vmatprep.subr.mxu0 0.0
      %2447 = vmatpush1.msra.mxu0 0.0
      %2448 = vmatprep.subr.mxu0 0.0
      %2449 = vmatpush1.msra.mxu0 0.0
      %2450 = vmatprep.subr.mxu0 0.0
      %2451 = vmatpush1.msra.mxu0 0.0
      %2452 = vmatprep.subr.mxu0 0.0
      %2453 = vmatpush1.msra.mxu0 0.0
      %2454 = vmatprep.subr.mxu0 0.0
      %2455 = vmatpush1.msra.mxu0 0.0
      %2456 = vmatprep.subr.mxu0 0.0
      %2457 = vmatpush1.msra.mxu0 0.0
      %2458 = vmatprep.subr.mxu0 0.0
      %2459 = vmatpush1.msra.mxu0 0.0
      %2460 = vmatprep.subr.mxu0 0.0
      %2461 = vmatpush1.msra.mxu0 0.0
      %2462 = vmatprep.subr.mxu0 0.0
      %2463 = vmatpush1.msra.mxu0 0.0
      %2464 = vmatprep.subr.mxu0 0.0
      %2465 = vmatpush1.msra.mxu0 0.0
      %2466 = vmatprep.subr.mxu0 0.0
      %2467 = vmatpush1.msra.mxu0 0.0
      %2468 = vmatprep.subr.mxu0 0.0
      %2469 = vmatpush1.msra.mxu0 0.0
      %2470 = vmatprep.subr.mxu0 0.0
      %2471 = vmatpush1.msra.mxu0 0.0
      %2472 = vmatprep.subr.mxu0 0.0
      %2473 = vmatpush1.msra.mxu0 0.0
      %2474 = vmatprep.subr.mxu0 0.0
      %2475 = vmatpush1.msra.mxu0 0.0
      %2476 = vmatprep.subr.mxu0 0.0
      %2477 = vmatpush1.msra.mxu0 0.0
      %2478 = vmatprep.subr.mxu0 0.0
      %2479 = vmatpush1.msra.mxu0 0.0
      %2480 = vmatprep.subr.mxu0 0.0
      %2481 = vmatpush1.msra.mxu0 0.0
      %2482 = vmatprep.mubr.f32.mxu0 0.0
      %2483 = vmatmul.mubr.f32.gmra.mrb[0].mxu0 %v2416
      %v2484 = vpop.f32.mrb[0].mxu0
      %v2485 = vadd.f32 0.0, %v2484
      %v2486 = vpop.f32.mrb[0].mxu0
      %v2487 = vadd.f32 0.0, %v2486
      %2488 = vdwg.mxu0
      %2489 = vmatprep.subr.mxu0 %v2401
      %2490 = vmatpush1.msra.mxu0 %v2400
      %2491 = vmatprep.subr.mxu0 %v2405
      %2492 = vmatpush1.msra.mxu0 %v2404
      %2493 = vmatprep.subr.mxu0 %v2409
      %2494 = vmatpush1.msra.mxu0 %v2408
      %2495 = vmatprep.subr.mxu0 %v2413
      %2496 = vmatpush1.msra.mxu0 %v2412
      %2497 = vmatprep.subr.mxu0 0.0
      %2498 = vmatpush1.msra.mxu0 0.0
      %2499 = vmatprep.subr.mxu0 0.0
      %2500 = vmatpush1.msra.mxu0 0.0
      %2501 = vmatprep.subr.mxu0 0.0
      %2502 = vmatpush1.msra.mxu0 0.0
      %2503 = vmatprep.subr.mxu0 0.0
      %2504 = vmatpush1.msra.mxu0 0.0
      %2505 = vmatprep.subr.mxu0 0.0
      %2506 = vmatpush1.msra.mxu0 0.0
      %2507 = vmatprep.subr.mxu0 0.0
      %2508 = vmatpush1.msra.mxu0 0.0
      %2509 = vmatprep.subr.mxu0 0.0
      %2510 = vmatpush1.msra.mxu0 0.0
      %2511 = vmatprep.subr.mxu0 0.0
      %2512 = vmatpush1.msra.mxu0 0.0
      %2513 = vmatprep.subr.mxu0 0.0
      %2514 = vmatpush1.msra.mxu0 0.0
      %2515 = vmatprep.subr.mxu0 0.0
      %2516 = vmatpush1.msra.mxu0 0.0
      %2517 = vmatprep.subr.mxu0 0.0
      %2518 = vmatpush1.msra.mxu0 0.0
      %2519 = vmatprep.subr.mxu0 0.0
      %2520 = vmatpush1.msra.mxu0 0.0
      %2521 = vmatprep.subr.mxu0 0.0
      %2522 = vmatpush1.msra.mxu0 0.0
      %2523 = vmatprep.subr.mxu0 0.0
      %2524 = vmatpush1.msra.mxu0 0.0
      %2525 = vmatprep.subr.mxu0 0.0
      %2526 = vmatpush1.msra.mxu0 0.0
      %2527 = vmatprep.subr.mxu0 0.0
      %2528 = vmatpush1.msra.mxu0 0.0
      %2529 = vmatprep.subr.mxu0 0.0
      %2530 = vmatpush1.msra.mxu0 0.0
      %2531 = vmatprep.subr.mxu0 0.0
      %2532 = vmatpush1.msra.mxu0 0.0
      %2533 = vmatprep.subr.mxu0 0.0
      %2534 = vmatpush1.msra.mxu0 0.0
      %2535 = vmatprep.subr.mxu0 0.0
      %2536 = vmatpush1.msra.mxu0 0.0
      %2537 = vmatprep.subr.mxu0 0.0
      %2538 = vmatpush1.msra.mxu0 0.0
      %2539 = vmatprep.subr.mxu0 0.0
      %2540 = vmatpush1.msra.mxu0 0.0
      %2541 = vmatprep.subr.mxu0 0.0
      %2542 = vmatpush1.msra.mxu0 0.0
      %2543 = vmatprep.subr.mxu0 0.0
      %2544 = vmatpush1.msra.mxu0 0.0
      %2545 = vmatprep.subr.mxu0 0.0
      %2546 = vmatpush1.msra.mxu0 0.0
      %2547 = vmatprep.subr.mxu0 0.0
      %2548 = vmatpush1.msra.mxu0 0.0
      %2549 = vmatprep.subr.mxu0 0.0
      %2550 = vmatpush1.msra.mxu0 0.0
      %2551 = vmatprep.subr.mxu0 0.0
      %2552 = vmatpush1.msra.mxu0 0.0
      %2553 = vmatprep.mubr.f32.mxu0 0.0
      %2554 = vmatmul.mubr.f32.gmra.mrb[0].mxu0 %v2416
      %v2555 = vpop.f32.mrb[0].mxu0
      %v2556 = vadd.f32 0.0, %v2555
      %v2557 = vpop.f32.mrb[0].mxu0
      %v2558 = vadd.f32 0.0, %v2557
      %2559 = vdwg.mxu0
      %v2560 = vadd.f32 %v2393, %v2485
      %v2561 = vadd.f32 %v2394, %v2487
      %v2562 = vadd.f32 %v2395, %v2556
      %v2563 = vadd.f32 %v2396, %v2558
      %s2564 = scalar_lea.vmem %s8, 256
      %v2565 = vld [vmem:[%s2564] sm:$0xff]
      %v2566 = vld [vmem:[%s2564 + $0x8] sm:$0xff]
      %v2567 = vld [vmem:[%s2564 + $0x10] sm:$0xff]
      %v2568 = vld [vmem:[%s2564 + $0x18] sm:$0xff]
      %v2569 = vld [vmem:[%s2564 + $0x20] sm:$0xff]
      %v2570 = vld [vmem:[%s2564 + $0x28] sm:$0xff]
      %v2571 = vld [vmem:[%s2564 + $0x30] sm:$0xff]
      %v2572 = vld [vmem:[%s2564 + $0x38] sm:$0xff]
      %v2573 = vld [vmem:[%s2564 + $0x40] sm:$0xff]
      %v2574 = vld [vmem:[%s2564 + $0x48] sm:$0xff]
      %v2575 = vld [vmem:[%s2564 + $0x50] sm:$0xff]
      %v2576 = vld [vmem:[%s2564 + $0x58] sm:$0xff]
      %v2577 = vld [vmem:[%s2564 + $0x60] sm:$0xff]
      %v2578 = vld [vmem:[%s2564 + $0x68] sm:$0xff]
      %v2579 = vld [vmem:[%s2564 + $0x70] sm:$0xff]
      %v2580 = vld [vmem:[%s2564 + $0x78] sm:$0xff]
      %v2581 = vrot.slane %v2054, 2
      %v2582 = vrot.slane %v2055, 1
      %v2583 = vsel %vm2247, %v2582, %v2581
      %v2584 = vsel %vm476, %v2583, 0
      %2586 = vmatprep.subr.mxu0 %v2566
      %2587 = vmatpush1.msra.mxu0 %v2565
      %2588 = vmatprep.subr.mxu0 %v2570
      %2589 = vmatpush1.msra.mxu0 %v2569
      %2590 = vmatprep.subr.mxu0 %v2574
      %2591 = vmatpush1.msra.mxu0 %v2573
      %2592 = vmatprep.subr.mxu0 %v2578
      %2593 = vmatpush1.msra.mxu0 %v2577
      %2594 = vmatprep.subr.mxu0 0.0
      %2595 = vmatpush1.msra.mxu0 0.0
      %2596 = vmatprep.subr.mxu0 0.0
      %2597 = vmatpush1.msra.mxu0 0.0
      %2598 = vmatprep.subr.mxu0 0.0
      %2599 = vmatpush1.msra.mxu0 0.0
      %2600 = vmatprep.subr.mxu0 0.0
      %2601 = vmatpush1.msra.mxu0 0.0
      %2602 = vmatprep.subr.mxu0 0.0
      %2603 = vmatpush1.msra.mxu0 0.0
      %2604 = vmatprep.subr.mxu0 0.0
      %2605 = vmatpush1.msra.mxu0 0.0
      %2606 = vmatprep.subr.mxu0 0.0
      %2607 = vmatpush1.msra.mxu0 0.0
      %2608 = vmatprep.subr.mxu0 0.0
      %2609 = vmatpush1.msra.mxu0 0.0
      %2610 = vmatprep.subr.mxu0 0.0
      %2611 = vmatpush1.msra.mxu0 0.0
      %2612 = vmatprep.subr.mxu0 0.0
      %2613 = vmatpush1.msra.mxu0 0.0
      %2614 = vmatprep.subr.mxu0 0.0
      %2615 = vmatpush1.msra.mxu0 0.0
      %2616 = vmatprep.subr.mxu0 0.0
      %2617 = vmatpush1.msra.mxu0 0.0
      %2618 = vmatprep.subr.mxu0 0.0
      %2619 = vmatpush1.msra.mxu0 0.0
      %2620 = vmatprep.subr.mxu0 0.0
      %2621 = vmatpush1.msra.mxu0 0.0
      %2622 = vmatprep.subr.mxu0 0.0
      %2623 = vmatpush1.msra.mxu0 0.0
      %2624 = vmatprep.subr.mxu0 0.0
      %2625 = vmatpush1.msra.mxu0 0.0
      %2626 = vmatprep.subr.mxu0 0.0
      %2627 = vmatpush1.msra.mxu0 0.0
      %2628 = vmatprep.subr.mxu0 0.0
      %2629 = vmatpush1.msra.mxu0 0.0
      %2630 = vmatprep.subr.mxu0 0.0
      %2631 = vmatpush1.msra.mxu0 0.0
      %2632 = vmatprep.subr.mxu0 0.0
      %2633 = vmatpush1.msra.mxu0 0.0
      %2634 = vmatprep.subr.mxu0 0.0
      %2635 = vmatpush1.msra.mxu0 0.0
      %2636 = vmatprep.subr.mxu0 0.0
      %2637 = vmatpush1.msra.mxu0 0.0
      %2638 = vmatprep.subr.mxu0 0.0
      %2639 = vmatpush1.msra.mxu0 0.0
      %2640 = vmatprep.subr.mxu0 0.0
      %2641 = vmatpush1.msra.mxu0 0.0
      %2642 = vmatprep.subr.mxu0 0.0
      %2643 = vmatpush1.msra.mxu0 0.0
      %2644 = vmatprep.subr.mxu0 0.0
      %2645 = vmatpush1.msra.mxu0 0.0
      %2646 = vmatprep.subr.mxu0 0.0
      %2647 = vmatpush1.msra.mxu0 0.0
      %2648 = vmatprep.subr.mxu0 0.0
      %2649 = vmatpush1.msra.mxu0 0.0
      %2650 = vmatprep.mubr.f32.mxu0 0.0
      %2651 = vmatmul.mubr.f32.gmra.mrb[0].mxu0 %v2584
      %v2652 = vpop.f32.mrb[0].mxu0
      %v2653 = vadd.f32 0.0, %v2652
      %v2654 = vpop.f32.mrb[0].mxu0
      %v2655 = vadd.f32 0.0, %v2654
      %2656 = vdwg.mxu0
      %2657 = vmatprep.subr.mxu0 %v2568
      %2658 = vmatpush1.msra.mxu0 %v2567
      %2659 = vmatprep.subr.mxu0 %v2572
      %2660 = vmatpush1.msra.mxu0 %v2571
      %2661 = vmatprep.subr.mxu0 %v2576
      %2662 = vmatpush1.msra.mxu0 %v2575
      %2663 = vmatprep.subr.mxu0 %v2580
      %2664 = vmatpush1.msra.mxu0 %v2579
      %2665 = vmatprep.subr.mxu0 0.0
      %2666 = vmatpush1.msra.mxu0 0.0
      %2667 = vmatprep.subr.mxu0 0.0
      %2668 = vmatpush1.msra.mxu0 0.0
      %2669 = vmatprep.subr.mxu0 0.0
      %2670 = vmatpush1.msra.mxu0 0.0
      %2671 = vmatprep.subr.mxu0 0.0
      %2672 = vmatpush1.msra.mxu0 0.0
      %2673 = vmatprep.subr.mxu0 0.0
      %2674 = vmatpush1.msra.mxu0 0.0
      %2675 = vmatprep.subr.mxu0 0.0
      %2676 = vmatpush1.msra.mxu0 0.0
      %2677 = vmatprep.subr.mxu0 0.0
      %2678 = vmatpush1.msra.mxu0 0.0
      %2679 = vmatprep.subr.mxu0 0.0
      %2680 = vmatpush1.msra.mxu0 0.0
      %2681 = vmatprep.subr.mxu0 0.0
      %2682 = vmatpush1.msra.mxu0 0.0
      %2683 = vmatprep.subr.mxu0 0.0
      %2684 = vmatpush1.msra.mxu0 0.0
      %2685 = vmatprep.subr.mxu0 0.0
      %2686 = vmatpush1.msra.mxu0 0.0
      %2687 = vmatprep.subr.mxu0 0.0
      %2688 = vmatpush1.msra.mxu0 0.0
      %2689 = vmatprep.subr.mxu0 0.0
      %2690 = vmatpush1.msra.mxu0 0.0
      %2691 = vmatprep.subr.mxu0 0.0
      %2692 = vmatpush1.msra.mxu0 0.0
      %2693 = vmatprep.subr.mxu0 0.0
      %2694 = vmatpush1.msra.mxu0 0.0
      %2695 = vmatprep.subr.mxu0 0.0
      %2696 = vmatpush1.msra.mxu0 0.0
      %2697 = vmatprep.subr.mxu0 0.0
      %2698 = vmatpush1.msra.mxu0 0.0
      %2699 = vmatprep.subr.mxu0 0.0
      %2700 = vmatpush1.msra.mxu0 0.0
      %2701 = vmatprep.subr.mxu0 0.0
      %2702 = vmatpush1.msra.mxu0 0.0
      %2703 = vmatprep.subr.mxu0 0.0
      %2704 = vmatpush1.msra.mxu0 0.0
      %2705 = vmatprep.subr.mxu0 0.0
      %2706 = vmatpush1.msra.mxu0 0.0
      %2707 = vmatprep.subr.mxu0 0.0
      %2708 = vmatpush1.msra.mxu0 0.0
      %2709 = vmatprep.subr.mxu0 0.0
      %2710 = vmatpush1.msra.mxu0 0.0
      %2711 = vmatprep.subr.mxu0 0.0
      %2712 = vmatpush1.msra.mxu0 0.0
      %2713 = vmatprep.subr.mxu0 0.0
      %2714 = vmatpush1.msra.mxu0 0.0
      %2715 = vmatprep.subr.mxu0 0.0
      %2716 = vmatpush1.msra.mxu0 0.0
      %2717 = vmatprep.subr.mxu0 0.0
      %2718 = vmatpush1.msra.mxu0 0.0
      %2719 = vmatprep.subr.mxu0 0.0
      %2720 = vmatpush1.msra.mxu0 0.0
      %2721 = vmatprep.mubr.f32.mxu0 0.0
      %2722 = vmatmul.mubr.f32.gmra.mrb[0].mxu0 %v2584
      %v2723 = vpop.f32.mrb[0].mxu0
      %v2724 = vadd.f32 0.0, %v2723
      %v2725 = vpop.f32.mrb[0].mxu0
      %v2726 = vadd.f32 0.0, %v2725
      %2727 = vdwg.mxu0
      %v2728 = vadd.f32 %v2560, %v2653
      %v2729 = vadd.f32 %v2561, %v2655
      %v2730 = vadd.f32 %v2562, %v2724
      %v2731 = vadd.f32 %v2563, %v2726
      %s2732 = scalar_lea.vmem %s8, 384
      %v2733 = vld [vmem:[%s2732] sm:$0xff]
      %v2734 = vld [vmem:[%s2732 + $0x8] sm:$0xff]
      %v2735 = vld [vmem:[%s2732 + $0x10] sm:$0xff]
      %v2736 = vld [vmem:[%s2732 + $0x18] sm:$0xff]
      %v2737 = vld [vmem:[%s2732 + $0x20] sm:$0xff]
      %v2738 = vld [vmem:[%s2732 + $0x28] sm:$0xff]
      %v2739 = vld [vmem:[%s2732 + $0x30] sm:$0xff]
      %v2740 = vld [vmem:[%s2732 + $0x38] sm:$0xff]
      %v2741 = vld [vmem:[%s2732 + $0x40] sm:$0xff]
      %v2742 = vld [vmem:[%s2732 + $0x48] sm:$0xff]
      %v2743 = vld [vmem:[%s2732 + $0x50] sm:$0xff]
      %v2744 = vld [vmem:[%s2732 + $0x58] sm:$0xff]
      %v2745 = vld [vmem:[%s2732 + $0x60] sm:$0xff]
      %v2746 = vld [vmem:[%s2732 + $0x68] sm:$0xff]
      %v2747 = vld [vmem:[%s2732 + $0x70] sm:$0xff]
      %v2748 = vld [vmem:[%s2732 + $0x78] sm:$0xff]
      %v2749 = vrot.slane %v2054, 3
      %v2750 = vrot.slane %v2055, 2
      %v2751 = vsel %vm2247, %v2750, %v2749
      %v2752 = vsel %vm476, %v2751, 0
      %2754 = vmatprep.subr.mxu0 %v2734
      %2755 = vmatpush1.msra.mxu0 %v2733
      %2756 = vmatprep.subr.mxu0 %v2738
      %2757 = vmatpush1.msra.mxu0 %v2737
      %2758 = vmatprep.subr.mxu0 %v2742
      %2759 = vmatpush1.msra.mxu0 %v2741
      %2760 = vmatprep.subr.mxu0 %v2746
      %2761 = vmatpush1.msra.mxu0 %v2745
      %2762 = vmatprep.subr.mxu0 0.0
      %2763 = vmatpush1.msra.mxu0 0.0
      %2764 = vmatprep.subr.mxu0 0.0
      %2765 = vmatpush1.msra.mxu0 0.0
      %2766 = vmatprep.subr.mxu0 0.0
      %2767 = vmatpush1.msra.mxu0 0.0
      %2768 = vmatprep.subr.mxu0 0.0
      %2769 = vmatpush1.msra.mxu0 0.0
      %2770 = vmatprep.subr.mxu0 0.0
      %2771 = vmatpush1.msra.mxu0 0.0
      %2772 = vmatprep.subr.mxu0 0.0
      %2773 = vmatpush1.msra.mxu0 0.0
      %2774 = vmatprep.subr.mxu0 0.0
      %2775 = vmatpush1.msra.mxu0 0.0
      %2776 = vmatprep.subr.mxu0 0.0
      %2777 = vmatpush1.msra.mxu0 0.0
      %2778 = vmatprep.subr.mxu0 0.0
      %2779 = vmatpush1.msra.mxu0 0.0
      %2780 = vmatprep.subr.mxu0 0.0
      %2781 = vmatpush1.msra.mxu0 0.0
      %2782 = vmatprep.subr.mxu0 0.0
      %2783 = vmatpush1.msra.mxu0 0.0
      %2784 = vmatprep.subr.mxu0 0.0
      %2785 = vmatpush1.msra.mxu0 0.0
      %2786 = vmatprep.subr.mxu0 0.0
      %2787 = vmatpush1.msra.mxu0 0.0
      %2788 = vmatprep.subr.mxu0 0.0
      %2789 = vmatpush1.msra.mxu0 0.0
      %2790 = vmatprep.subr.mxu0 0.0
      %2791 = vmatpush1.msra.mxu0 0.0
      %2792 = vmatprep.subr.mxu0 0.0
      %2793 = vmatpush1.msra.mxu0 0.0
      %2794 = vmatprep.subr.mxu0 0.0
      %2795 = vmatpush1.msra.mxu0 0.0
      %2796 = vmatprep.subr.mxu0 0.0
      %2797 = vmatpush1.msra.mxu0 0.0
      %2798 = vmatprep.subr.mxu0 0.0
      %2799 = vmatpush1.msra.mxu0 0.0
      %2800 = vmatprep.subr.mxu0 0.0
      %2801 = vmatpush1.msra.mxu0 0.0
      %2802 = vmatprep.subr.mxu0 0.0
      %2803 = vmatpush1.msra.mxu0 0.0
      %2804 = vmatprep.subr.mxu0 0.0
      %2805 = vmatpush1.msra.mxu0 0.0
      %2806 = vmatprep.subr.mxu0 0.0
      %2807 = vmatpush1.msra.mxu0 0.0
      %2808 = vmatprep.subr.mxu0 0.0
      %2809 = vmatpush1.msra.mxu0 0.0
      %2810 = vmatprep.subr.mxu0 0.0
      %2811 = vmatpush1.msra.mxu0 0.0
      %2812 = vmatprep.subr.mxu0 0.0
      %2813 = vmatpush1.msra.mxu0 0.0
      %2814 = vmatprep.subr.mxu0 0.0
      %2815 = vmatpush1.msra.mxu0 0.0
      %2816 = vmatprep.subr.mxu0 0.0
      %2817 = vmatpush1.msra.mxu0 0.0
      %2818 = vmatprep.mubr.f32.mxu0 0.0
      %2819 = vmatmul.mubr.f32.gmra.mrb[0].mxu0 %v2752
      %v2820 = vpop.f32.mrb[0].mxu0
      %v2821 = vadd.f32 0.0, %v2820
      %v2822 = vpop.f32.mrb[0].mxu0
      %v2823 = vadd.f32 0.0, %v2822
      %2824 = vdwg.mxu0
      %2825 = vmatprep.subr.mxu0 %v2736
      %2826 = vmatpush1.msra.mxu0 %v2735
      %2827 = vmatprep.subr.mxu0 %v2740
      %2828 = vmatpush1.msra.mxu0 %v2739
      %2829 = vmatprep.subr.mxu0 %v2744
      %2830 = vmatpush1.msra.mxu0 %v2743
      %2831 = vmatprep.subr.mxu0 %v2748
      %2832 = vmatpush1.msra.mxu0 %v2747
      %2833 = vmatprep.subr.mxu0 0.0
      %2834 = vmatpush1.msra.mxu0 0.0
      %2835 = vmatprep.subr.mxu0 0.0
      %2836 = vmatpush1.msra.mxu0 0.0
      %2837 = vmatprep.subr.mxu0 0.0
      %2838 = vmatpush1.msra.mxu0 0.0
      %2839 = vmatprep.subr.mxu0 0.0
      %2840 = vmatpush1.msra.mxu0 0.0
      %2841 = vmatprep.subr.mxu0 0.0
      %2842 = vmatpush1.msra.mxu0 0.0
      %2843 = vmatprep.subr.mxu0 0.0
      %2844 = vmatpush1.msra.mxu0 0.0
      %2845 = vmatprep.subr.mxu0 0.0
      %2846 = vmatpush1.msra.mxu0 0.0
      %2847 = vmatprep.subr.mxu0 0.0
      %2848 = vmatpush1.msra.mxu0 0.0
      %2849 = vmatprep.subr.mxu0 0.0
      %2850 = vmatpush1.msra.mxu0 0.0
      %2851 = vmatprep.subr.mxu0 0.0
      %2852 = vmatpush1.msra.mxu0 0.0
      %2853 = vmatprep.subr.mxu0 0.0
      %2854 = vmatpush1.msra.mxu0 0.0
      %2855 = vmatprep.subr.mxu0 0.0
      %2856 = vmatpush1.msra.mxu0 0.0
      %2857 = vmatprep.subr.mxu0 0.0
      %2858 = vmatpush1.msra.mxu0 0.0
      %2859 = vmatprep.subr.mxu0 0.0
      %2860 = vmatpush1.msra.mxu0 0.0
      %2861 = vmatprep.subr.mxu0 0.0
      %2862 = vmatpush1.msra.mxu0 0.0
      %2863 = vmatprep.subr.mxu0 0.0
      %2864 = vmatpush1.msra.mxu0 0.0
      %2865 = vmatprep.subr.mxu0 0.0
      %2866 = vmatpush1.msra.mxu0 0.0
      %2867 = vmatprep.subr.mxu0 0.0
      %2868 = vmatpush1.msra.mxu0 0.0
      %2869 = vmatprep.subr.mxu0 0.0
      %2870 = vmatpush1.msra.mxu0 0.0
      %2871 = vmatprep.subr.mxu0 0.0
      %2872 = vmatpush1.msra.mxu0 0.0
      %2873 = vmatprep.subr.mxu0 0.0
      %2874 = vmatpush1.msra.mxu0 0.0
      %2875 = vmatprep.subr.mxu0 0.0
      %2876 = vmatpush1.msra.mxu0 0.0
      %2877 = vmatprep.subr.mxu0 0.0
      %2878 = vmatpush1.msra.mxu0 0.0
      %2879 = vmatprep.subr.mxu0 0.0
      %2880 = vmatpush1.msra.mxu0 0.0
      %2881 = vmatprep.subr.mxu0 0.0
      %2882 = vmatpush1.msra.mxu0 0.0
      %2883 = vmatprep.subr.mxu0 0.0
      %2884 = vmatpush1.msra.mxu0 0.0
      %2885 = vmatprep.subr.mxu0 0.0
      %2886 = vmatpush1.msra.mxu0 0.0
      %2887 = vmatprep.subr.mxu0 0.0
      %2888 = vmatpush1.msra.mxu0 0.0
      %2889 = vmatprep.mubr.f32.mxu0 0.0
      %2890 = vmatmul.mubr.f32.gmra.mrb[0].mxu0 %v2752
      %v2891 = vpop.f32.mrb[0].mxu0
      %v2892 = vadd.f32 0.0, %v2891
      %v2893 = vpop.f32.mrb[0].mxu0
      %v2894 = vadd.f32 0.0, %v2893
      %2895 = vdwg.mxu0
      %v2896 = vadd.f32 %v2728, %v2821
      %v2897 = vadd.f32 %v2729, %v2823
      %v2898 = vadd.f32 %v2730, %v2892
      %v2899 = vadd.f32 %v2731, %v2894
      %s2900 = scalar_lea.vmem %s8, 512
      %v2901 = vld [vmem:[%s2900] sm:$0xff]
      %v2902 = vld [vmem:[%s2900 + $0x8] sm:$0xff]
      %v2903 = vld [vmem:[%s2900 + $0x10] sm:$0xff]
      %v2904 = vld [vmem:[%s2900 + $0x18] sm:$0xff]
      %v2905 = vld [vmem:[%s2900 + $0x20] sm:$0xff]
      %v2906 = vld [vmem:[%s2900 + $0x28] sm:$0xff]
      %v2907 = vld [vmem:[%s2900 + $0x30] sm:$0xff]
      %v2908 = vld [vmem:[%s2900 + $0x38] sm:$0xff]
      %v2909 = vld [vmem:[%s2900 + $0x40] sm:$0xff]
      %v2910 = vld [vmem:[%s2900 + $0x48] sm:$0xff]
      %v2911 = vld [vmem:[%s2900 + $0x50] sm:$0xff]
      %v2912 = vld [vmem:[%s2900 + $0x58] sm:$0xff]
      %v2913 = vld [vmem:[%s2900 + $0x60] sm:$0xff]
      %v2914 = vld [vmem:[%s2900 + $0x68] sm:$0xff]
      %v2915 = vld [vmem:[%s2900 + $0x70] sm:$0xff]
      %v2916 = vld [vmem:[%s2900 + $0x78] sm:$0xff]
      %v2917 = vrot.slane %v2054, 4
      %v2918 = vrot.slane %v2055, 3
      %v2919 = vsel %vm2247, %v2918, %v2917
      %v2920 = vsel %vm476, %v2919, 0
      %2922 = vmatprep.subr.mxu0 %v2902
      %2923 = vmatpush1.msra.mxu0 %v2901
      %2924 = vmatprep.subr.mxu0 %v2906
      %2925 = vmatpush1.msra.mxu0 %v2905
      %2926 = vmatprep.subr.mxu0 %v2910
      %2927 = vmatpush1.msra.mxu0 %v2909
      %2928 = vmatprep.subr.mxu0 %v2914
      %2929 = vmatpush1.msra.mxu0 %v2913
      %2930 = vmatprep.subr.mxu0 0.0
      %2931 = vmatpush1.msra.mxu0 0.0
      %2932 = vmatprep.subr.mxu0 0.0
      %2933 = vmatpush1.msra.mxu0 0.0
      %2934 = vmatprep.subr.mxu0 0.0
      %2935 = vmatpush1.msra.mxu0 0.0
      %2936 = vmatprep.subr.mxu0 0.0
      %2937 = vmatpush1.msra.mxu0 0.0
      %2938 = vmatprep.subr.mxu0 0.0
      %2939 = vmatpush1.msra.mxu0 0.0
      %2940 = vmatprep.subr.mxu0 0.0
      %2941 = vmatpush1.msra.mxu0 0.0
      %2942 = vmatprep.subr.mxu0 0.0
      %2943 = vmatpush1.msra.mxu0 0.0
      %2944 = vmatprep.subr.mxu0 0.0
      %2945 = vmatpush1.msra.mxu0 0.0
      %2946 = vmatprep.subr.mxu0 0.0
      %2947 = vmatpush1.msra.mxu0 0.0
      %2948 = vmatprep.subr.mxu0 0.0
      %2949 = vmatpush1.msra.mxu0 0.0
      %2950 = vmatprep.subr.mxu0 0.0
      %2951 = vmatpush1.msra.mxu0 0.0
      %2952 = vmatprep.subr.mxu0 0.0
      %2953 = vmatpush1.msra.mxu0 0.0
      %2954 = vmatprep.subr.mxu0 0.0
      %2955 = vmatpush1.msra.mxu0 0.0
      %2956 = vmatprep.subr.mxu0 0.0
      %2957 = vmatpush1.msra.mxu0 0.0
      %2958 = vmatprep.subr.mxu0 0.0
      %2959 = vmatpush1.msra.mxu0 0.0
      %2960 = vmatprep.subr.mxu0 0.0
      %2961 = vmatpush1.msra.mxu0 0.0
      %2962 = vmatprep.subr.mxu0 0.0
      %2963 = vmatpush1.msra.mxu0 0.0
      %2964 = vmatprep.subr.mxu0 0.0
      %2965 = vmatpush1.msra.mxu0 0.0
      %2966 = vmatprep.subr.mxu0 0.0
      %2967 = vmatpush1.msra.mxu0 0.0
      %2968 = vmatprep.subr.mxu0 0.0
      %2969 = vmatpush1.msra.mxu0 0.0
      %2970 = vmatprep.subr.mxu0 0.0
      %2971 = vmatpush1.msra.mxu0 0.0
      %2972 = vmatprep.subr.mxu0 0.0
      %2973 = vmatpush1.msra.mxu0 0.0
      %2974 = vmatprep.subr.mxu0 0.0
      %2975 = vmatpush1.msra.mxu0 0.0
      %2976 = vmatprep.subr.mxu0 0.0
      %2977 = vmatpush1.msra.mxu0 0.0
      %2978 = vmatprep.subr.mxu0 0.0
      %2979 = vmatpush1.msra.mxu0 0.0
      %2980 = vmatprep.subr.mxu0 0.0
      %2981 = vmatpush1.msra.mxu0 0.0
      %2982 = vmatprep.subr.mxu0 0.0
      %2983 = vmatpush1.msra.mxu0 0.0
      %2984 = vmatprep.subr.mxu0 0.0
      %2985 = vmatpush1.msra.mxu0 0.0
      %2986 = vmatprep.mubr.f32.mxu0 0.0
      %2987 = vmatmul.mubr.f32.gmra.mrb[0].mxu0 %v2920
      %v2988 = vpop.f32.mrb[0].mxu0
      %v2989 = vadd.f32 0.0, %v2988
      %v2990 = vpop.f32.mrb[0].mxu0
      %v2991 = vadd.f32 0.0, %v2990
      %2992 = vdwg.mxu0
      %2993 = vmatprep.subr.mxu0 %v2904
      %2994 = vmatpush1.msra.mxu0 %v2903
      %2995 = vmatprep.subr.mxu0 %v2908
      %2996 = vmatpush1.msra.mxu0 %v2907
      %2997 = vmatprep.subr.mxu0 %v2912
      %2998 = vmatpush1.msra.mxu0 %v2911
      %2999 = vmatprep.subr.mxu0 %v2916
      %3000 = vmatpush1.msra.mxu0 %v2915
      %3001 = vmatprep.subr.mxu0 0.0
      %3002 = vmatpush1.msra.mxu0 0.0
      %3003 = vmatprep.subr.mxu0 0.0
      %3004 = vmatpush1.msra.mxu0 0.0
      %3005 = vmatprep.subr.mxu0 0.0
      %3006 = vmatpush1.msra.mxu0 0.0
      %3007 = vmatprep.subr.mxu0 0.0
      %3008 = vmatpush1.msra.mxu0 0.0
      %3009 = vmatprep.subr.mxu0 0.0
      %3010 = vmatpush1.msra.mxu0 0.0
      %3011 = vmatprep.subr.mxu0 0.0
      %3012 = vmatpush1.msra.mxu0 0.0
      %3013 = vmatprep.subr.mxu0 0.0
      %3014 = vmatpush1.msra.mxu0 0.0
      %3015 = vmatprep.subr.mxu0 0.0
      %3016 = vmatpush1.msra.mxu0 0.0
      %3017 = vmatprep.subr.mxu0 0.0
      %3018 = vmatpush1.msra.mxu0 0.0
      %3019 = vmatprep.subr.mxu0 0.0
      %3020 = vmatpush1.msra.mxu0 0.0
      %3021 = vmatprep.subr.mxu0 0.0
      %3022 = vmatpush1.msra.mxu0 0.0
      %3023 = vmatprep.subr.mxu0 0.0
      %3024 = vmatpush1.msra.mxu0 0.0
      %3025 = vmatprep.subr.mxu0 0.0
      %3026 = vmatpush1.msra.mxu0 0.0
      %3027 = vmatprep.subr.mxu0 0.0
      %3028 = vmatpush1.msra.mxu0 0.0
      %3029 = vmatprep.subr.mxu0 0.0
      %3030 = vmatpush1.msra.mxu0 0.0
      %3031 = vmatprep.subr.mxu0 0.0
      %3032 = vmatpush1.msra.mxu0 0.0
      %3033 = vmatprep.subr.mxu0 0.0
      %3034 = vmatpush1.msra.mxu0 0.0
      %3035 = vmatprep.subr.mxu0 0.0
      %3036 = vmatpush1.msra.mxu0 0.0
      %3037 = vmatprep.subr.mxu0 0.0
      %3038 = vmatpush1.msra.mxu0 0.0
      %3039 = vmatprep.subr.mxu0 0.0
      %3040 = vmatpush1.msra.mxu0 0.0
      %3041 = vmatprep.subr.mxu0 0.0
      %3042 = vmatpush1.msra.mxu0 0.0
      %3043 = vmatprep.subr.mxu0 0.0
      %3044 = vmatpush1.msra.mxu0 0.0
      %3045 = vmatprep.subr.mxu0 0.0
      %3046 = vmatpush1.msra.mxu0 0.0
      %3047 = vmatprep.subr.mxu0 0.0
      %3048 = vmatpush1.msra.mxu0 0.0
      %3049 = vmatprep.subr.mxu0 0.0
      %3050 = vmatpush1.msra.mxu0 0.0
      %3051 = vmatprep.subr.mxu0 0.0
      %3052 = vmatpush1.msra.mxu0 0.0
      %3053 = vmatprep.subr.mxu0 0.0
      %3054 = vmatpush1.msra.mxu0 0.0
      %3055 = vmatprep.subr.mxu0 0.0
      %3056 = vmatpush1.msra.mxu0 0.0
      %3057 = vmatprep.mubr.f32.mxu0 0.0
      %3058 = vmatmul.mubr.f32.gmra.mrb[0].mxu0 %v2920
      %v3059 = vpop.f32.mrb[0].mxu0
      %v3060 = vadd.f32 0.0, %v3059
      %v3061 = vpop.f32.mrb[0].mxu0
      %v3062 = vadd.f32 0.0, %v3061
      %3063 = vdwg.mxu0
      %v3064 = vadd.f32 %v2896, %v2989
      %v3065 = vadd.f32 %v2897, %v2991
      %v3066 = vadd.f32 %v2898, %v3060
      %v3067 = vadd.f32 %v2899, %v3062
      %s3068 = scalar_lea.vmem %s8, 640
      %v3069 = vld [vmem:[%s3068] sm:$0xff]
      %v3070 = vld [vmem:[%s3068 + $0x8] sm:$0xff]
      %v3071 = vld [vmem:[%s3068 + $0x10] sm:$0xff]
      %v3072 = vld [vmem:[%s3068 + $0x18] sm:$0xff]
      %v3073 = vld [vmem:[%s3068 + $0x20] sm:$0xff]
      %v3074 = vld [vmem:[%s3068 + $0x28] sm:$0xff]
      %v3075 = vld [vmem:[%s3068 + $0x30] sm:$0xff]
      %v3076 = vld [vmem:[%s3068 + $0x38] sm:$0xff]
      %v3077 = vld [vmem:[%s3068 + $0x40] sm:$0xff]
      %v3078 = vld [vmem:[%s3068 + $0x48] sm:$0xff]
      %v3079 = vld [vmem:[%s3068 + $0x50] sm:$0xff]
      %v3080 = vld [vmem:[%s3068 + $0x58] sm:$0xff]
      %v3081 = vld [vmem:[%s3068 + $0x60] sm:$0xff]
      %v3082 = vld [vmem:[%s3068 + $0x68] sm:$0xff]
      %v3083 = vld [vmem:[%s3068 + $0x70] sm:$0xff]
      %v3084 = vld [vmem:[%s3068 + $0x78] sm:$0xff]
      %v3085 = vrot.slane %v2054, 5
      %v3086 = vrot.slane %v2055, 4
      %v3087 = vsel %vm2247, %v3086, %v3085
      %v3088 = vsel %vm476, %v3087, 0
      %3090 = vmatprep.subr.mxu0 %v3070
      %3091 = vmatpush1.msra.mxu0 %v3069
      %3092 = vmatprep.subr.mxu0 %v3074
      %3093 = vmatpush1.msra.mxu0 %v3073
      %3094 = vmatprep.subr.mxu0 %v3078
      %3095 = vmatpush1.msra.mxu0 %v3077
      %3096 = vmatprep.subr.mxu0 %v3082
      %3097 = vmatpush1.msra.mxu0 %v3081
      %3098 = vmatprep.subr.mxu0 0.0
      %3099 = vmatpush1.msra.mxu0 0.0
      %3100 = vmatprep.subr.mxu0 0.0
      %3101 = vmatpush1.msra.mxu0 0.0
      %3102 = vmatprep.subr.mxu0 0.0
      %3103 = vmatpush1.msra.mxu0 0.0
      %3104 = vmatprep.subr.mxu0 0.0
      %3105 = vmatpush1.msra.mxu0 0.0
      %3106 = vmatprep.subr.mxu0 0.0
      %3107 = vmatpush1.msra.mxu0 0.0
      %3108 = vmatprep.subr.mxu0 0.0
      %3109 = vmatpush1.msra.mxu0 0.0
      %3110 = vmatprep.subr.mxu0 0.0
      %3111 = vmatpush1.msra.mxu0 0.0
      %3112 = vmatprep.subr.mxu0 0.0
      %3113 = vmatpush1.msra.mxu0 0.0
      %3114 = vmatprep.subr.mxu0 0.0
      %3115 = vmatpush1.msra.mxu0 0.0
      %3116 = vmatprep.subr.mxu0 0.0
      %3117 = vmatpush1.msra.mxu0 0.0
      %3118 = vmatprep.subr.mxu0 0.0
      %3119 = vmatpush1.msra.mxu0 0.0
      %3120 = vmatprep.subr.mxu0 0.0
      %3121 = vmatpush1.msra.mxu0 0.0
      %3122 = vmatprep.subr.mxu0 0.0
      %3123 = vmatpush1.msra.mxu0 0.0
      %3124 = vmatprep.subr.mxu0 0.0
      %3125 = vmatpush1.msra.mxu0 0.0
      %3126 = vmatprep.subr.mxu0 0.0
      %3127 = vmatpush1.msra.mxu0 0.0
      %3128 = vmatprep.subr.mxu0 0.0
      %3129 = vmatpush1.msra.mxu0 0.0
      %3130 = vmatprep.subr.mxu0 0.0
      %3131 = vmatpush1.msra.mxu0 0.0
      %3132 = vmatprep.subr.mxu0 0.0
      %3133 = vmatpush1.msra.mxu0 0.0
      %3134 = vmatprep.subr.mxu0 0.0
      %3135 = vmatpush1.msra.mxu0 0.0
      %3136 = vmatprep.subr.mxu0 0.0
      %3137 = vmatpush1.msra.mxu0 0.0
      %3138 = vmatprep.subr.mxu0 0.0
      %3139 = vmatpush1.msra.mxu0 0.0
      %3140 = vmatprep.subr.mxu0 0.0
      %3141 = vmatpush1.msra.mxu0 0.0
      %3142 = vmatprep.subr.mxu0 0.0
      %3143 = vmatpush1.msra.mxu0 0.0
      %3144 = vmatprep.subr.mxu0 0.0
      %3145 = vmatpush1.msra.mxu0 0.0
      %3146 = vmatprep.subr.mxu0 0.0
      %3147 = vmatpush1.msra.mxu0 0.0
      %3148 = vmatprep.subr.mxu0 0.0
      %3149 = vmatpush1.msra.mxu0 0.0
      %3150 = vmatprep.subr.mxu0 0.0
      %3151 = vmatpush1.msra.mxu0 0.0
      %3152 = vmatprep.subr.mxu0 0.0
      %3153 = vmatpush1.msra.mxu0 0.0
      %3154 = vmatprep.mubr.f32.mxu0 0.0
      %3155 = vmatmul.mubr.f32.gmra.mrb[0].mxu0 %v3088
      %v3156 = vpop.f32.mrb[0].mxu0
      %v3157 = vadd.f32 0.0, %v3156
      %v3158 = vpop.f32.mrb[0].mxu0
      %v3159 = vadd.f32 0.0, %v3158
      %3160 = vdwg.mxu0
      %3161 = vmatprep.subr.mxu0 %v3072
      %3162 = vmatpush1.msra.mxu0 %v3071
      %3163 = vmatprep.subr.mxu0 %v3076
      %3164 = vmatpush1.msra.mxu0 %v3075
      %3165 = vmatprep.subr.mxu0 %v3080
      %3166 = vmatpush1.msra.mxu0 %v3079
      %3167 = vmatprep.subr.mxu0 %v3084
      %3168 = vmatpush1.msra.mxu0 %v3083
      %3169 = vmatprep.subr.mxu0 0.0
      %3170 = vmatpush1.msra.mxu0 0.0
      %3171 = vmatprep.subr.mxu0 0.0
      %3172 = vmatpush1.msra.mxu0 0.0
      %3173 = vmatprep.subr.mxu0 0.0
      %3174 = vmatpush1.msra.mxu0 0.0
      %3175 = vmatprep.subr.mxu0 0.0
      %3176 = vmatpush1.msra.mxu0 0.0
      %3177 = vmatprep.subr.mxu0 0.0
      %3178 = vmatpush1.msra.mxu0 0.0
      %3179 = vmatprep.subr.mxu0 0.0
      %3180 = vmatpush1.msra.mxu0 0.0
      %3181 = vmatprep.subr.mxu0 0.0
      %3182 = vmatpush1.msra.mxu0 0.0
      %3183 = vmatprep.subr.mxu0 0.0
      %3184 = vmatpush1.msra.mxu0 0.0
      %3185 = vmatprep.subr.mxu0 0.0
      %3186 = vmatpush1.msra.mxu0 0.0
      %3187 = vmatprep.subr.mxu0 0.0
      %3188 = vmatpush1.msra.mxu0 0.0
      %3189 = vmatprep.subr.mxu0 0.0
      %3190 = vmatpush1.msra.mxu0 0.0
      %3191 = vmatprep.subr.mxu0 0.0
      %3192 = vmatpush1.msra.mxu0 0.0
      %3193 = vmatprep.subr.mxu0 0.0
      %3194 = vmatpush1.msra.mxu0 0.0
      %3195 = vmatprep.subr.mxu0 0.0
      %3196 = vmatpush1.msra.mxu0 0.0
      %3197 = vmatprep.subr.mxu0 0.0
      %3198 = vmatpush1.msra.mxu0 0.0
      %3199 = vmatprep.subr.mxu0 0.0
      %3200 = vmatpush1.msra.mxu0 0.0
      %3201 = vmatprep.subr.mxu0 0.0
      %3202 = vmatpush1.msra.mxu0 0.0
      %3203 = vmatprep.subr.mxu0 0.0
      %3204 = vmatpush1.msra.mxu0 0.0
      %3205 = vmatprep.subr.mxu0 0.0
      %3206 = vmatpush1.msra.mxu0 0.0
      %3207 = vmatprep.subr.mxu0 0.0
      %3208 = vmatpush1.msra.mxu0 0.0
      %3209 = vmatprep.subr.mxu0 0.0
      %3210 = vmatpush1.msra.mxu0 0.0
      %3211 = vmatprep.subr.mxu0 0.0
      %3212 = vmatpush1.msra.mxu0 0.0
      %3213 = vmatprep.subr.mxu0 0.0
      %3214 = vmatpush1.msra.mxu0 0.0
      %3215 = vmatprep.subr.mxu0 0.0
      %3216 = vmatpush1.msra.mxu0 0.0
      %3217 = vmatprep.subr.mxu0 0.0
      %3218 = vmatpush1.msra.mxu0 0.0
      %3219 = vmatprep.subr.mxu0 0.0
      %3220 = vmatpush1.msra.mxu0 0.0
      %3221 = vmatprep.subr.mxu0 0.0
      %3222 = vmatpush1.msra.mxu0 0.0
      %3223 = vmatprep.subr.mxu0 0.0
      %3224 = vmatpush1.msra.mxu0 0.0
      %3225 = vmatprep.mubr.f32.mxu0 0.0
      %3226 = vmatmul.mubr.f32.gmra.mrb[0].mxu0 %v3088
      %v3227 = vpop.f32.mrb[0].mxu0
      %v3228 = vadd.f32 0.0, %v3227
      %v3229 = vpop.f32.mrb[0].mxu0
      %v3230 = vadd.f32 0.0, %v3229
      %3231 = vdwg.mxu0
      %v3232 = vadd.f32 %v3064, %v3157
      %v3233 = vadd.f32 %v3065, %v3159
      %v3234 = vadd.f32 %v3066, %v3228
      %v3235 = vadd.f32 %v3067, %v3230
      %s3236 = scalar_lea.vmem %s8, 768
      %v3237 = vld [vmem:[%s3236] sm:$0xff]
      %v3238 = vld [vmem:[%s3236 + $0x8] sm:$0xff]
      %v3239 = vld [vmem:[%s3236 + $0x10] sm:$0xff]
      %v3240 = vld [vmem:[%s3236 + $0x18] sm:$0xff]
      %v3241 = vld [vmem:[%s3236 + $0x20] sm:$0xff]
      %v3242 = vld [vmem:[%s3236 + $0x28] sm:$0xff]
      %v3243 = vld [vmem:[%s3236 + $0x30] sm:$0xff]
      %v3244 = vld [vmem:[%s3236 + $0x38] sm:$0xff]
      %v3245 = vld [vmem:[%s3236 + $0x40] sm:$0xff]
      %v3246 = vld [vmem:[%s3236 + $0x48] sm:$0xff]
      %v3247 = vld [vmem:[%s3236 + $0x50] sm:$0xff]
      %v3248 = vld [vmem:[%s3236 + $0x58] sm:$0xff]
      %v3249 = vld [vmem:[%s3236 + $0x60] sm:$0xff]
      %v3250 = vld [vmem:[%s3236 + $0x68] sm:$0xff]
      %v3251 = vld [vmem:[%s3236 + $0x70] sm:$0xff]
      %v3252 = vld [vmem:[%s3236 + $0x78] sm:$0xff]
      %v3253 = vrot.slane %v2054, 6
      %v3254 = vrot.slane %v2055, 5
      %v3255 = vsel %vm2247, %v3254, %v3253
      %v3256 = vsel %vm476, %v3255, 0
      %3258 = vmatprep.subr.mxu0 %v3238
      %3259 = vmatpush1.msra.mxu0 %v3237
      %3260 = vmatprep.subr.mxu0 %v3242
      %3261 = vmatpush1.msra.mxu0 %v3241
      %3262 = vmatprep.subr.mxu0 %v3246
      %3263 = vmatpush1.msra.mxu0 %v3245
      %3264 = vmatprep.subr.mxu0 %v3250
      %3265 = vmatpush1.msra.mxu0 %v3249
      %3266 = vmatprep.subr.mxu0 0.0
      %3267 = vmatpush1.msra.mxu0 0.0
      %3268 = vmatprep.subr.mxu0 0.0
      %3269 = vmatpush1.msra.mxu0 0.0
      %3270 = vmatprep.subr.mxu0 0.0
      %3271 = vmatpush1.msra.mxu0 0.0
      %3272 = vmatprep.subr.mxu0 0.0
      %3273 = vmatpush1.msra.mxu0 0.0
      %3274 = vmatprep.subr.mxu0 0.0
      %3275 = vmatpush1.msra.mxu0 0.0
      %3276 = vmatprep.subr.mxu0 0.0
      %3277 = vmatpush1.msra.mxu0 0.0
      %3278 = vmatprep.subr.mxu0 0.0
      %3279 = vmatpush1.msra.mxu0 0.0
      %3280 = vmatprep.subr.mxu0 0.0
      %3281 = vmatpush1.msra.mxu0 0.0
      %3282 = vmatprep.subr.mxu0 0.0
      %3283 = vmatpush1.msra.mxu0 0.0
      %3284 = vmatprep.subr.mxu0 0.0
      %3285 = vmatpush1.msra.mxu0 0.0
      %3286 = vmatprep.subr.mxu0 0.0
      %3287 = vmatpush1.msra.mxu0 0.0
      %3288 = vmatprep.subr.mxu0 0.0
      %3289 = vmatpush1.msra.mxu0 0.0
      %3290 = vmatprep.subr.mxu0 0.0
      %3291 = vmatpush1.msra.mxu0 0.0
      %3292 = vmatprep.subr.mxu0 0.0
      %3293 = vmatpush1.msra.mxu0 0.0
      %3294 = vmatprep.subr.mxu0 0.0
      %3295 = vmatpush1.msra.mxu0 0.0
      %3296 = vmatprep.subr.mxu0 0.0
      %3297 = vmatpush1.msra.mxu0 0.0
      %3298 = vmatprep.subr.mxu0 0.0
      %3299 = vmatpush1.msra.mxu0 0.0
      %3300 = vmatprep.subr.mxu0 0.0
      %3301 = vmatpush1.msra.mxu0 0.0
      %3302 = vmatprep.subr.mxu0 0.0
      %3303 = vmatpush1.msra.mxu0 0.0
      %3304 = vmatprep.subr.mxu0 0.0
      %3305 = vmatpush1.msra.mxu0 0.0
      %3306 = vmatprep.subr.mxu0 0.0
      %3307 = vmatpush1.msra.mxu0 0.0
      %3308 = vmatprep.subr.mxu0 0.0
      %3309 = vmatpush1.msra.mxu0 0.0
      %3310 = vmatprep.subr.mxu0 0.0
      %3311 = vmatpush1.msra.mxu0 0.0
      %3312 = vmatprep.subr.mxu0 0.0
      %3313 = vmatpush1.msra.mxu0 0.0
      %3314 = vmatprep.subr.mxu0 0.0
      %3315 = vmatpush1.msra.mxu0 0.0
      %3316 = vmatprep.subr.mxu0 0.0
      %3317 = vmatpush1.msra.mxu0 0.0
      %3318 = vmatprep.subr.mxu0 0.0
      %3319 = vmatpush1.msra.mxu0 0.0
      %3320 = vmatprep.subr.mxu0 0.0
      %3321 = vmatpush1.msra.mxu0 0.0
      %3322 = vmatprep.mubr.f32.mxu0 0.0
      %3323 = vmatmul.mubr.f32.gmra.mrb[0].mxu0 %v3256
      %v3324 = vpop.f32.mrb[0].mxu0
      %v3325 = vadd.f32 0.0, %v3324
      %v3326 = vpop.f32.mrb[0].mxu0
      %v3327 = vadd.f32 0.0, %v3326
      %3328 = vdwg.mxu0
      %3329 = vmatprep.subr.mxu0 %v3240
      %3330 = vmatpush1.msra.mxu0 %v3239
      %3331 = vmatprep.subr.mxu0 %v3244
      %3332 = vmatpush1.msra.mxu0 %v3243
      %3333 = vmatprep.subr.mxu0 %v3248
      %3334 = vmatpush1.msra.mxu0 %v3247
      %3335 = vmatprep.subr.mxu0 %v3252
      %3336 = vmatpush1.msra.mxu0 %v3251
      %3337 = vmatprep.subr.mxu0 0.0
      %3338 = vmatpush1.msra.mxu0 0.0
      %3339 = vmatprep.subr.mxu0 0.0
      %3340 = vmatpush1.msra.mxu0 0.0
      %3341 = vmatprep.subr.mxu0 0.0
      %3342 = vmatpush1.msra.mxu0 0.0
      %3343 = vmatprep.subr.mxu0 0.0
      %3344 = vmatpush1.msra.mxu0 0.0
      %3345 = vmatprep.subr.mxu0 0.0
      %3346 = vmatpush1.msra.mxu0 0.0
      %3347 = vmatprep.subr.mxu0 0.0
      %3348 = vmatpush1.msra.mxu0 0.0
      %3349 = vmatprep.subr.mxu0 0.0
      %3350 = vmatpush1.msra.mxu0 0.0
      %3351 = vmatprep.subr.mxu0 0.0
      %3352 = vmatpush1.msra.mxu0 0.0
      %3353 = vmatprep.subr.mxu0 0.0
      %3354 = vmatpush1.msra.mxu0 0.0
      %3355 = vmatprep.subr.mxu0 0.0
      %3356 = vmatpush1.msra.mxu0 0.0
      %3357 = vmatprep.subr.mxu0 0.0
      %3358 = vmatpush1.msra.mxu0 0.0
      %3359 = vmatprep.subr.mxu0 0.0
      %3360 = vmatpush1.msra.mxu0 0.0
      %3361 = vmatprep.subr.mxu0 0.0
      %3362 = vmatpush1.msra.mxu0 0.0
      %3363 = vmatprep.subr.mxu0 0.0
      %3364 = vmatpush1.msra.mxu0 0.0
      %3365 = vmatprep.subr.mxu0 0.0
      %3366 = vmatpush1.msra.mxu0 0.0
      %3367 = vmatprep.subr.mxu0 0.0
      %3368 = vmatpush1.msra.mxu0 0.0
      %3369 = vmatprep.subr.mxu0 0.0
      %3370 = vmatpush1.msra.mxu0 0.0
      %3371 = vmatprep.subr.mxu0 0.0
      %3372 = vmatpush1.msra.mxu0 0.0
      %3373 = vmatprep.subr.mxu0 0.0
      %3374 = vmatpush1.msra.mxu0 0.0
      %3375 = vmatprep.subr.mxu0 0.0
      %3376 = vmatpush1.msra.mxu0 0.0
      %3377 = vmatprep.subr.mxu0 0.0
      %3378 = vmatpush1.msra.mxu0 0.0
      %3379 = vmatprep.subr.mxu0 0.0
      %3380 = vmatpush1.msra.mxu0 0.0
      %3381 = vmatprep.subr.mxu0 0.0
      %3382 = vmatpush1.msra.mxu0 0.0
      %3383 = vmatprep.subr.mxu0 0.0
      %3384 = vmatpush1.msra.mxu0 0.0
      %3385 = vmatprep.subr.mxu0 0.0
      %3386 = vmatpush1.msra.mxu0 0.0
      %3387 = vmatprep.subr.mxu0 0.0
      %3388 = vmatpush1.msra.mxu0 0.0
      %3389 = vmatprep.subr.mxu0 0.0
      %3390 = vmatpush1.msra.mxu0 0.0
      %3391 = vmatprep.subr.mxu0 0.0
      %3392 = vmatpush1.msra.mxu0 0.0
      %3393 = vmatprep.mubr.f32.mxu0 0.0
      %3394 = vmatmul.mubr.f32.gmra.mrb[0].mxu0 %v3256
      %v3395 = vpop.f32.mrb[0].mxu0
      %v3396 = vadd.f32 0.0, %v3395
      %v3397 = vpop.f32.mrb[0].mxu0
      %v3398 = vadd.f32 0.0, %v3397
      %3399 = vdwg.mxu0
      %v3400 = vadd.f32 %v3232, %v3325
      %v3401 = vadd.f32 %v3233, %v3327
      %v3402 = vadd.f32 %v3234, %v3396
      %v3403 = vadd.f32 %v3235, %v3398
      %s3404 = scalar_lea.vmem %s8, 896
      %v3405 = vld [vmem:[%s3404] sm:$0xff]
      %v3406 = vld [vmem:[%s3404 + $0x8] sm:$0xff]
      %v3407 = vld [vmem:[%s3404 + $0x10] sm:$0xff]
      %v3408 = vld [vmem:[%s3404 + $0x18] sm:$0xff]
      %v3409 = vld [vmem:[%s3404 + $0x20] sm:$0xff]
      %v3410 = vld [vmem:[%s3404 + $0x28] sm:$0xff]
      %v3411 = vld [vmem:[%s3404 + $0x30] sm:$0xff]
      %v3412 = vld [vmem:[%s3404 + $0x38] sm:$0xff]
      %v3413 = vld [vmem:[%s3404 + $0x40] sm:$0xff]
      %v3414 = vld [vmem:[%s3404 + $0x48] sm:$0xff]
      %v3415 = vld [vmem:[%s3404 + $0x50] sm:$0xff]
      %v3416 = vld [vmem:[%s3404 + $0x58] sm:$0xff]
      %v3417 = vld [vmem:[%s3404 + $0x60] sm:$0xff]
      %v3418 = vld [vmem:[%s3404 + $0x68] sm:$0xff]
      %v3419 = vld [vmem:[%s3404 + $0x70] sm:$0xff]
      %v3420 = vld [vmem:[%s3404 + $0x78] sm:$0xff]
      %v3421 = vrot.slane %v2054, 7
      %v3422 = vrot.slane %v2055, 6
      %v3423 = vsel %vm2247, %v3422, %v3421
      %v3424 = vsel %vm476, %v3423, 0
      %3426 = vmatprep.subr.mxu0 %v3406
      %3427 = vmatpush1.msra.mxu0 %v3405
      %3428 = vmatprep.subr.mxu0 %v3410
      %3429 = vmatpush1.msra.mxu0 %v3409
      %3430 = vmatprep.subr.mxu0 %v3414
      %3431 = vmatpush1.msra.mxu0 %v3413
      %3432 = vmatprep.subr.mxu0 %v3418
      %3433 = vmatpush1.msra.mxu0 %v3417
      %3434 = vmatprep.subr.mxu0 0.0
      %3435 = vmatpush1.msra.mxu0 0.0
      %3436 = vmatprep.subr.mxu0 0.0
      %3437 = vmatpush1.msra.mxu0 0.0
      %3438 = vmatprep.subr.mxu0 0.0
      %3439 = vmatpush1.msra.mxu0 0.0
      %3440 = vmatprep.subr.mxu0 0.0
      %3441 = vmatpush1.msra.mxu0 0.0
      %3442 = vmatprep.subr.mxu0 0.0
      %3443 = vmatpush1.msra.mxu0 0.0
      %3444 = vmatprep.subr.mxu0 0.0
      %3445 = vmatpush1.msra.mxu0 0.0
      %3446 = vmatprep.subr.mxu0 0.0
      %3447 = vmatpush1.msra.mxu0 0.0
      %3448 = vmatprep.subr.mxu0 0.0
      %3449 = vmatpush1.msra.mxu0 0.0
      %3450 = vmatprep.subr.mxu0 0.0
      %3451 = vmatpush1.msra.mxu0 0.0
      %3452 = vmatprep.subr.mxu0 0.0
      %3453 = vmatpush1.msra.mxu0 0.0
      %3454 = vmatprep.subr.mxu0 0.0
      %3455 = vmatpush1.msra.mxu0 0.0
      %3456 = vmatprep.subr.mxu0 0.0
      %3457 = vmatpush1.msra.mxu0 0.0
      %3458 = vmatprep.subr.mxu0 0.0
      %3459 = vmatpush1.msra.mxu0 0.0
      %3460 = vmatprep.subr.mxu0 0.0
      %3461 = vmatpush1.msra.mxu0 0.0
      %3462 = vmatprep.subr.mxu0 0.0
      %3463 = vmatpush1.msra.mxu0 0.0
      %3464 = vmatprep.subr.mxu0 0.0
      %3465 = vmatpush1.msra.mxu0 0.0
      %3466 = vmatprep.subr.mxu0 0.0
      %3467 = vmatpush1.msra.mxu0 0.0
      %3468 = vmatprep.subr.mxu0 0.0
      %3469 = vmatpush1.msra.mxu0 0.0
      %3470 = vmatprep.subr.mxu0 0.0
      %3471 = vmatpush1.msra.mxu0 0.0
      %3472 = vmatprep.subr.mxu0 0.0
      %3473 = vmatpush1.msra.mxu0 0.0
      %3474 = vmatprep.subr.mxu0 0.0
      %3475 = vmatpush1.msra.mxu0 0.0
      %3476 = vmatprep.subr.mxu0 0.0
      %3477 = vmatpush1.msra.mxu0 0.0
      %3478 = vmatprep.subr.mxu0 0.0
      %3479 = vmatpush1.msra.mxu0 0.0
      %3480 = vmatprep.subr.mxu0 0.0
      %3481 = vmatpush1.msra.mxu0 0.0
      %3482 = vmatprep.subr.mxu0 0.0
      %3483 = vmatpush1.msra.mxu0 0.0
      %3484 = vmatprep.subr.mxu0 0.0
      %3485 = vmatpush1.msra.mxu0 0.0
      %3486 = vmatprep.subr.mxu0 0.0
      %3487 = vmatpush1.msra.mxu0 0.0
      %3488 = vmatprep.subr.mxu0 0.0
      %3489 = vmatpush1.msra.mxu0 0.0
      %3490 = vmatprep.mubr.f32.mxu0 0.0
      %3491 = vmatmul.mubr.f32.gmra.mrb[0].mxu0 %v3424
      %v3492 = vpop.f32.mrb[0].mxu0
      %v3493 = vadd.f32 0.0, %v3492
      %v3494 = vpop.f32.mrb[0].mxu0
      %v3495 = vadd.f32 0.0, %v3494
      %3496 = vdwg.mxu0
      %3497 = vmatprep.subr.mxu0 %v3408
      %3498 = vmatpush1.msra.mxu0 %v3407
      %3499 = vmatprep.subr.mxu0 %v3412
      %3500 = vmatpush1.msra.mxu0 %v3411
      %3501 = vmatprep.subr.mxu0 %v3416
      %3502 = vmatpush1.msra.mxu0 %v3415
      %3503 = vmatprep.subr.mxu0 %v3420
      %3504 = vmatpush1.msra.mxu0 %v3419
      %3505 = vmatprep.subr.mxu0 0.0
      %3506 = vmatpush1.msra.mxu0 0.0
      %3507 = vmatprep.subr.mxu0 0.0
      %3508 = vmatpush1.msra.mxu0 0.0
      %3509 = vmatprep.subr.mxu0 0.0
      %3510 = vmatpush1.msra.mxu0 0.0
      %3511 = vmatprep.subr.mxu0 0.0
      %3512 = vmatpush1.msra.mxu0 0.0
      %3513 = vmatprep.subr.mxu0 0.0
      %3514 = vmatpush1.msra.mxu0 0.0
      %3515 = vmatprep.subr.mxu0 0.0
      %3516 = vmatpush1.msra.mxu0 0.0
      %3517 = vmatprep.subr.mxu0 0.0
      %3518 = vmatpush1.msra.mxu0 0.0
      %3519 = vmatprep.subr.mxu0 0.0
      %3520 = vmatpush1.msra.mxu0 0.0
      %3521 = vmatprep.subr.mxu0 0.0
      %3522 = vmatpush1.msra.mxu0 0.0
      %3523 = vmatprep.subr.mxu0 0.0
      %3524 = vmatpush1.msra.mxu0 0.0
      %3525 = vmatprep.subr.mxu0 0.0
      %3526 = vmatpush1.msra.mxu0 0.0
      %3527 = vmatprep.subr.mxu0 0.0
      %3528 = vmatpush1.msra.mxu0 0.0
      %3529 = vmatprep.subr.mxu0 0.0
      %3530 = vmatpush1.msra.mxu0 0.0
      %3531 = vmatprep.subr.mxu0 0.0
      %3532 = vmatpush1.msra.mxu0 0.0
      %3533 = vmatprep.subr.mxu0 0.0
      %3534 = vmatpush1.msra.mxu0 0.0
      %3535 = vmatprep.subr.mxu0 0.0
      %3536 = vmatpush1.msra.mxu0 0.0
      %3537 = vmatprep.subr.mxu0 0.0
      %3538 = vmatpush1.msra.mxu0 0.0
      %3539 = vmatprep.subr.mxu0 0.0
      %3540 = vmatpush1.msra.mxu0 0.0
      %3541 = vmatprep.subr.mxu0 0.0
      %3542 = vmatpush1.msra.mxu0 0.0
      %3543 = vmatprep.subr.mxu0 0.0
      %3544 = vmatpush1.msra.mxu0 0.0
      %3545 = vmatprep.subr.mxu0 0.0
      %3546 = vmatpush1.msra.mxu0 0.0
      %3547 = vmatprep.subr.mxu0 0.0
      %3548 = vmatpush1.msra.mxu0 0.0
      %3549 = vmatprep.subr.mxu0 0.0
      %3550 = vmatpush1.msra.mxu0 0.0
      %3551 = vmatprep.subr.mxu0 0.0
      %3552 = vmatpush1.msra.mxu0 0.0
      %3553 = vmatprep.subr.mxu0 0.0
      %3554 = vmatpush1.msra.mxu0 0.0
      %3555 = vmatprep.subr.mxu0 0.0
      %3556 = vmatpush1.msra.mxu0 0.0
      %3557 = vmatprep.subr.mxu0 0.0
      %3558 = vmatpush1.msra.mxu0 0.0
      %3559 = vmatprep.subr.mxu0 0.0
      %3560 = vmatpush1.msra.mxu0 0.0
      %3561 = vmatprep.mubr.f32.mxu0 0.0
      %3562 = vmatmul.mubr.f32.gmra.mrb[0].mxu0 %v3424
      %v3563 = vpop.f32.mrb[0].mxu0
      %v3564 = vadd.f32 0.0, %v3563
      %v3565 = vpop.f32.mrb[0].mxu0
      %v3566 = vadd.f32 0.0, %v3565
      %3567 = vdwg.mxu0
      %v3568 = vadd.f32 %v3400, %v3493
      %v3569 = vadd.f32 %v3401, %v3495
      %v3570 = vadd.f32 %v3402, %v3564
      %v3571 = vadd.f32 %v3403, %v3566
      %v3576 = vcombine.low %v3568, %v3569
      %v3577 = vcombine.low %v3570, %v3571
      %v3579 = vunpack.c.l.s4 1983009808
      %v3580 = vunpack.c.0.s8 %v3579
      %v3581 = vlaneseq
      %v3582 = vshrl.u32 %v3581, 7
      %v3583 = vsub.s32 %v3580, %v3582
      %v3584 = vrot.slane %v3576, %v3583
      %v3586 = vunpack.c.l.s4 1983009808
      %v3587 = vunpack.c.0.s8 %v3586
      %v3588 = vlaneseq
      %v3589 = vshrl.u32 %v3588, 7
      %v3590 = vsub.s32 %v3587, %v3589
      %v3591 = vrot.slane %v3577, %v3590
      %v3592 = vcombine.low %v3584, %v3591
      %3594 = vst [vmem:[%s462] sm:$0xff] %v3592
      %p3595 = scmp.lt.s32.totalorder %s22, 1
      %s3596 = scalar_select %p3595, %s22, 1
      %s3597 = smul.addr %s3596, 4
      %s3598 = smul.addr %s3597, 2
      %s3599 = scalar_lea.vmem %s11, %s3598
      // Predicated region
      $region65: #{rnd_forward.1} parent=63 // pred_check
        %p3600 = pneg %p301
      $region66: #{rnd_forward.1} parent=63 // pred_check_branch
        %3602 = sbr.rel (%p3600) target = $region68
      $region67: #{rnd_forward.1} parent=63 // pred_region
        _
      $region68: #{rnd_forward.1} parent=63 // pred_fallthru
        _
    $region64: #{rnd_forward.1} parent=5 // pred_fallthru
      _
    %p3603 = scmp.le.s32.totalorder 2, %s17
    // Predicated region
    $region69: #{rnd_forward.1} parent=5 // pred_check
      %p3604 = pneg %p3603
    $region70: #{rnd_forward.1} parent=5 // pred_check_branch
      %3606 = sbr.rel (%p3604) target = $region72
    $region71: #{rnd_forward.1} parent=5 // pred_region
      %s3607 = ssub.s32 %s17, 2
      // Predicated region
      $region73: #{rnd_forward.1} parent=71 // pred_check
        %p3608 = pneg %p307
      $region74: #{rnd_forward.1} parent=71 // pred_check_branch
        %3610 = sbr.rel (%p3608) target = $region76
      $region75: #{rnd_forward.1} parent=71 // pred_region
        %p3611 = scmp.lt.s32.totalorder %s23, 1
        %s3612 = scalar_select %p3611, %s23, 1
        %s3613 = smul.addr %s3612, 4
        %s3614 = smul.addr %s3613, 2
        %s3615 = scalar_lea.vmem %s11, %s3614
      $region76: #{rnd_forward.1} parent=71 // pred_fallthru
        _
    $region72: #{rnd_forward.1} parent=5 // pred_fallthru
      _
  $region6: #{rnd_forward.1} parent=0 // loop_footer
    %s21 = sadd.s32 1, %s17
  $region7: #{rnd_forward.1} parent=0 // loop_footer_branch
    %16 = sbr.rel target = $region3
  $region8: #{rnd_forward.1} parent=0 // loop_exit
    _

</llo_original>
